<compile_context>
chip_gen: v6e
topology: v6e:2x2x1
jax: 0.10.0
libtpu: 0.0.40
codegen_flags: <defaults>
</compile_context>

<pallas_src>
import math

import numpy as np
import jax
import jax.numpy as jnp
from jax import lax
from jax.experimental import pallas as pl
from jax.experimental.pallas import tpu as pltpu

# Keep the in-kernel MXU dots and the pure-JAX reference at the same (full f32)
# matmul precision so the correctness check is tight.
jax.config.update("jax_default_matmul_precision", "highest")

# ----------------------------- config (small, matches module usage) -----------------
D_MODEL = 32          # d_model
D_STATE = 8           # d_state  (S)
D_EXPAND = 32         # d_expand (De)
BATCH = 2
SEQ_LEN = 8


# ----------------------------- fused Pallas kernel ----------------------------------
def _lrnn_kernel(x_ref, w_in_ref, b_in_ref, ssm_w_ref, ssm_b_ref, dwb_ref,
                 a_ref, d_ref, w_out_ref, b_out_ref, o_ref):
    # x_ref: (L, Dm)        one batch element (batch dim squeezed by BlockSpec)
    # w_in_ref: (Dm, 2De)   b_in_ref: (1, 2De)
    # ssm_w_ref/ssm_b_ref: (4, S, De)   depthwise weights/biases for [B_re,B_im,C_re,C_im]
    # dwb_ref: (2, De)      row0 = delta weight, row1 = delta bias
    # a_ref: (4, S, De)     [A_re, A_im, Re(1/A_safe), Im(1/A_safe)]
    # d_ref: (1, De)        skip parameter D
    # w_out_ref: (De, Dm)   b_out_ref: (1, Dm)
    L = x_ref.shape[0]
    S = a_ref.shape[1]
    De = a_ref.shape[2]

    # ---- in_proj + SiLU gate -------------------------------------------------------
    x = x_ref[...]                                                     # (L, Dm)
    proj = jnp.dot(x, w_in_ref[...], preferred_element_type=jnp.float32) + b_in_ref[...]
    gate = proj[:, :De]                                                # (L, De)
    x_ssm = proj[:, De:]                                               # (L, De)
    gate = gate * jax.nn.sigmoid(gate)                                 # SiLU

    # ---- delta = clamp(softplus(depthwise_delta(x_ssm))) ---------------------------
    zd = x_ssm * dwb_ref[0:1, :] + dwb_ref[1:2, :]                     # (L, De)
    delta = jnp.maximum(zd, 0.0) + jnp.log(1.0 + jnp.exp(-jnp.abs(zd)))  # stable softplus
    delta = jnp.clip(delta, 1e-4, 1.0)

    # ---- complex discretization, split re/im, (L, S, De) layout --------------------
    a_re, a_im = a_ref[0], a_ref[1]                                    # (S, De)
    ia_re, ia_im = a_ref[2], a_ref[3]                                  # 1 / A_safe

    d_e = delta[:, None, :]                                            # (L, 1, De)
    z_re = d_e * a_re                                                  # (L, S, De)
    z_im = d_e * a_im
    ez = jnp.exp(z_re)                                                 # EUP
    abar_re = ez * jnp.cos(z_im)
    abar_im = ez * jnp.sin(z_im)
    em_re = abar_re - 1.0                                              # expm1(z)
    em_im = abar_im
    # B_bar_base = delta * expm1(z) / A_safe
    bbb_re = d_e * (em_re * ia_re - em_im * ia_im)
    bbb_im = d_e * (em_re * ia_im + em_im * ia_re)

    # ---- depthwise B / C params (folded in; lane-dense (S, De) slabs) --------------
    xs_e = x_ssm[:, None, :]                                           # (L, 1, De)
    B_re = xs_e * ssm_w_ref[0] + ssm_b_ref[0]                          # (L, S, De)
    B_im = xs_e * ssm_w_ref[1] + ssm_b_ref[1]
    C_re = xs_e * ssm_w_ref[2] + ssm_b_ref[2]
    C_im = xs_e * ssm_w_ref[3] + ssm_b_ref[3]

    # b_t = B_bar_base * B * x_ssm   (complex * complex * real)
    bu_re = (bbb_re * B_re - bbb_im * B_im) * xs_e
    bu_im = (bbb_re * B_im + bbb_im * B_re) * xs_e

    # ---- sequential recurrence h_t = A_bar_t h_{t-1} + b_t ; y_t = Re(sum_s h_t C_t)
    h_re = jnp.zeros((S, De), jnp.float32)
    h_im = jnp.zeros((S, De), jnp.float32)
    ys = []
    for t in range(L):                       # static unroll (L is small)
        n_re = abar_re[t] * h_re - abar_im[t] * h_im + bu_re[t]
        n_im = abar_re[t] * h_im + abar_im[t] * h_re + bu_im[t]
        h_re, h_im = n_re, n_im
        ys.append(jnp.sum(h_re * C_re[t] - h_im * C_im[t], axis=0, keepdims=True))
    y = jnp.concatenate(ys, axis=0)                                    # (L, De)

    # ---- skip, gate, out_proj ------------------------------------------------------
    y = y + x_ssm * d_ref[...]
    o_ref[...] = (
        jnp.dot(y * gate, w_out_ref[...], preferred_element_type=jnp.float32)
        + b_out_ref[...]
    )


# ----------------------------- parameter packing (tiny, static) ---------------------
def _pack_params(p):
    S, De = D_STATE, D_EXPAND
    tr = lambda a: jnp.transpose(a, (1, 0))                 # (De, S) -> (S, De)
    dw_w, dw_b = p["dw_w"], p["dw_b"]                       # (De, 4S+1)

    ssm_w = jnp.stack([tr(dw_w[:, 0*S:1*S]), tr(dw_w[:, 1*S:2*S]),
                       tr(dw_w[:, 2*S:3*S]), tr(dw_w[:, 3*S:4*S])], axis=0)
    ssm_b = jnp.stack([tr(dw_b[:, 0*S:1*S]), tr(dw_b[:, 1*S:2*S]),
                       tr(dw_b[:, 2*S:3*S]), tr(dw_b[:, 3*S:4*S])], axis=0)
    delta_wb = jnp.stack([dw_w[:, 4*S], dw_b[:, 4*S]], axis=0)          # (2, De)

    # A = -exp(A_log)  (complex, split re/im);  invA = 1 / A_safe
    mag = jnp.exp(p["A_log_re"])
    a_re = -mag * jnp.cos(p["A_log_im"])
    a_im = -mag * jnp.sin(p["A_log_im"])
    eps = 1e-6
    abs_a = jnp.sqrt(a_re * a_re + a_im * a_im)
    as_re = jnp.where(abs_a < eps, eps, a_re)
    as_im = jnp.where(abs_a < eps, 0.0, a_im)
    den = as_re * as_re + as_im * as_im
    a_pack = jnp.stack([tr(a_re), tr(a_im), tr(as_re / den), tr(-as_im / den)], axis=0)

    return dict(
        w_in=p["in_w"], b_in=p["in_b"].reshape(1, -1),
        ssm_w=ssm_w, ssm_b=ssm_b, delta_wb=delta_wb, a_pack=a_pack,
        d_vec=p["D"].reshape(1, -1),
        w_out=p["out_w"], b_out=p["out_b"].reshape(1, -1),
    )


@jax.jit
def lrnn_forward(params, x):
    B, L, Dm = x.shape
    De, S = D_EXPAND, D_STATE
    pk = _pack_params(params)

    def full(shape):
        return pl.BlockSpec(shape, lambda b, _n=len(shape): (0,) * _n)

    return pl.pallas_call(
        _lrnn_kernel,
        grid=(B,),
        in_specs=[
            pl.BlockSpec((None, L, Dm), lambda b: (b, 0, 0)),   # x, per-batch tile
            full((Dm, 2 * De)), full((1, 2 * De)),              # in_proj
            full((4, S, De)), full((4, S, De)),                 # depthwise B/C w, b
            full((2, De)),                                      # delta w/b
            full((4, S, De)),                                   # A / 1/A tables
            full((1, De)),                                      # D skip
            full((De, Dm)), full((1, Dm)),                      # out_proj
        ],
        out_specs=pl.BlockSpec((None, L, Dm), lambda b: (b, 0, 0)),
        out_shape=jax.ShapeDtypeStruct((B, L, Dm), jnp.float32),
        compiler_params=pltpu.CompilerParams(
            dimension_semantics=("parallel",)),                 # v7x: batch across TCs
    )(x, pk["w_in"], pk["b_in"], pk["ssm_w"], pk["ssm_b"], pk["delta_wb"],
      pk["a_pack"], pk["d_vec"], pk["w_out"], pk["b_out"])


# ----------------------------- pure-JAX reference (mirrors torch forward) ------------
def lrnn_reference(p, x):
    Bn, L, _ = x.shape
    De, S = D_EXPAND, D_STATE
    proj = jnp.einsum("bld,de->ble", x, p["in_w"]) + p["in_b"]
    gate = jax.nn.silu(proj[..., :De])
    x_ssm = proj[..., De:]
    sp = x_ssm[..., None] * p["dw_w"] + p["dw_b"]             # (B, L, De, 4S+1)
    B_re, B_im = sp[..., :S], sp[..., S:2 * S]
    C_re, C_im = sp[..., 2 * S:3 * S], sp[..., 3 * S:4 * S]
    delta = jnp.clip(jax.nn.softplus(sp[..., 4 * S:4 * S + 1]), 1e-4, 1.0)

    A = -jnp.exp(lax.complex(p["A_log_re"], p["A_log_im"]))   # (De, S) c64
    dc = delta.astype(jnp.complex64)
    A_bar = jnp.exp(dc * A)
    eps = 1e-6
    A_safe = jnp.where(jnp.abs(A) < eps, jnp.array(eps, jnp.complex64), A)
    B_bar = dc * (A_bar - 1.0) / A_safe * lax.complex(B_re, B_im)
    Cc = lax.complex(C_re, C_im)
    bu = B_bar * x_ssm[..., None].astype(jnp.complex64)

    h = jnp.zeros((Bn, De, S), jnp.complex64)
    ys = []
    for t in range(L):
        h = A_bar[:, t] * h + bu[:, t]
        ys.append(jnp.real(jnp.sum(h * Cc[:, t], axis=-1)))
    y = jnp.stack(ys, axis=1)                                 # (B, L, De)
    y = y + x_ssm * p["D"]
    return jnp.einsum("ble,ed->bld", y * gate, p["out_w"]) + p["out_b"]


# ----------------------------- deterministic init ------------------------------------
def _xavier(key, fan_in, fan_out):
    lim = math.sqrt(6.0 / (fan_in + fan_out))
    return jax.random.uniform(key, (fan_in, fan_out), jnp.float32, -lim, lim)


def init_params(key):
    ks = jax.random.split(key, 6)
    K = 4 * D_STATE + 1
    dw_w = 0.1 * jax.random.normal(ks[4], (D_EXPAND, K), jnp.float32)
    dw_w = dw_w.at[:, 4 * D_STATE].set(1e-6)
    dw_b = jnp.zeros((D_EXPAND, K), jnp.float32)
    dw_b = dw_b.at[:, 4 * D_STATE].set(math.log(math.exp(0.1) - 1.0))
    return {
        "in_w": _xavier(ks[0], D_MODEL, 2 * D_EXPAND),
        "in_b": jnp.zeros((2 * D_EXPAND,), jnp.float32),
        "out_w": _xavier(ks[1], D_EXPAND, D_MODEL),
        "out_b": jnp.zeros((D_MODEL,), jnp.float32),
        "A_log_re": jnp.log(jax.random.uniform(ks[2], (D_EXPAND, D_STATE)) * 0.5 + 0.5),
        "A_log_im": (jax.random.uniform(ks[3], (D_EXPAND, D_STATE)) * 2.0 - 1.0) * math.pi,
        "dw_w": dw_w,
        "dw_b": dw_b,
        "D": jax.random.normal(ks[5], (D_EXPAND,), jnp.float32),
    }


# ----------------------------- main ---------------------------------------------------
if __name__ == "__main__":
    key = jax.random.PRNGKey(0)
    kp, kx = jax.random.split(key)
    params = init_params(kp)

    x = jax.random.normal(kx, (BATCH, SEQ_LEN, D_MODEL), jnp.float32)

    out = lrnn_forward(params, x)
    jax.block_until_ready(out)

    assert out.shape == (BATCH, SEQ_LEN, D_MODEL)
    assert bool(jnp.all(jnp.isfinite(out)))

    ref = lrnn_reference(params, x)
    np.testing.assert_allclose(np.asarray(out), np.asarray(ref), rtol=1e-2, atol=1e-2)

    print("KERNEL_OK")
</pallas_src>

<mosaic_0001>
module attributes {stable_mosaic.version = 11 : i64} {
  func.func @_lrnn_kernel(%arg0: i32, %arg1: memref<1x8x32xf32, #tpu.memory_space<vmem>>, %arg2: memref<32x64xf32, #tpu.memory_space<vmem>>, %arg3: memref<1x64xf32, #tpu.memory_space<vmem>>, %arg4: memref<4x8x32xf32, #tpu.memory_space<vmem>>, %arg5: memref<4x8x32xf32, #tpu.memory_space<vmem>>, %arg6: memref<2x32xf32, #tpu.memory_space<vmem>>, %arg7: memref<4x8x32xf32, #tpu.memory_space<vmem>>, %arg8: memref<1x32xf32, #tpu.memory_space<vmem>>, %arg9: memref<32x32xf32, #tpu.memory_space<vmem>>, %arg10: memref<1x32xf32, #tpu.memory_space<vmem>>, %arg11: memref<1x8x32xf32, #tpu.memory_space<vmem>>) attributes {dimension_semantics = [#tpu.dimension_semantics<parallel>], iteration_bounds = array<i64: 2>, scalar_prefetch = 0 : i64, scratch_operands = 0 : i64, tpu.core_type = #tpu.core_type<tc>, window_params = [{transform_indices = @transform_0, window_bounds = array<i64: 1, 8, 32>}, {pipeline_mode = #tpu.pipeline_mode<synchronous>, transform_indices = @transform_1, window_bounds = array<i64: 32, 64>}, {pipeline_mode = #tpu.pipeline_mode<synchronous>, transform_indices = @transform_2, window_bounds = array<i64: 1, 64>}, {pipeline_mode = #tpu.pipeline_mode<synchronous>, transform_indices = @transform_3, window_bounds = array<i64: 4, 8, 32>}, {pipeline_mode = #tpu.pipeline_mode<synchronous>, transform_indices = @transform_4, window_bounds = array<i64: 4, 8, 32>}, {pipeline_mode = #tpu.pipeline_mode<synchronous>, transform_indices = @transform_5, window_bounds = array<i64: 2, 32>}, {pipeline_mode = #tpu.pipeline_mode<synchronous>, transform_indices = @transform_6, window_bounds = array<i64: 4, 8, 32>}, {pipeline_mode = #tpu.pipeline_mode<synchronous>, transform_indices = @transform_7, window_bounds = array<i64: 1, 32>}, {pipeline_mode = #tpu.pipeline_mode<synchronous>, transform_indices = @transform_8, window_bounds = array<i64: 32, 32>}, {pipeline_mode = #tpu.pipeline_mode<synchronous>, transform_indices = @transform_9, window_bounds = array<i64: 1, 32>}, {transform_indices = @transform_10, window_bounds = array<i64: 1, 8, 32>}]} {
    %c0 = arith.constant 0 : index
    %c0_0 = arith.constant 0 : index
    %c0_1 = arith.constant 0 : index
    %0 = vector.load %arg1[%c0, %c0_0, %c0_1] : memref<1x8x32xf32, #tpu.memory_space<vmem>>, vector<1x8x32xf32>
    %1 = vector.shape_cast %0 : vector<1x8x32xf32> to vector<8x32xf32>
    %c0_2 = arith.constant 0 : index
    %c0_3 = arith.constant 0 : index
    %2 = vector.load %arg2[%c0_2, %c0_3] : memref<32x64xf32, #tpu.memory_space<vmem>>, vector<32x64xf32>
    %cst = arith.constant dense<0.000000e+00> : vector<8x64xf32>
    %3 = tpu.matmul %1, %2, %cst {dimension_numbers = #tpu.dot_dimension_numbers<[1], [0], [0], [1], [0, 0, 1, 1], [], []>, precision = #tpu.contract_precision<fp32>} : vector<8x32xf32>, vector<32x64xf32>, vector<8x64xf32> -> vector<8x64xf32>
    %c0_4 = arith.constant 0 : index
    %c0_5 = arith.constant 0 : index
    %4 = vector.load %arg3[%c0_4, %c0_5] : memref<1x64xf32, #tpu.memory_space<vmem>>, vector<1x64xf32>
    %5 = vector.broadcast %4 : vector<1x64xf32> to vector<8x64xf32>
    %6 = arith.addf %3, %5 : vector<8x64xf32>
    %7 = vector.extract_strided_slice %6 {offsets = [0, 0], sizes = [8, 32], strides = [1, 1]} : vector<8x64xf32> to vector<8x32xf32>
    %8 = vector.extract_strided_slice %6 {offsets = [0, 32], sizes = [8, 32], strides = [1, 1]} : vector<8x64xf32> to vector<8x32xf32>
    %9 = arith.negf %7 : vector<8x32xf32>
    %10 = math.exp %9 : vector<8x32xf32>
    %cst_6 = arith.constant 1.000000e+00 : f32
    %11 = vector.broadcast %cst_6 : f32 to vector<8x32xf32>
    %12 = arith.addf %11, %10 : vector<8x32xf32>
    %13 = arith.divf %11, %12 : vector<8x32xf32>
    %14 = arith.mulf %7, %13 : vector<8x32xf32>
    %c0_7 = arith.constant 0 : index
    %c0_8 = arith.constant 0 : index
    %15 = vector.load %arg6[%c0_7, %c0_8] : memref<2x32xf32, #tpu.memory_space<vmem>>, vector<1x32xf32>
    %16 = vector.broadcast %15 : vector<1x32xf32> to vector<8x32xf32>
    %17 = arith.mulf %8, %16 : vector<8x32xf32>
    %c1 = arith.constant 1 : index
    %c0_9 = arith.constant 0 : index
    %18 = vector.load %arg6[%c1, %c0_9] : memref<2x32xf32, #tpu.memory_space<vmem>>, vector<1x32xf32>
    %19 = vector.broadcast %18 : vector<1x32xf32> to vector<8x32xf32>
    %20 = arith.addf %17, %19 : vector<8x32xf32>
    %cst_10 = arith.constant 0.000000e+00 : f32
    %21 = vector.broadcast %cst_10 : f32 to vector<8x32xf32>
    %22 = arith.maximumf %20, %21 : vector<8x32xf32>
    %23 = math.absf %20 : vector<8x32xf32>
    %cst_11 = arith.constant 0.000000e+00 : f32
    %24 = vector.broadcast %cst_11 : f32 to vector<8x32xf32>
    %25 = arith.subf %24, %23 : vector<8x32xf32>
    %26 = math.exp %25 : vector<8x32xf32>
    %cst_12 = arith.constant 1.000000e+00 : f32
    %27 = vector.broadcast %cst_12 : f32 to vector<8x32xf32>
    %28 = arith.addf %27, %26 : vector<8x32xf32>
    %29 = math.log %28 : vector<8x32xf32>
    %30 = arith.addf %22, %29 : vector<8x32xf32>
    %cst_13 = arith.constant 9.99999974E-5 : f32
    %cst_14 = arith.constant 1.000000e+00 : f32
    %31 = vector.broadcast %cst_13 : f32 to vector<8x32xf32>
    %32 = arith.maximumf %31, %30 : vector<8x32xf32>
    %33 = vector.broadcast %cst_14 : f32 to vector<8x32xf32>
    %34 = arith.minimumf %33, %32 : vector<8x32xf32>
    %c0_15 = arith.constant 0 : index
    %c0_16 = arith.constant 0 : index
    %c0_17 = arith.constant 0 : index
    %35 = vector.load %arg7[%c0_15, %c0_16, %c0_17] : memref<4x8x32xf32, #tpu.memory_space<vmem>>, vector<1x8x32xf32>
    %36 = vector.shape_cast %35 : vector<1x8x32xf32> to vector<8x32xf32>
    %c1_18 = arith.constant 1 : index
    %c0_19 = arith.constant 0 : index
    %c0_20 = arith.constant 0 : index
    %37 = vector.load %arg7[%c1_18, %c0_19, %c0_20] : memref<4x8x32xf32, #tpu.memory_space<vmem>>, vector<1x8x32xf32>
    %38 = vector.shape_cast %37 : vector<1x8x32xf32> to vector<8x32xf32>
    %c2 = arith.constant 2 : index
    %c0_21 = arith.constant 0 : index
    %c0_22 = arith.constant 0 : index
    %39 = vector.load %arg7[%c2, %c0_21, %c0_22] : memref<4x8x32xf32, #tpu.memory_space<vmem>>, vector<1x8x32xf32>
    %40 = vector.shape_cast %39 : vector<1x8x32xf32> to vector<8x32xf32>
    %c3 = arith.constant 3 : index
    %c0_23 = arith.constant 0 : index
    %c0_24 = arith.constant 0 : index
    %41 = vector.load %arg7[%c3, %c0_23, %c0_24] : memref<4x8x32xf32, #tpu.memory_space<vmem>>, vector<1x8x32xf32>
    %42 = vector.shape_cast %41 : vector<1x8x32xf32> to vector<8x32xf32>
    %43 = vector.shape_cast %34 : vector<8x32xf32> to vector<8x1x32xf32>
    %44 = vector.shape_cast %36 : vector<8x32xf32> to vector<1x8x32xf32>
    %45 = vector.broadcast %43 : vector<8x1x32xf32> to vector<8x8x32xf32>
    %46 = vector.broadcast %44 : vector<1x8x32xf32> to vector<8x8x32xf32>
    %47 = arith.mulf %45, %46 : vector<8x8x32xf32>
    %48 = vector.shape_cast %38 : vector<8x32xf32> to vector<1x8x32xf32>
    %49 = vector.broadcast %43 : vector<8x1x32xf32> to vector<8x8x32xf32>
    %50 = vector.broadcast %48 : vector<1x8x32xf32> to vector<8x8x32xf32>
    %51 = arith.mulf %49, %50 : vector<8x8x32xf32>
    %52 = math.exp %47 : vector<8x8x32xf32>
    %53 = math.cos %51 : vector<8x8x32xf32>
    %54 = arith.mulf %52, %53 : vector<8x8x32xf32>
    %55 = math.sin %51 : vector<8x8x32xf32>
    %56 = arith.mulf %52, %55 : vector<8x8x32xf32>
    %cst_25 = arith.constant 1.000000e+00 : f32
    %57 = vector.broadcast %cst_25 : f32 to vector<8x8x32xf32>
    %58 = arith.subf %54, %57 : vector<8x8x32xf32>
    %59 = vector.shape_cast %40 : vector<8x32xf32> to vector<1x8x32xf32>
    %60 = vector.broadcast %59 : vector<1x8x32xf32> to vector<8x8x32xf32>
    %61 = arith.mulf %58, %60 : vector<8x8x32xf32>
    %62 = vector.shape_cast %42 : vector<8x32xf32> to vector<1x8x32xf32>
    %63 = vector.broadcast %62 : vector<1x8x32xf32> to vector<8x8x32xf32>
    %64 = arith.mulf %56, %63 : vector<8x8x32xf32>
    %65 = arith.subf %61, %64 : vector<8x8x32xf32>
    %66 = vector.broadcast %43 : vector<8x1x32xf32> to vector<8x8x32xf32>
    %67 = arith.mulf %66, %65 : vector<8x8x32xf32>
    %68 = vector.shape_cast %42 : vector<8x32xf32> to vector<1x8x32xf32>
    %69 = vector.broadcast %68 : vector<1x8x32xf32> to vector<8x8x32xf32>
    %70 = arith.mulf %58, %69 : vector<8x8x32xf32>
    %71 = vector.shape_cast %40 : vector<8x32xf32> to vector<1x8x32xf32>
    %72 = vector.broadcast %71 : vector<1x8x32xf32> to vector<8x8x32xf32>
    %73 = arith.mulf %56, %72 : vector<8x8x32xf32>
    %74 = arith.addf %70, %73 : vector<8x8x32xf32>
    %75 = vector.broadcast %43 : vector<8x1x32xf32> to vector<8x8x32xf32>
    %76 = arith.mulf %75, %74 : vector<8x8x32xf32>
    %77 = vector.shape_cast %8 : vector<8x32xf32> to vector<8x1x32xf32>
    %c0_26 = arith.constant 0 : index
    %c0_27 = arith.constant 0 : index
    %c0_28 = arith.constant 0 : index
    %78 = vector.load %arg4[%c0_26, %c0_27, %c0_28] : memref<4x8x32xf32, #tpu.memory_space<vmem>>, vector<1x8x32xf32>
    %79 = vector.shape_cast %78 : vector<1x8x32xf32> to vector<8x32xf32>
    %80 = vector.shape_cast %79 : vector<8x32xf32> to vector<1x8x32xf32>
    %81 = vector.broadcast %77 : vector<8x1x32xf32> to vector<8x8x32xf32>
    %82 = vector.broadcast %80 : vector<1x8x32xf32> to vector<8x8x32xf32>
    %83 = arith.mulf %81, %82 : vector<8x8x32xf32>
    %c0_29 = arith.constant 0 : index
    %c0_30 = arith.constant 0 : index
    %c0_31 = arith.constant 0 : index
    %84 = vector.load %arg5[%c0_29, %c0_30, %c0_31] : memref<4x8x32xf32, #tpu.memory_space<vmem>>, vector<1x8x32xf32>
    %85 = vector.shape_cast %84 : vector<1x8x32xf32> to vector<8x32xf32>
    %86 = vector.shape_cast %85 : vector<8x32xf32> to vector<1x8x32xf32>
    %87 = vector.broadcast %86 : vector<1x8x32xf32> to vector<8x8x32xf32>
    %88 = arith.addf %83, %87 : vector<8x8x32xf32>
    %c1_32 = arith.constant 1 : index
    %c0_33 = arith.constant 0 : index
    %c0_34 = arith.constant 0 : index
    %89 = vector.load %arg4[%c1_32, %c0_33, %c0_34] : memref<4x8x32xf32, #tpu.memory_space<vmem>>, vector<1x8x32xf32>
    %90 = vector.shape_cast %89 : vector<1x8x32xf32> to vector<8x32xf32>
    %91 = vector.shape_cast %90 : vector<8x32xf32> to vector<1x8x32xf32>
    %92 = vector.broadcast %77 : vector<8x1x32xf32> to vector<8x8x32xf32>
    %93 = vector.broadcast %91 : vector<1x8x32xf32> to vector<8x8x32xf32>
    %94 = arith.mulf %92, %93 : vector<8x8x32xf32>
    %c1_35 = arith.constant 1 : index
    %c0_36 = arith.constant 0 : index
    %c0_37 = arith.constant 0 : index
    %95 = vector.load %arg5[%c1_35, %c0_36, %c0_37] : memref<4x8x32xf32, #tpu.memory_space<vmem>>, vector<1x8x32xf32>
    %96 = vector.shape_cast %95 : vector<1x8x32xf32> to vector<8x32xf32>
    %97 = vector.shape_cast %96 : vector<8x32xf32> to vector<1x8x32xf32>
    %98 = vector.broadcast %97 : vector<1x8x32xf32> to vector<8x8x32xf32>
    %99 = arith.addf %94, %98 : vector<8x8x32xf32>
    %c2_38 = arith.constant 2 : index
    %c0_39 = arith.constant 0 : index
    %c0_40 = arith.constant 0 : index
    %100 = vector.load %arg4[%c2_38, %c0_39, %c0_40] : memref<4x8x32xf32, #tpu.memory_space<vmem>>, vector<1x8x32xf32>
    %101 = vector.shape_cast %100 : vector<1x8x32xf32> to vector<8x32xf32>
    %102 = vector.shape_cast %101 : vector<8x32xf32> to vector<1x8x32xf32>
    %103 = vector.broadcast %77 : vector<8x1x32xf32> to vector<8x8x32xf32>
    %104 = vector.broadcast %102 : vector<1x8x32xf32> to vector<8x8x32xf32>
    %105 = arith.mulf %103, %104 : vector<8x8x32xf32>
    %c2_41 = arith.constant 2 : index
    %c0_42 = arith.constant 0 : index
    %c0_43 = arith.constant 0 : index
    %106 = vector.load %arg5[%c2_41, %c0_42, %c0_43] : memref<4x8x32xf32, #tpu.memory_space<vmem>>, vector<1x8x32xf32>
    %107 = vector.shape_cast %106 : vector<1x8x32xf32> to vector<8x32xf32>
    %108 = vector.shape_cast %107 : vector<8x32xf32> to vector<1x8x32xf32>
    %109 = vector.broadcast %108 : vector<1x8x32xf32> to vector<8x8x32xf32>
    %110 = arith.addf %105, %109 : vector<8x8x32xf32>
    %c3_44 = arith.constant 3 : index
    %c0_45 = arith.constant 0 : index
    %c0_46 = arith.constant 0 : index
    %111 = vector.load %arg4[%c3_44, %c0_45, %c0_46] : memref<4x8x32xf32, #tpu.memory_space<vmem>>, vector<1x8x32xf32>
    %112 = vector.shape_cast %111 : vector<1x8x32xf32> to vector<8x32xf32>
    %113 = vector.shape_cast %112 : vector<8x32xf32> to vector<1x8x32xf32>
    %114 = vector.broadcast %77 : vector<8x1x32xf32> to vector<8x8x32xf32>
    %115 = vector.broadcast %113 : vector<1x8x32xf32> to vector<8x8x32xf32>
    %116 = arith.mulf %114, %115 : vector<8x8x32xf32>
    %c3_47 = arith.constant 3 : index
    %c0_48 = arith.constant 0 : index
    %c0_49 = arith.constant 0 : index
    %117 = vector.load %arg5[%c3_47, %c0_48, %c0_49] : memref<4x8x32xf32, #tpu.memory_space<vmem>>, vector<1x8x32xf32>
    %118 = vector.shape_cast %117 : vector<1x8x32xf32> to vector<8x32xf32>
    %119 = vector.shape_cast %118 : vector<8x32xf32> to vector<1x8x32xf32>
    %120 = vector.broadcast %119 : vector<1x8x32xf32> to vector<8x8x32xf32>
    %121 = arith.addf %116, %120 : vector<8x8x32xf32>
    %122 = arith.mulf %67, %88 : vector<8x8x32xf32>
    %123 = arith.mulf %76, %99 : vector<8x8x32xf32>
    %124 = arith.subf %122, %123 : vector<8x8x32xf32>
    %125 = vector.broadcast %77 : vector<8x1x32xf32> to vector<8x8x32xf32>
    %126 = arith.mulf %124, %125 : vector<8x8x32xf32>
    %127 = arith.mulf %67, %99 : vector<8x8x32xf32>
    %128 = arith.mulf %76, %88 : vector<8x8x32xf32>
    %129 = arith.addf %127, %128 : vector<8x8x32xf32>
    %130 = vector.broadcast %77 : vector<8x1x32xf32> to vector<8x8x32xf32>
    %131 = arith.mulf %129, %130 : vector<8x8x32xf32>
    %cst_50 = arith.constant 0.000000e+00 : f32
    %132 = vector.broadcast %cst_50 : f32 to vector<8x32xf32>
    %cst_51 = arith.constant 0.000000e+00 : f32
    %133 = vector.broadcast %cst_51 : f32 to vector<8x32xf32>
    %134 = vector.extract_strided_slice %54 {offsets = [0, 0, 0], sizes = [1, 8, 32], strides = [1, 1, 1]} : vector<8x8x32xf32> to vector<1x8x32xf32>
    %135 = vector.shape_cast %134 : vector<1x8x32xf32> to vector<8x32xf32>
    %136 = arith.mulf %135, %132 : vector<8x32xf32>
    %137 = vector.extract_strided_slice %56 {offsets = [0, 0, 0], sizes = [1, 8, 32], strides = [1, 1, 1]} : vector<8x8x32xf32> to vector<1x8x32xf32>
    %138 = vector.shape_cast %137 : vector<1x8x32xf32> to vector<8x32xf32>
    %139 = arith.mulf %138, %133 : vector<8x32xf32>
    %140 = arith.subf %136, %139 : vector<8x32xf32>
    %141 = vector.extract_strided_slice %126 {offsets = [0, 0, 0], sizes = [1, 8, 32], strides = [1, 1, 1]} : vector<8x8x32xf32> to vector<1x8x32xf32>
    %142 = vector.shape_cast %141 : vector<1x8x32xf32> to vector<8x32xf32>
    %143 = arith.addf %140, %142 : vector<8x32xf32>
    %144 = vector.extract_strided_slice %54 {offsets = [0, 0, 0], sizes = [1, 8, 32], strides = [1, 1, 1]} : vector<8x8x32xf32> to vector<1x8x32xf32>
    %145 = vector.shape_cast %144 : vector<1x8x32xf32> to vector<8x32xf32>
    %146 = arith.mulf %145, %133 : vector<8x32xf32>
    %147 = vector.extract_strided_slice %56 {offsets = [0, 0, 0], sizes = [1, 8, 32], strides = [1, 1, 1]} : vector<8x8x32xf32> to vector<1x8x32xf32>
    %148 = vector.shape_cast %147 : vector<1x8x32xf32> to vector<8x32xf32>
    %149 = arith.mulf %148, %132 : vector<8x32xf32>
    %150 = arith.addf %146, %149 : vector<8x32xf32>
    %151 = vector.extract_strided_slice %131 {offsets = [0, 0, 0], sizes = [1, 8, 32], strides = [1, 1, 1]} : vector<8x8x32xf32> to vector<1x8x32xf32>
    %152 = vector.shape_cast %151 : vector<1x8x32xf32> to vector<8x32xf32>
    %153 = arith.addf %150, %152 : vector<8x32xf32>
    %154 = vector.extract_strided_slice %110 {offsets = [0, 0, 0], sizes = [1, 8, 32], strides = [1, 1, 1]} : vector<8x8x32xf32> to vector<1x8x32xf32>
    %155 = vector.shape_cast %154 : vector<1x8x32xf32> to vector<8x32xf32>
    %156 = arith.mulf %143, %155 : vector<8x32xf32>
    %157 = vector.extract_strided_slice %121 {offsets = [0, 0, 0], sizes = [1, 8, 32], strides = [1, 1, 1]} : vector<8x8x32xf32> to vector<1x8x32xf32>
    %158 = vector.shape_cast %157 : vector<1x8x32xf32> to vector<8x32xf32>
    %159 = arith.mulf %153, %158 : vector<8x32xf32>
    %160 = arith.subf %156, %159 : vector<8x32xf32>
    %cst_52 = arith.constant dense<0.000000e+00> : vector<32xf32>
    %161 = vector.multi_reduction <add>, %160, %cst_52 [0] : vector<8x32xf32> to vector<32xf32>
    %162 = vector.shape_cast %161 : vector<32xf32> to vector<1x32xf32>
    %163 = vector.extract_strided_slice %54 {offsets = [1, 0, 0], sizes = [1, 8, 32], strides = [1, 1, 1]} : vector<8x8x32xf32> to vector<1x8x32xf32>
    %164 = vector.shape_cast %163 : vector<1x8x32xf32> to vector<8x32xf32>
    %165 = arith.mulf %164, %143 : vector<8x32xf32>
    %166 = vector.extract_strided_slice %56 {offsets = [1, 0, 0], sizes = [1, 8, 32], strides = [1, 1, 1]} : vector<8x8x32xf32> to vector<1x8x32xf32>
    %167 = vector.shape_cast %166 : vector<1x8x32xf32> to vector<8x32xf32>
    %168 = arith.mulf %167, %153 : vector<8x32xf32>
    %169 = arith.subf %165, %168 : vector<8x32xf32>
    %170 = vector.extract_strided_slice %126 {offsets = [1, 0, 0], sizes = [1, 8, 32], strides = [1, 1, 1]} : vector<8x8x32xf32> to vector<1x8x32xf32>
    %171 = vector.shape_cast %170 : vector<1x8x32xf32> to vector<8x32xf32>
    %172 = arith.addf %169, %171 : vector<8x32xf32>
    %173 = vector.extract_strided_slice %54 {offsets = [1, 0, 0], sizes = [1, 8, 32], strides = [1, 1, 1]} : vector<8x8x32xf32> to vector<1x8x32xf32>
    %174 = vector.shape_cast %173 : vector<1x8x32xf32> to vector<8x32xf32>
    %175 = arith.mulf %174, %153 : vector<8x32xf32>
    %176 = vector.extract_strided_slice %56 {offsets = [1, 0, 0], sizes = [1, 8, 32], strides = [1, 1, 1]} : vector<8x8x32xf32> to vector<1x8x32xf32>
    %177 = vector.shape_cast %176 : vector<1x8x32xf32> to vector<8x32xf32>
    %178 = arith.mulf %177, %143 : vector<8x32xf32>
    %179 = arith.addf %175, %178 : vector<8x32xf32>
    %180 = vector.extract_strided_slice %131 {offsets = [1, 0, 0], sizes = [1, 8, 32], strides = [1, 1, 1]} : vector<8x8x32xf32> to vector<1x8x32xf32>
    %181 = vector.shape_cast %180 : vector<1x8x32xf32> to vector<8x32xf32>
    %182 = arith.addf %179, %181 : vector<8x32xf32>
    %183 = vector.extract_strided_slice %110 {offsets = [1, 0, 0], sizes = [1, 8, 32], strides = [1, 1, 1]} : vector<8x8x32xf32> to vector<1x8x32xf32>
    %184 = vector.shape_cast %183 : vector<1x8x32xf32> to vector<8x32xf32>
    %185 = arith.mulf %172, %184 : vector<8x32xf32>
    %186 = vector.extract_strided_slice %121 {offsets = [1, 0, 0], sizes = [1, 8, 32], strides = [1, 1, 1]} : vector<8x8x32xf32> to vector<1x8x32xf32>
    %187 = vector.shape_cast %186 : vector<1x8x32xf32> to vector<8x32xf32>
    %188 = arith.mulf %182, %187 : vector<8x32xf32>
    %189 = arith.subf %185, %188 : vector<8x32xf32>
    %cst_53 = arith.constant dense<0.000000e+00> : vector<32xf32>
    %190 = vector.multi_reduction <add>, %189, %cst_53 [0] : vector<8x32xf32> to vector<32xf32>
    %191 = vector.shape_cast %190 : vector<32xf32> to vector<1x32xf32>
    %192 = vector.extract_strided_slice %54 {offsets = [2, 0, 0], sizes = [1, 8, 32], strides = [1, 1, 1]} : vector<8x8x32xf32> to vector<1x8x32xf32>
    %193 = vector.shape_cast %192 : vector<1x8x32xf32> to vector<8x32xf32>
    %194 = arith.mulf %193, %172 : vector<8x32xf32>
    %195 = vector.extract_strided_slice %56 {offsets = [2, 0, 0], sizes = [1, 8, 32], strides = [1, 1, 1]} : vector<8x8x32xf32> to vector<1x8x32xf32>
    %196 = vector.shape_cast %195 : vector<1x8x32xf32> to vector<8x32xf32>
    %197 = arith.mulf %196, %182 : vector<8x32xf32>
    %198 = arith.subf %194, %197 : vector<8x32xf32>
    %199 = vector.extract_strided_slice %126 {offsets = [2, 0, 0], sizes = [1, 8, 32], strides = [1, 1, 1]} : vector<8x8x32xf32> to vector<1x8x32xf32>
    %200 = vector.shape_cast %199 : vector<1x8x32xf32> to vector<8x32xf32>
    %201 = arith.addf %198, %200 : vector<8x32xf32>
    %202 = vector.extract_strided_slice %54 {offsets = [2, 0, 0], sizes = [1, 8, 32], strides = [1, 1, 1]} : vector<8x8x32xf32> to vector<1x8x32xf32>
    %203 = vector.shape_cast %202 : vector<1x8x32xf32> to vector<8x32xf32>
    %204 = arith.mulf %203, %182 : vector<8x32xf32>
    %205 = vector.extract_strided_slice %56 {offsets = [2, 0, 0], sizes = [1, 8, 32], strides = [1, 1, 1]} : vector<8x8x32xf32> to vector<1x8x32xf32>
    %206 = vector.shape_cast %205 : vector<1x8x32xf32> to vector<8x32xf32>
    %207 = arith.mulf %206, %172 : vector<8x32xf32>
    %208 = arith.addf %204, %207 : vector<8x32xf32>
    %209 = vector.extract_strided_slice %131 {offsets = [2, 0, 0], sizes = [1, 8, 32], strides = [1, 1, 1]} : vector<8x8x32xf32> to vector<1x8x32xf32>
    %210 = vector.shape_cast %209 : vector<1x8x32xf32> to vector<8x32xf32>
    %211 = arith.addf %208, %210 : vector<8x32xf32>
    %212 = vector.extract_strided_slice %110 {offsets = [2, 0, 0], sizes = [1, 8, 32], strides = [1, 1, 1]} : vector<8x8x32xf32> to vector<1x8x32xf32>
    %213 = vector.shape_cast %212 : vector<1x8x32xf32> to vector<8x32xf32>
    %214 = arith.mulf %201, %213 : vector<8x32xf32>
    %215 = vector.extract_strided_slice %121 {offsets = [2, 0, 0], sizes = [1, 8, 32], strides = [1, 1, 1]} : vector<8x8x32xf32> to vector<1x8x32xf32>
    %216 = vector.shape_cast %215 : vector<1x8x32xf32> to vector<8x32xf32>
    %217 = arith.mulf %211, %216 : vector<8x32xf32>
    %218 = arith.subf %214, %217 : vector<8x32xf32>
    %cst_54 = arith.constant dense<0.000000e+00> : vector<32xf32>
    %219 = vector.multi_reduction <add>, %218, %cst_54 [0] : vector<8x32xf32> to vector<32xf32>
    %220 = vector.shape_cast %219 : vector<32xf32> to vector<1x32xf32>
    %221 = vector.extract_strided_slice %54 {offsets = [3, 0, 0], sizes = [1, 8, 32], strides = [1, 1, 1]} : vector<8x8x32xf32> to vector<1x8x32xf32>
    %222 = vector.shape_cast %221 : vector<1x8x32xf32> to vector<8x32xf32>
    %223 = arith.mulf %222, %201 : vector<8x32xf32>
    %224 = vector.extract_strided_slice %56 {offsets = [3, 0, 0], sizes = [1, 8, 32], strides = [1, 1, 1]} : vector<8x8x32xf32> to vector<1x8x32xf32>
    %225 = vector.shape_cast %224 : vector<1x8x32xf32> to vector<8x32xf32>
    %226 = arith.mulf %225, %211 : vector<8x32xf32>
    %227 = arith.subf %223, %226 : vector<8x32xf32>
    %228 = vector.extract_strided_slice %126 {offsets = [3, 0, 0], sizes = [1, 8, 32], strides = [1, 1, 1]} : vector<8x8x32xf32> to vector<1x8x32xf32>
    %229 = vector.shape_cast %228 : vector<1x8x32xf32> to vector<8x32xf32>
    %230 = arith.addf %227, %229 : vector<8x32xf32>
    %231 = vector.extract_strided_slice %54 {offsets = [3, 0, 0], sizes = [1, 8, 32], strides = [1, 1, 1]} : vector<8x8x32xf32> to vector<1x8x32xf32>
    %232 = vector.shape_cast %231 : vector<1x8x32xf32> to vector<8x32xf32>
    %233 = arith.mulf %232, %211 : vector<8x32xf32>
    %234 = vector.extract_strided_slice %56 {offsets = [3, 0, 0], sizes = [1, 8, 32], strides = [1, 1, 1]} : vector<8x8x32xf32> to vector<1x8x32xf32>
    %235 = vector.shape_cast %234 : vector<1x8x32xf32> to vector<8x32xf32>
    %236 = arith.mulf %235, %201 : vector<8x32xf32>
    %237 = arith.addf %233, %236 : vector<8x32xf32>
    %238 = vector.extract_strided_slice %131 {offsets = [3, 0, 0], sizes = [1, 8, 32], strides = [1, 1, 1]} : vector<8x8x32xf32> to vector<1x8x32xf32>
    %239 = vector.shape_cast %238 : vector<1x8x32xf32> to vector<8x32xf32>
    %240 = arith.addf %237, %239 : vector<8x32xf32>
    %241 = vector.extract_strided_slice %110 {offsets = [3, 0, 0], sizes = [1, 8, 32], strides = [1, 1, 1]} : vector<8x8x32xf32> to vector<1x8x32xf32>
    %242 = vector.shape_cast %241 : vector<1x8x32xf32> to vector<8x32xf32>
    %243 = arith.mulf %230, %242 : vector<8x32xf32>
    %244 = vector.extract_strided_slice %121 {offsets = [3, 0, 0], sizes = [1, 8, 32], strides = [1, 1, 1]} : vector<8x8x32xf32> to vector<1x8x32xf32>
    %245 = vector.shape_cast %244 : vector<1x8x32xf32> to vector<8x32xf32>
    %246 = arith.mulf %240, %245 : vector<8x32xf32>
    %247 = arith.subf %243, %246 : vector<8x32xf32>
    %cst_55 = arith.constant dense<0.000000e+00> : vector<32xf32>
    %248 = vector.multi_reduction <add>, %247, %cst_55 [0] : vector<8x32xf32> to vector<32xf32>
    %249 = vector.shape_cast %248 : vector<32xf32> to vector<1x32xf32>
    %250 = vector.extract_strided_slice %54 {offsets = [4, 0, 0], sizes = [1, 8, 32], strides = [1, 1, 1]} : vector<8x8x32xf32> to vector<1x8x32xf32>
    %251 = vector.shape_cast %250 : vector<1x8x32xf32> to vector<8x32xf32>
    %252 = arith.mulf %251, %230 : vector<8x32xf32>
    %253 = vector.extract_strided_slice %56 {offsets = [4, 0, 0], sizes = [1, 8, 32], strides = [1, 1, 1]} : vector<8x8x32xf32> to vector<1x8x32xf32>
    %254 = vector.shape_cast %253 : vector<1x8x32xf32> to vector<8x32xf32>
    %255 = arith.mulf %254, %240 : vector<8x32xf32>
    %256 = arith.subf %252, %255 : vector<8x32xf32>
    %257 = vector.extract_strided_slice %126 {offsets = [4, 0, 0], sizes = [1, 8, 32], strides = [1, 1, 1]} : vector<8x8x32xf32> to vector<1x8x32xf32>
    %258 = vector.shape_cast %257 : vector<1x8x32xf32> to vector<8x32xf32>
    %259 = arith.addf %256, %258 : vector<8x32xf32>
    %260 = vector.extract_strided_slice %54 {offsets = [4, 0, 0], sizes = [1, 8, 32], strides = [1, 1, 1]} : vector<8x8x32xf32> to vector<1x8x32xf32>
    %261 = vector.shape_cast %260 : vector<1x8x32xf32> to vector<8x32xf32>
    %262 = arith.mulf %261, %240 : vector<8x32xf32>
    %263 = vector.extract_strided_slice %56 {offsets = [4, 0, 0], sizes = [1, 8, 32], strides = [1, 1, 1]} : vector<8x8x32xf32> to vector<1x8x32xf32>
    %264 = vector.shape_cast %263 : vector<1x8x32xf32> to vector<8x32xf32>
    %265 = arith.mulf %264, %230 : vector<8x32xf32>
    %266 = arith.addf %262, %265 : vector<8x32xf32>
    %267 = vector.extract_strided_slice %131 {offsets = [4, 0, 0], sizes = [1, 8, 32], strides = [1, 1, 1]} : vector<8x8x32xf32> to vector<1x8x32xf32>
    %268 = vector.shape_cast %267 : vector<1x8x32xf32> to vector<8x32xf32>
    %269 = arith.addf %266, %268 : vector<8x32xf32>
    %270 = vector.extract_strided_slice %110 {offsets = [4, 0, 0], sizes = [1, 8, 32], strides = [1, 1, 1]} : vector<8x8x32xf32> to vector<1x8x32xf32>
    %271 = vector.shape_cast %270 : vector<1x8x32xf32> to vector<8x32xf32>
    %272 = arith.mulf %259, %271 : vector<8x32xf32>
    %273 = vector.extract_strided_slice %121 {offsets = [4, 0, 0], sizes = [1, 8, 32], strides = [1, 1, 1]} : vector<8x8x32xf32> to vector<1x8x32xf32>
    %274 = vector.shape_cast %273 : vector<1x8x32xf32> to vector<8x32xf32>
    %275 = arith.mulf %269, %274 : vector<8x32xf32>
    %276 = arith.subf %272, %275 : vector<8x32xf32>
    %cst_56 = arith.constant dense<0.000000e+00> : vector<32xf32>
    %277 = vector.multi_reduction <add>, %276, %cst_56 [0] : vector<8x32xf32> to vector<32xf32>
    %278 = vector.shape_cast %277 : vector<32xf32> to vector<1x32xf32>
    %279 = vector.extract_strided_slice %54 {offsets = [5, 0, 0], sizes = [1, 8, 32], strides = [1, 1, 1]} : vector<8x8x32xf32> to vector<1x8x32xf32>
    %280 = vector.shape_cast %279 : vector<1x8x32xf32> to vector<8x32xf32>
    %281 = arith.mulf %280, %259 : vector<8x32xf32>
    %282 = vector.extract_strided_slice %56 {offsets = [5, 0, 0], sizes = [1, 8, 32], strides = [1, 1, 1]} : vector<8x8x32xf32> to vector<1x8x32xf32>
    %283 = vector.shape_cast %282 : vector<1x8x32xf32> to vector<8x32xf32>
    %284 = arith.mulf %283, %269 : vector<8x32xf32>
    %285 = arith.subf %281, %284 : vector<8x32xf32>
    %286 = vector.extract_strided_slice %126 {offsets = [5, 0, 0], sizes = [1, 8, 32], strides = [1, 1, 1]} : vector<8x8x32xf32> to vector<1x8x32xf32>
    %287 = vector.shape_cast %286 : vector<1x8x32xf32> to vector<8x32xf32>
    %288 = arith.addf %285, %287 : vector<8x32xf32>
    %289 = vector.extract_strided_slice %54 {offsets = [5, 0, 0], sizes = [1, 8, 32], strides = [1, 1, 1]} : vector<8x8x32xf32> to vector<1x8x32xf32>
    %290 = vector.shape_cast %289 : vector<1x8x32xf32> to vector<8x32xf32>
    %291 = arith.mulf %290, %269 : vector<8x32xf32>
    %292 = vector.extract_strided_slice %56 {offsets = [5, 0, 0], sizes = [1, 8, 32], strides = [1, 1, 1]} : vector<8x8x32xf32> to vector<1x8x32xf32>
    %293 = vector.shape_cast %292 : vector<1x8x32xf32> to vector<8x32xf32>
    %294 = arith.mulf %293, %259 : vector<8x32xf32>
    %295 = arith.addf %291, %294 : vector<8x32xf32>
    %296 = vector.extract_strided_slice %131 {offsets = [5, 0, 0], sizes = [1, 8, 32], strides = [1, 1, 1]} : vector<8x8x32xf32> to vector<1x8x32xf32>
    %297 = vector.shape_cast %296 : vector<1x8x32xf32> to vector<8x32xf32>
    %298 = arith.addf %295, %297 : vector<8x32xf32>
    %299 = vector.extract_strided_slice %110 {offsets = [5, 0, 0], sizes = [1, 8, 32], strides = [1, 1, 1]} : vector<8x8x32xf32> to vector<1x8x32xf32>
    %300 = vector.shape_cast %299 : vector<1x8x32xf32> to vector<8x32xf32>
    %301 = arith.mulf %288, %300 : vector<8x32xf32>
    %302 = vector.extract_strided_slice %121 {offsets = [5, 0, 0], sizes = [1, 8, 32], strides = [1, 1, 1]} : vector<8x8x32xf32> to vector<1x8x32xf32>
    %303 = vector.shape_cast %302 : vector<1x8x32xf32> to vector<8x32xf32>
    %304 = arith.mulf %298, %303 : vector<8x32xf32>
    %305 = arith.subf %301, %304 : vector<8x32xf32>
    %cst_57 = arith.constant dense<0.000000e+00> : vector<32xf32>
    %306 = vector.multi_reduction <add>, %305, %cst_57 [0] : vector<8x32xf32> to vector<32xf32>
    %307 = vector.shape_cast %306 : vector<32xf32> to vector<1x32xf32>
    %308 = vector.extract_strided_slice %54 {offsets = [6, 0, 0], sizes = [1, 8, 32], strides = [1, 1, 1]} : vector<8x8x32xf32> to vector<1x8x32xf32>
    %309 = vector.shape_cast %308 : vector<1x8x32xf32> to vector<8x32xf32>
    %310 = arith.mulf %309, %288 : vector<8x32xf32>
    %311 = vector.extract_strided_slice %56 {offsets = [6, 0, 0], sizes = [1, 8, 32], strides = [1, 1, 1]} : vector<8x8x32xf32> to vector<1x8x32xf32>
    %312 = vector.shape_cast %311 : vector<1x8x32xf32> to vector<8x32xf32>
    %313 = arith.mulf %312, %298 : vector<8x32xf32>
    %314 = arith.subf %310, %313 : vector<8x32xf32>
    %315 = vector.extract_strided_slice %126 {offsets = [6, 0, 0], sizes = [1, 8, 32], strides = [1, 1, 1]} : vector<8x8x32xf32> to vector<1x8x32xf32>
    %316 = vector.shape_cast %315 : vector<1x8x32xf32> to vector<8x32xf32>
    %317 = arith.addf %314, %316 : vector<8x32xf32>
    %318 = vector.extract_strided_slice %54 {offsets = [6, 0, 0], sizes = [1, 8, 32], strides = [1, 1, 1]} : vector<8x8x32xf32> to vector<1x8x32xf32>
    %319 = vector.shape_cast %318 : vector<1x8x32xf32> to vector<8x32xf32>
    %320 = arith.mulf %319, %298 : vector<8x32xf32>
    %321 = vector.extract_strided_slice %56 {offsets = [6, 0, 0], sizes = [1, 8, 32], strides = [1, 1, 1]} : vector<8x8x32xf32> to vector<1x8x32xf32>
    %322 = vector.shape_cast %321 : vector<1x8x32xf32> to vector<8x32xf32>
    %323 = arith.mulf %322, %288 : vector<8x32xf32>
    %324 = arith.addf %320, %323 : vector<8x32xf32>
    %325 = vector.extract_strided_slice %131 {offsets = [6, 0, 0], sizes = [1, 8, 32], strides = [1, 1, 1]} : vector<8x8x32xf32> to vector<1x8x32xf32>
    %326 = vector.shape_cast %325 : vector<1x8x32xf32> to vector<8x32xf32>
    %327 = arith.addf %324, %326 : vector<8x32xf32>
    %328 = vector.extract_strided_slice %110 {offsets = [6, 0, 0], sizes = [1, 8, 32], strides = [1, 1, 1]} : vector<8x8x32xf32> to vector<1x8x32xf32>
    %329 = vector.shape_cast %328 : vector<1x8x32xf32> to vector<8x32xf32>
    %330 = arith.mulf %317, %329 : vector<8x32xf32>
    %331 = vector.extract_strided_slice %121 {offsets = [6, 0, 0], sizes = [1, 8, 32], strides = [1, 1, 1]} : vector<8x8x32xf32> to vector<1x8x32xf32>
    %332 = vector.shape_cast %331 : vector<1x8x32xf32> to vector<8x32xf32>
    %333 = arith.mulf %327, %332 : vector<8x32xf32>
    %334 = arith.subf %330, %333 : vector<8x32xf32>
    %cst_58 = arith.constant dense<0.000000e+00> : vector<32xf32>
    %335 = vector.multi_reduction <add>, %334, %cst_58 [0] : vector<8x32xf32> to vector<32xf32>
    %336 = vector.shape_cast %335 : vector<32xf32> to vector<1x32xf32>
    %337 = vector.extract_strided_slice %54 {offsets = [7, 0, 0], sizes = [1, 8, 32], strides = [1, 1, 1]} : vector<8x8x32xf32> to vector<1x8x32xf32>
    %338 = vector.shape_cast %337 : vector<1x8x32xf32> to vector<8x32xf32>
    %339 = arith.mulf %338, %317 : vector<8x32xf32>
    %340 = vector.extract_strided_slice %56 {offsets = [7, 0, 0], sizes = [1, 8, 32], strides = [1, 1, 1]} : vector<8x8x32xf32> to vector<1x8x32xf32>
    %341 = vector.shape_cast %340 : vector<1x8x32xf32> to vector<8x32xf32>
    %342 = arith.mulf %341, %327 : vector<8x32xf32>
    %343 = arith.subf %339, %342 : vector<8x32xf32>
    %344 = vector.extract_strided_slice %126 {offsets = [7, 0, 0], sizes = [1, 8, 32], strides = [1, 1, 1]} : vector<8x8x32xf32> to vector<1x8x32xf32>
    %345 = vector.shape_cast %344 : vector<1x8x32xf32> to vector<8x32xf32>
    %346 = arith.addf %343, %345 : vector<8x32xf32>
    %347 = vector.extract_strided_slice %54 {offsets = [7, 0, 0], sizes = [1, 8, 32], strides = [1, 1, 1]} : vector<8x8x32xf32> to vector<1x8x32xf32>
    %348 = vector.shape_cast %347 : vector<1x8x32xf32> to vector<8x32xf32>
    %349 = arith.mulf %348, %327 : vector<8x32xf32>
    %350 = vector.extract_strided_slice %56 {offsets = [7, 0, 0], sizes = [1, 8, 32], strides = [1, 1, 1]} : vector<8x8x32xf32> to vector<1x8x32xf32>
    %351 = vector.shape_cast %350 : vector<1x8x32xf32> to vector<8x32xf32>
    %352 = arith.mulf %351, %317 : vector<8x32xf32>
    %353 = arith.addf %349, %352 : vector<8x32xf32>
    %354 = vector.extract_strided_slice %131 {offsets = [7, 0, 0], sizes = [1, 8, 32], strides = [1, 1, 1]} : vector<8x8x32xf32> to vector<1x8x32xf32>
    %355 = vector.shape_cast %354 : vector<1x8x32xf32> to vector<8x32xf32>
    %356 = arith.addf %353, %355 : vector<8x32xf32>
    %357 = vector.extract_strided_slice %110 {offsets = [7, 0, 0], sizes = [1, 8, 32], strides = [1, 1, 1]} : vector<8x8x32xf32> to vector<1x8x32xf32>
    %358 = vector.shape_cast %357 : vector<1x8x32xf32> to vector<8x32xf32>
    %359 = arith.mulf %346, %358 : vector<8x32xf32>
    %360 = vector.extract_strided_slice %121 {offsets = [7, 0, 0], sizes = [1, 8, 32], strides = [1, 1, 1]} : vector<8x8x32xf32> to vector<1x8x32xf32>
    %361 = vector.shape_cast %360 : vector<1x8x32xf32> to vector<8x32xf32>
    %362 = arith.mulf %356, %361 : vector<8x32xf32>
    %363 = arith.subf %359, %362 : vector<8x32xf32>
    %cst_59 = arith.constant dense<0.000000e+00> : vector<32xf32>
    %364 = vector.multi_reduction <add>, %363, %cst_59 [0] : vector<8x32xf32> to vector<32xf32>
    %365 = vector.shape_cast %364 : vector<32xf32> to vector<1x32xf32>
    %366 = tpu.concatenate %162, %191, %220, %249, %278, %307, %336, %365 in 0 : vector<1x32xf32>, vector<1x32xf32>, vector<1x32xf32>, vector<1x32xf32>, vector<1x32xf32>, vector<1x32xf32>, vector<1x32xf32>, vector<1x32xf32> -> vector<8x32xf32>
    %c0_60 = arith.constant 0 : index
    %c0_61 = arith.constant 0 : index
    %367 = vector.load %arg8[%c0_60, %c0_61] : memref<1x32xf32, #tpu.memory_space<vmem>>, vector<1x32xf32>
    %368 = vector.broadcast %367 : vector<1x32xf32> to vector<8x32xf32>
    %369 = arith.mulf %8, %368 : vector<8x32xf32>
    %370 = arith.addf %366, %369 : vector<8x32xf32>
    %371 = arith.mulf %370, %14 : vector<8x32xf32>
    %c0_62 = arith.constant 0 : index
    %c0_63 = arith.constant 0 : index
    %372 = vector.load %arg9[%c0_62, %c0_63] : memref<32x32xf32, #tpu.memory_space<vmem>>, vector<32x32xf32>
    %cst_64 = arith.constant dense<0.000000e+00> : vector<8x32xf32>
    %373 = tpu.matmul %371, %372, %cst_64 {dimension_numbers = #tpu.dot_dimension_numbers<[1], [0], [0], [1], [0, 0, 1, 1], [], []>, precision = #tpu.contract_precision<fp32>} : vector<8x32xf32>, vector<32x32xf32>, vector<8x32xf32> -> vector<8x32xf32>
    %c0_65 = arith.constant 0 : index
    %c0_66 = arith.constant 0 : index
    %374 = vector.load %arg10[%c0_65, %c0_66] : memref<1x32xf32, #tpu.memory_space<vmem>>, vector<1x32xf32>
    %375 = vector.broadcast %374 : vector<1x32xf32> to vector<8x32xf32>
    %376 = arith.addf %373, %375 : vector<8x32xf32>
    %c0_67 = arith.constant 0 : index
    %c0_68 = arith.constant 0 : index
    %c0_69 = arith.constant 0 : index
    %377 = vector.load %arg11[%c0_67, %c0_68, %c0_69] : memref<1x8x32xf32, #tpu.memory_space<vmem>>, vector<1x8x32xf32>
    %378 = vector.shape_cast %377 : vector<1x8x32xf32> to vector<8x32xf32>
    %379 = vector.shape_cast %376 : vector<8x32xf32> to vector<1x8x32xf32>
    tpu.vector_store %arg11[%c0_67, %c0_68, %c0_69], %379 {strides = array<i32>} : memref<1x8x32xf32, #tpu.memory_space<vmem>>, vector<1x8x32xf32>,
    return
  }
  func.func @transform_0(%arg0: i32) -> (i32, i32, i32) {
    %c0_i32 = arith.constant 0 : i32
    %c0_i32_0 = arith.constant 0 : i32
    %c0_i32_1 = arith.constant 0 : i32
    return %arg0, %c0_i32, %c0_i32_0 : i32, i32, i32
  }
  func.func @transform_1(%arg0: i32) -> (i32, i32) {
    %c0_i32 = arith.constant 0 : i32
    %c0_i32_0 = arith.constant 0 : i32
    %c0_i32_1 = arith.constant 0 : i32
    return %c0_i32, %c0_i32_0 : i32, i32
  }
  func.func @transform_2(%arg0: i32) -> (i32, i32) {
    %c0_i32 = arith.constant 0 : i32
    %c0_i32_0 = arith.constant 0 : i32
    %c0_i32_1 = arith.constant 0 : i32
    return %c0_i32, %c0_i32_0 : i32, i32
  }
  func.func @transform_3(%arg0: i32) -> (i32, i32, i32) {
    %c0_i32 = arith.constant 0 : i32
    %c0_i32_0 = arith.constant 0 : i32
    %c0_i32_1 = arith.constant 0 : i32
    %c0_i32_2 = arith.constant 0 : i32
    return %c0_i32, %c0_i32_0, %c0_i32_1 : i32, i32, i32
  }
  func.func @transform_4(%arg0: i32) -> (i32, i32, i32) {
    %c0_i32 = arith.constant 0 : i32
    %c0_i32_0 = arith.constant 0 : i32
    %c0_i32_1 = arith.constant 0 : i32
    %c0_i32_2 = arith.constant 0 : i32
    return %c0_i32, %c0_i32_0, %c0_i32_1 : i32, i32, i32
  }
  func.func @transform_5(%arg0: i32) -> (i32, i32) {
    %c0_i32 = arith.constant 0 : i32
    %c0_i32_0 = arith.constant 0 : i32
    %c0_i32_1 = arith.constant 0 : i32
    return %c0_i32, %c0_i32_0 : i32, i32
  }
  func.func @transform_6(%arg0: i32) -> (i32, i32, i32) {
    %c0_i32 = arith.constant 0 : i32
    %c0_i32_0 = arith.constant 0 : i32
    %c0_i32_1 = arith.constant 0 : i32
    %c0_i32_2 = arith.constant 0 : i32
    return %c0_i32, %c0_i32_0, %c0_i32_1 : i32, i32, i32
  }
  func.func @transform_7(%arg0: i32) -> (i32, i32) {
    %c0_i32 = arith.constant 0 : i32
    %c0_i32_0 = arith.constant 0 : i32
    %c0_i32_1 = arith.constant 0 : i32
    return %c0_i32, %c0_i32_0 : i32, i32
  }
  func.func @transform_8(%arg0: i32) -> (i32, i32) {
    %c0_i32 = arith.constant 0 : i32
    %c0_i32_0 = arith.constant 0 : i32
    %c0_i32_1 = arith.constant 0 : i32
    return %c0_i32, %c0_i32_0 : i32, i32
  }
  func.func @transform_9(%arg0: i32) -> (i32, i32) {
    %c0_i32 = arith.constant 0 : i32
    %c0_i32_0 = arith.constant 0 : i32
    %c0_i32_1 = arith.constant 0 : i32
    return %c0_i32, %c0_i32_0 : i32, i32
  }
  func.func @transform_10(%arg0: i32) -> (i32, i32, i32) {
    %c0_i32 = arith.constant 0 : i32
    %c0_i32_0 = arith.constant 0 : i32
    %c0_i32_1 = arith.constant 0 : i32
    return %arg0, %c0_i32, %c0_i32_0 : i32, i32, i32
  }
}

</mosaic_0001>

<llo_original>
// kernel: lrnn_forward.1
$region0: #{lrnn_forward.1}
  #allocation0 [shape = 'u32[]', space=smem, size = 0x4, offset = 0x4, fixed_abs, tag = 'smem constant byte address 0x4 - core index']
  #allocation1 [shape = 'u32[144,128]{1,0:T(1,128)}', space=vmem, size = 0x12000, scoped, tag = 'internal scratch']
  %s0 = inlined_call_operand.vmem [shape: f32[2,8,32], index: 0, kind: input, shape index: {}]
  %s1 = inlined_call_operand.vmem [shape: f32[32,64], index: 1, kind: input, shape index: {}]
  %s2 = inlined_call_operand.vmem [shape: f32[1,64], index: 2, kind: input, shape index: {}]
  %s3 = inlined_call_operand.vmem [shape: f32[4,8,32], index: 3, kind: input, shape index: {}]
  %s4 = inlined_call_operand.vmem [shape: f32[4,8,32], index: 4, kind: input, shape index: {}]
  %s5 = inlined_call_operand.vmem [shape: f32[2,32], index: 5, kind: input, shape index: {}]
  %s6 = inlined_call_operand.vmem [shape: f32[4,8,32], index: 6, kind: input, shape index: {}]
  %s7 = inlined_call_operand.vmem [shape: f32[1,32], index: 7, kind: input, shape index: {}]
  %s8 = inlined_call_operand.vmem [shape: f32[32,32], index: 8, kind: input, shape index: {}]
  %s9 = inlined_call_operand.vmem [shape: f32[1,32], index: 9, kind: input, shape index: {}]
  %s10 = inlined_call_operand.hbm [shape: f32[2,8,32], index: 10, kind: output, shape index: {}]
  %s11 = sld [smem:[#allocation0]]
  $region73: #{lrnn_forward.1} parent=0
    _
  %s13 = ssub.s32 1, %s11
  %s14 = scalar_select 0, %s13, %s11
  $region1: #{lrnn_forward.1} parent=0
    #allocation2 [shape = 'u8[8192]{0}', space=vmem, size = 0x2000, scoped, tag = 'output window, operand 0']
    #allocation3 [shape = 's32[2]{0}', space=sflag, size = 0x8, scoped, tag = 'scoped memory for lrnn_forward.1']
    %15 = vsyncpa [#allocation3], 0
    %s16 = scalar_lea.sflag [#allocation3], 1
    %17 = vsyncpa %s16, 0
    loop: start=0, step=1, limit=4
    $region2: #{lrnn_forward.1} parent=1 // loop_pre_header
      _
    $region3: #{lrnn_forward.1} parent=1 // loop_header
      %s19 = sphi 0, %s23
      %p20 = scmp.ge.s32.totalorder %s19, 4
      %s29 = sphi 0, %s31
      %s32 = sphi 0, %s29
      %s33 = sphi 0, %s32
      %s49 = sphi 0, %s33
      %s53 = sphi 0, %s53
      %s55 = sphi 0, %s53
      %s56 = sphi 0, %s55
      %s70 = sphi 0, %s56
      %s74 = sphi 0, %s74
      %s76 = sphi 0, %s74
      %s77 = sphi 0, %s76
      %s91 = sphi 0, %s77
      %s95 = sphi 0, %s95
      %s97 = sphi 0, %s95
      %s98 = sphi 0, %s97
      %s112 = sphi 0, %s98
      %s116 = sphi 0, %s116
      %s118 = sphi 0, %s116
      %s119 = sphi 0, %s118
      %s133 = sphi 0, %s119
      %s137 = sphi 0, %s137
      %s139 = sphi 0, %s137
      %s140 = sphi 0, %s139
      %s154 = sphi 0, %s140
      %s158 = sphi 0, %s158
      %s160 = sphi 0, %s158
      %s161 = sphi 0, %s160
      %s175 = sphi 0, %s161
      %s179 = sphi 0, %s179
      %s181 = sphi 0, %s179
      %s182 = sphi 0, %s181
      %s196 = sphi 0, %s182
      %s200 = sphi 0, %s200
      %s202 = sphi 0, %s200
      %s203 = sphi 0, %s202
      %s217 = sphi 0, %s203
      %s221 = sphi 0, %s221
      %s223 = sphi 0, %s221
      %s224 = sphi 0, %s223
      %s238 = sphi 0, %s224
      %s244 = sphi 0, %s246
      %s247 = sphi 0, %s244
      %s248 = sphi 0, %s247
      %s264 = sphi 0, %s248
    $region4: #{lrnn_forward.1} parent=1 // loop_header_branch
      %22 = sbr.rel (%p20) target = $region8
    $region5: #{lrnn_forward.1} parent=1 // loop_body
      %s24 = ssub.s32 %s19, 1
      %s25 = ssub.s32 %s19, 2
      %s26 = sadd.s32 %s19, 1
      %s27 = ssub.s32 %s19, %s26
      %p28 = scmp.eq.s32.totalorder %s27, 0
      %s30 = sadd.s32 %s29, 1
      %s31 = scalar_select %p28, %s29, %s30
      %p34 = pneg %p28
      %p35 = scmp.eq.s32.totalorder %s19, 1
      %p36 = por %p34, %p35
      %p37 = scmp.ne.s32.totalorder %s29, %s32
      %p38 = scmp.eq.s32.totalorder %s19, 0
      %p39 = por %p37, %p38
      %p40 = scmp.ne.s32.totalorder %s29, %s32
      %p41 = scmp.eq.s32.totalorder %s24, 1
      %p42 = por %p40, %p41
      %p43 = scmp.ne.s32.totalorder %s32, %s33
      %p44 = scmp.eq.s32.totalorder %s24, 0
      %p45 = por %p43, %p44
      %p46 = scmp.ne.s32.totalorder %s32, %s33
      %p47 = scmp.eq.s32.totalorder %s25, 1
      %p48 = por %p46, %p47
      %p50 = scmp.ne.s32.totalorder %s33, %s49
      %p51 = scmp.eq.s32.totalorder %s25, 0
      %p52 = por %p50, %p51
      %s54 = sadd.s32 %s53, 1
      %p57 = scmp.eq.s32.totalorder %s19, 1
      %p58 = scmp.ne.s32.totalorder %s53, %s55
      %p59 = scmp.eq.s32.totalorder %s19, 0
      %p60 = por %p58, %p59
      %p61 = scmp.ne.s32.totalorder %s53, %s55
      %p62 = scmp.eq.s32.totalorder %s24, 1
      %p63 = por %p61, %p62
      %p64 = scmp.ne.s32.totalorder %s55, %s56
      %p65 = scmp.eq.s32.totalorder %s24, 0
      %p66 = por %p64, %p65
      %p67 = scmp.ne.s32.totalorder %s55, %s56
      %p68 = scmp.eq.s32.totalorder %s25, 1
      %p69 = por %p67, %p68
      %p71 = scmp.ne.s32.totalorder %s56, %s70
      %p72 = scmp.eq.s32.totalorder %s25, 0
      %p73 = por %p71, %p72
      %s75 = sadd.s32 %s74, 1
      %p78 = scmp.eq.s32.totalorder %s19, 1
      %p79 = scmp.ne.s32.totalorder %s74, %s76
      %p80 = scmp.eq.s32.totalorder %s19, 0
      %p81 = por %p79, %p80
      %p82 = scmp.ne.s32.totalorder %s74, %s76
      %p83 = scmp.eq.s32.totalorder %s24, 1
      %p84 = por %p82, %p83
      %p85 = scmp.ne.s32.totalorder %s76, %s77
      %p86 = scmp.eq.s32.totalorder %s24, 0
      %p87 = por %p85, %p86
      %p88 = scmp.ne.s32.totalorder %s76, %s77
      %p89 = scmp.eq.s32.totalorder %s25, 1
      %p90 = por %p88, %p89
      %p92 = scmp.ne.s32.totalorder %s77, %s91
      %p93 = scmp.eq.s32.totalorder %s25, 0
      %p94 = por %p92, %p93
      %s96 = sadd.s32 %s95, 1
      %p99 = scmp.eq.s32.totalorder %s19, 1
      %p100 = scmp.ne.s32.totalorder %s95, %s97
      %p101 = scmp.eq.s32.totalorder %s19, 0
      %p102 = por %p100, %p101
      %p103 = scmp.ne.s32.totalorder %s95, %s97
      %p104 = scmp.eq.s32.totalorder %s24, 1
      %p105 = por %p103, %p104
      %p106 = scmp.ne.s32.totalorder %s97, %s98
      %p107 = scmp.eq.s32.totalorder %s24, 0
      %p108 = por %p106, %p107
      %p109 = scmp.ne.s32.totalorder %s97, %s98
      %p110 = scmp.eq.s32.totalorder %s25, 1
      %p111 = por %p109, %p110
      %p113 = scmp.ne.s32.totalorder %s98, %s112
      %p114 = scmp.eq.s32.totalorder %s25, 0
      %p115 = por %p113, %p114
      %s117 = sadd.s32 %s116, 1
      %p120 = scmp.eq.s32.totalorder %s19, 1
      %p121 = scmp.ne.s32.totalorder %s116, %s118
      %p122 = scmp.eq.s32.totalorder %s19, 0
      %p123 = por %p121, %p122
      %p124 = scmp.ne.s32.totalorder %s116, %s118
      %p125 = scmp.eq.s32.totalorder %s24, 1
      %p126 = por %p124, %p125
      %p127 = scmp.ne.s32.totalorder %s118, %s119
      %p128 = scmp.eq.s32.totalorder %s24, 0
      %p129 = por %p127, %p128
      %p130 = scmp.ne.s32.totalorder %s118, %s119
      %p131 = scmp.eq.s32.totalorder %s25, 1
      %p132 = por %p130, %p131
      %p134 = scmp.ne.s32.totalorder %s119, %s133
      %p135 = scmp.eq.s32.totalorder %s25, 0
      %p136 = por %p134, %p135
      %s138 = sadd.s32 %s137, 1
      %p141 = scmp.eq.s32.totalorder %s19, 1
      %p142 = scmp.ne.s32.totalorder %s137, %s139
      %p143 = scmp.eq.s32.totalorder %s19, 0
      %p144 = por %p142, %p143
      %p145 = scmp.ne.s32.totalorder %s137, %s139
      %p146 = scmp.eq.s32.totalorder %s24, 1
      %p147 = por %p145, %p146
      %p148 = scmp.ne.s32.totalorder %s139, %s140
      %p149 = scmp.eq.s32.totalorder %s24, 0
      %p150 = por %p148, %p149
      %p151 = scmp.ne.s32.totalorder %s139, %s140
      %p152 = scmp.eq.s32.totalorder %s25, 1
      %p153 = por %p151, %p152
      %p155 = scmp.ne.s32.totalorder %s140, %s154
      %p156 = scmp.eq.s32.totalorder %s25, 0
      %p157 = por %p155, %p156
      %s159 = sadd.s32 %s158, 1
      %p162 = scmp.eq.s32.totalorder %s19, 1
      %p163 = scmp.ne.s32.totalorder %s158, %s160
      %p164 = scmp.eq.s32.totalorder %s19, 0
      %p165 = por %p163, %p164
      %p166 = scmp.ne.s32.totalorder %s158, %s160
      %p167 = scmp.eq.s32.totalorder %s24, 1
      %p168 = por %p166, %p167
      %p169 = scmp.ne.s32.totalorder %s160, %s161
      %p170 = scmp.eq.s32.totalorder %s24, 0
      %p171 = por %p169, %p170
      %p172 = scmp.ne.s32.totalorder %s160, %s161
      %p173 = scmp.eq.s32.totalorder %s25, 1
      %p174 = por %p172, %p173
      %p176 = scmp.ne.s32.totalorder %s161, %s175
      %p177 = scmp.eq.s32.totalorder %s25, 0
      %p178 = por %p176, %p177
      %s180 = sadd.s32 %s179, 1
      %p183 = scmp.eq.s32.totalorder %s19, 1
      %p184 = scmp.ne.s32.totalorder %s179, %s181
      %p185 = scmp.eq.s32.totalorder %s19, 0
      %p186 = por %p184, %p185
      %p187 = scmp.ne.s32.totalorder %s179, %s181
      %p188 = scmp.eq.s32.totalorder %s24, 1
      %p189 = por %p187, %p188
      %p190 = scmp.ne.s32.totalorder %s181, %s182
      %p191 = scmp.eq.s32.totalorder %s24, 0
      %p192 = por %p190, %p191
      %p193 = scmp.ne.s32.totalorder %s181, %s182
      %p194 = scmp.eq.s32.totalorder %s25, 1
      %p195 = por %p193, %p194
      %p197 = scmp.ne.s32.totalorder %s182, %s196
      %p198 = scmp.eq.s32.totalorder %s25, 0
      %p199 = por %p197, %p198
      %s201 = sadd.s32 %s200, 1
      %p204 = scmp.eq.s32.totalorder %s19, 1
      %p205 = scmp.ne.s32.totalorder %s200, %s202
      %p206 = scmp.eq.s32.totalorder %s19, 0
      %p207 = por %p205, %p206
      %p208 = scmp.ne.s32.totalorder %s200, %s202
      %p209 = scmp.eq.s32.totalorder %s24, 1
      %p210 = por %p208, %p209
      %p211 = scmp.ne.s32.totalorder %s202, %s203
      %p212 = scmp.eq.s32.totalorder %s24, 0
      %p213 = por %p211, %p212
      %p214 = scmp.ne.s32.totalorder %s202, %s203
      %p215 = scmp.eq.s32.totalorder %s25, 1
      %p216 = por %p214, %p215
      %p218 = scmp.ne.s32.totalorder %s203, %s217
      %p219 = scmp.eq.s32.totalorder %s25, 0
      %p220 = por %p218, %p219
      %s222 = sadd.s32 %s221, 1
      %p225 = scmp.eq.s32.totalorder %s19, 1
      %p226 = scmp.ne.s32.totalorder %s221, %s223
      %p227 = scmp.eq.s32.totalorder %s19, 0
      %p228 = por %p226, %p227
      %p229 = scmp.ne.s32.totalorder %s221, %s223
      %p230 = scmp.eq.s32.totalorder %s24, 1
      %p231 = por %p229, %p230
      %p232 = scmp.ne.s32.totalorder %s223, %s224
      %p233 = scmp.eq.s32.totalorder %s24, 0
      %p234 = por %p232, %p233
      %p235 = scmp.ne.s32.totalorder %s223, %s224
      %p236 = scmp.eq.s32.totalorder %s25, 1
      %p237 = por %p235, %p236
      %p239 = scmp.ne.s32.totalorder %s224, %s238
      %p240 = scmp.eq.s32.totalorder %s25, 0
      %p241 = por %p239, %p240
      %s242 = ssub.s32 %s19, %s26
      %p243 = scmp.eq.s32.totalorder %s242, 0
      %s245 = sadd.s32 %s244, 1
      %s246 = scalar_select %p243, %s244, %s245
      %p249 = pneg %p243
      %p250 = scmp.eq.s32.totalorder %s19, 1
      %p251 = por %p249, %p250
      %p252 = scmp.ne.s32.totalorder %s244, %s247
      %p253 = scmp.eq.s32.totalorder %s19, 0
      %p254 = por %p252, %p253
      %p255 = scmp.ne.s32.totalorder %s244, %s247
      %p256 = scmp.eq.s32.totalorder %s24, 1
      %p257 = por %p255, %p256
      %p258 = scmp.ne.s32.totalorder %s247, %s248
      %p259 = scmp.eq.s32.totalorder %s24, 0
      %p260 = por %p258, %p259
      %p261 = scmp.ne.s32.totalorder %s247, %s248
      %p262 = scmp.eq.s32.totalorder %s25, 1
      %p263 = por %p261, %p262
      %p265 = scmp.ne.s32.totalorder %s248, %s264
      %p266 = scmp.eq.s32.totalorder %s25, 0
      %p267 = por %p265, %p266
      %p268 = scmp.le.s32.totalorder 1, %s19
      %p269 = scmp.lt.s32.totalorder %s19, 3
      %p270 = pnand %p268, %p269
      %p271 = pneg %p270
      // Predicated region
      $region9: #{lrnn_forward.1} parent=5 // pred_check
        _
      $region10: #{lrnn_forward.1} parent=5 // pred_check_branch
        %273 = sbr.rel (%p270) target = $region12
      $region11: #{lrnn_forward.1} parent=5 // pred_region
        %s274 = ssub.s32 %s19, 1
        // Predicated region
        $region13: #{lrnn_forward.1} parent=11 // pred_check
          %p275 = pneg %p66
        $region14: #{lrnn_forward.1} parent=11 // pred_check_branch
          %277 = sbr.rel (%p275) target = $region16
        $region15: #{lrnn_forward.1} parent=11 // pred_region
          _
        $region16: #{lrnn_forward.1} parent=11 // pred_fallthru
          _
        // Predicated region
        $region17: #{lrnn_forward.1} parent=11 // pred_check
          %p278 = pneg %p87
        $region18: #{lrnn_forward.1} parent=11 // pred_check_branch
          %280 = sbr.rel (%p278) target = $region20
        $region19: #{lrnn_forward.1} parent=11 // pred_region
          _
        $region20: #{lrnn_forward.1} parent=11 // pred_fallthru
          _
        // Predicated region
        $region21: #{lrnn_forward.1} parent=11 // pred_check
          %p281 = pneg %p108
        $region22: #{lrnn_forward.1} parent=11 // pred_check_branch
          %283 = sbr.rel (%p281) target = $region24
        $region23: #{lrnn_forward.1} parent=11 // pred_region
          _
        $region24: #{lrnn_forward.1} parent=11 // pred_fallthru
          _
        // Predicated region
        $region25: #{lrnn_forward.1} parent=11 // pred_check
          %p284 = pneg %p129
        $region26: #{lrnn_forward.1} parent=11 // pred_check_branch
          %286 = sbr.rel (%p284) target = $region28
        $region27: #{lrnn_forward.1} parent=11 // pred_region
          _
        $region28: #{lrnn_forward.1} parent=11 // pred_fallthru
          _
        // Predicated region
        $region29: #{lrnn_forward.1} parent=11 // pred_check
          %p287 = pneg %p150
        $region30: #{lrnn_forward.1} parent=11 // pred_check_branch
          %289 = sbr.rel (%p287) target = $region32
        $region31: #{lrnn_forward.1} parent=11 // pred_region
          _
        $region32: #{lrnn_forward.1} parent=11 // pred_fallthru
          _
        // Predicated region
        $region33: #{lrnn_forward.1} parent=11 // pred_check
          %p290 = pneg %p171
        $region34: #{lrnn_forward.1} parent=11 // pred_check_branch
          %292 = sbr.rel (%p290) target = $region36
        $region35: #{lrnn_forward.1} parent=11 // pred_region
          _
        $region36: #{lrnn_forward.1} parent=11 // pred_fallthru
          _
        // Predicated region
        $region37: #{lrnn_forward.1} parent=11 // pred_check
          %p293 = pneg %p192
        $region38: #{lrnn_forward.1} parent=11 // pred_check_branch
          %295 = sbr.rel (%p293) target = $region40
        $region39: #{lrnn_forward.1} parent=11 // pred_region
          _
        $region40: #{lrnn_forward.1} parent=11 // pred_fallthru
          _
        // Predicated region
        $region41: #{lrnn_forward.1} parent=11 // pred_check
          %p296 = pneg %p213
        $region42: #{lrnn_forward.1} parent=11 // pred_check_branch
          %298 = sbr.rel (%p296) target = $region44
        $region43: #{lrnn_forward.1} parent=11 // pred_region
          _
        $region44: #{lrnn_forward.1} parent=11 // pred_fallthru
          _
        // Predicated region
        $region45: #{lrnn_forward.1} parent=11 // pred_check
          %p299 = pneg %p234
        $region46: #{lrnn_forward.1} parent=11 // pred_check_branch
          %301 = sbr.rel (%p299) target = $region48
        $region47: #{lrnn_forward.1} parent=11 // pred_region
          _
        $region48: #{lrnn_forward.1} parent=11 // pred_fallthru
          _
      $region12: #{lrnn_forward.1} parent=5 // pred_fallthru
        _
      %p302 = scmp.lt.s32.totalorder %s19, 2
      // Predicated region
      $region49: #{lrnn_forward.1} parent=5 // pred_check
        %p303 = pneg %p302
      $region50: #{lrnn_forward.1} parent=5 // pred_check_branch
        %305 = sbr.rel (%p303) target = $region52
      $region51: #{lrnn_forward.1} parent=5 // pred_region
        // Predicated region
        $region53: #{lrnn_forward.1} parent=51 // pred_check
          %p306 = pneg %p39
        $region54: #{lrnn_forward.1} parent=51 // pred_check_branch
          %308 = sbr.rel (%p306) target = $region56
        $region55: #{lrnn_forward.1} parent=51 // pred_region
          %p309 = scmp.lt.s32.totalorder %s19, 1
          %s310 = scalar_select %p309, %s19, 1
          %s311 = smul.addr %s310, 8
          %s312 = scalar_lea.vmem %s0, %s311
        $region56: #{lrnn_forward.1} parent=51 // pred_fallthru
          _
      $region52: #{lrnn_forward.1} parent=5 // pred_fallthru
        _
      %p313 = scmp.le.s32.totalorder 1, %s19
      %p314 = scmp.lt.s32.totalorder %s19, 3
      %p315 = pnand %p313, %p314
      %p316 = pneg %p315
      // Predicated region
      $region57: #{lrnn_forward.1} parent=5 // pred_check
        _
      $region58: #{lrnn_forward.1} parent=5 // pred_check_branch
        %318 = sbr.rel (%p315) target = $region60
      $region59: #{lrnn_forward.1} parent=5 // pred_region
        %s319 = ssub.s32 %s19, 1
        %p320 = scmp.lt.s32.totalorder %s24, 1
        %s321 = scalar_select %p320, %s24, 1
        %s322 = smul.addr %s321, 8
        %s323 = scalar_lea.vmem %s0, %s322
        %p324 = pneg %p45
        %p325 = pneg %p42
        %p326 = pneg %p66
        %p327 = pneg %p63
        %p328 = pneg %p87
        %p329 = pneg %p84
        %p330 = pneg %p108
        %p331 = pneg %p105
        %p332 = pneg %p129
        %p333 = pneg %p126
        %p334 = pneg %p150
        %p335 = pneg %p147
        %p336 = pneg %p171
        %p337 = pneg %p168
        %p338 = pneg %p192
        %p339 = pneg %p189
        %p340 = pneg %p213
        %p341 = pneg %p210
        %p342 = pneg %p234
        %p343 = pneg %p231
        %p344 = pneg %p260
        %p345 = pneg %p257
        %s346 = sand.u32 %s247, 1
        %s347 = scalar_lea.sflag [#allocation3], %s346
        %s348 = sand.u32 %s247, 1
        %s349 = smul.addr %s348, 8
        %s350 = scalar_lea.vmem [#allocation2], %s349
        %p351 = scmp.lt.s32.totalorder %s24, 1
        %s352 = scalar_select %p351, %s24, 1
        %s353 = smul.addr %s352, 8
        %s354 = scalar_lea.vmem %s0, %s353
        %v355 = vld [vmem:[%s354] sm:$0xff]
        %v356 = vld [vmem:[%s1] sm:$0xff]
        %v357 = vld [vmem:[%s1 + $0x8] sm:$0xff]
        %v358 = vld [vmem:[%s1 + $0x10] sm:$0xff]
        %v359 = vld [vmem:[%s1 + $0x18] sm:$0xff]
        %v360 = vld [vmem:[%s2] sm:$0x1]
        %v362 = vlaneseq
        %v363 = vshrl.u32 %v362, 7
        %v364 = vsub.s32 0, %v363
        %v365 = vrot.slane %v360, %v364
        %vm367 = vcmask 261120
        %v369 = vsel %vm367, %v355, 0
        %371 = vmatprep.subr.mxu0 0.0
        %372 = vmatpush1.msra.mxu0 0.0
        %373 = vmatprep.subr.mxu0 0.0
        %374 = vmatpush1.msra.mxu0 0.0
        %375 = vmatprep.subr.mxu0 0.0
        %376 = vmatpush1.msra.mxu0 0.0
        %377 = vmatprep.subr.mxu0 0.0
        %378 = vmatpush1.msra.mxu0 0.0
        %379 = vmatprep.subr.mxu0 0.0
        %380 = vmatpush1.msra.mxu0 0.0
        %381 = vmatprep.subr.mxu0 0.0
        %382 = vmatpush1.msra.mxu0 0.0
        %383 = vmatprep.subr.mxu0 0.0
        %384 = vmatpush1.msra.mxu0 0.0
        %385 = vmatprep.subr.mxu0 0.0
        %386 = vmatpush1.msra.mxu0 0.0
        %387 = vmatprep.subr.mxu0 0.0
        %388 = vmatpush1.msra.mxu0 0.0
        %389 = vmatprep.subr.mxu0 0.0
        %390 = vmatpush1.msra.mxu0 0.0
        %391 = vmatprep.subr.mxu0 0.0
        %392 = vmatpush1.msra.mxu0 0.0
        %393 = vmatprep.subr.mxu0 0.0
        %394 = vmatpush1.msra.mxu0 0.0
        %395 = vmatprep.subr.mxu0 0.0
        %v396 = vand.u32 %v359, 4294901760
        %397 = vmatpush1.msra.mxu0 %v396
        %398 = vmatprep.subr.mxu0 0.0
        %v399 = vand.u32 %v358, 4294901760
        %400 = vmatpush1.msra.mxu0 %v399
        %401 = vmatprep.subr.mxu0 0.0
        %v402 = vand.u32 %v357, 4294901760
        %403 = vmatpush1.msra.mxu0 %v402
        %404 = vmatprep.subr.mxu0 0.0
        %v405 = vand.u32 %v356, 4294901760
        %406 = vmatpush1.msra.mxu0 %v405
        %407 = vmatprep.subr.mxu0 0.0
        %408 = vmatpush2.msra.mxu0 0.0
        %409 = vmatprep.subr.mxu0 0.0
        %410 = vmatpush2.msra.mxu0 0.0
        %411 = vmatprep.subr.mxu0 0.0
        %412 = vmatpush2.msra.mxu0 0.0
        %413 = vmatprep.subr.mxu0 0.0
        %414 = vmatpush2.msra.mxu0 0.0
        %415 = vmatprep.subr.mxu0 0.0
        %416 = vmatpush2.msra.mxu0 0.0
        %417 = vmatprep.subr.mxu0 0.0
        %418 = vmatpush2.msra.mxu0 0.0
        %419 = vmatprep.subr.mxu0 0.0
        %420 = vmatpush2.msra.mxu0 0.0
        %421 = vmatprep.subr.mxu0 0.0
        %422 = vmatpush2.msra.mxu0 0.0
        %423 = vmatprep.subr.mxu0 0.0
        %424 = vmatpush2.msra.mxu0 0.0
        %425 = vmatprep.subr.mxu0 0.0
        %426 = vmatpush2.msra.mxu0 0.0
        %427 = vmatprep.subr.mxu0 0.0
        %428 = vmatpush2.msra.mxu0 0.0
        %429 = vmatprep.subr.mxu0 0.0
        %430 = vmatpush2.msra.mxu0 0.0
        %431 = vmatprep.subr.mxu0 0.0
        %432 = vmatpush2.msra.mxu0 0.0
        %433 = vmatprep.subr.mxu0 0.0
        %434 = vmatpush2.msra.mxu0 0.0
        %435 = vmatprep.subr.mxu0 0.0
        %436 = vmatpush2.msra.mxu0 0.0
        %437 = vmatprep.subr.mxu0 0.0
        %438 = vmatpush2.msra.mxu0 0.0
        %439 = vmatprep.mubr.f32.mxu0 0.0
        %v440 = vand.u32 %v369, 4294901760
        %v441 = vsub.f32 %v369, %v440
        %v442 = vand.u32 %v441, 4294901760
        %v443 = vsub.f32 %v441, %v442
        %v444 = vand.u32 %v443, 4294901760
        %445 = vmatmul.mubr.f32.gmra.mxu0 %v444
        %v446 = vpop.f32.mrf.mxu0
        %v447 = vadd.f32 %v365, %v446
        %v448 = vpop.f32.mrf.mxu0
        %449 = vdwg.mxu0
        %450 = vmatprep.subr.mxu0 0.0
        %451 = vmatpush1.msra.mxu0 0.0
        %452 = vmatprep.subr.mxu0 0.0
        %453 = vmatpush1.msra.mxu0 0.0
        %454 = vmatprep.subr.mxu0 0.0
        %455 = vmatpush1.msra.mxu0 0.0
        %456 = vmatprep.subr.mxu0 0.0
        %457 = vmatpush1.msra.mxu0 0.0
        %458 = vmatprep.subr.mxu0 0.0
        %459 = vmatpush1.msra.mxu0 0.0
        %460 = vmatprep.subr.mxu0 0.0
        %461 = vmatpush1.msra.mxu0 0.0
        %462 = vmatprep.subr.mxu0 0.0
        %463 = vmatpush1.msra.mxu0 0.0
        %464 = vmatprep.subr.mxu0 0.0
        %465 = vmatpush1.msra.mxu0 0.0
        %466 = vmatprep.subr.mxu0 0.0
        %467 = vmatpush1.msra.mxu0 0.0
        %468 = vmatprep.subr.mxu0 0.0
        %469 = vmatpush1.msra.mxu0 0.0
        %470 = vmatprep.subr.mxu0 0.0
        %471 = vmatpush1.msra.mxu0 0.0
        %472 = vmatprep.subr.mxu0 0.0
        %473 = vmatpush1.msra.mxu0 0.0
        %474 = vmatprep.subr.mxu0 0.0
        %v475 = vand.u32 %v359, 4294901760
        %v476 = vsub.f32 %v359, %v475
        %v477 = vand.u32 %v476, 4294901760
        %v478 = vsub.f32 %v476, %v477
        %v479 = vand.u32 %v478, 4294901760
        %480 = vmatpush1.msra.mxu0 %v479
        %481 = vmatprep.subr.mxu0 0.0
        %v482 = vand.u32 %v358, 4294901760
        %v483 = vsub.f32 %v358, %v482
        %v484 = vand.u32 %v483, 4294901760
        %v485 = vsub.f32 %v483, %v484
        %v486 = vand.u32 %v485, 4294901760
        %487 = vmatpush1.msra.mxu0 %v486
        %488 = vmatprep.subr.mxu0 0.0
        %v489 = vand.u32 %v357, 4294901760
        %v490 = vsub.f32 %v357, %v489
        %v491 = vand.u32 %v490, 4294901760
        %v492 = vsub.f32 %v490, %v491
        %v493 = vand.u32 %v492, 4294901760
        %494 = vmatpush1.msra.mxu0 %v493
        %495 = vmatprep.subr.mxu0 0.0
        %v496 = vand.u32 %v356, 4294901760
        %v497 = vsub.f32 %v356, %v496
        %v498 = vand.u32 %v497, 4294901760
        %v499 = vsub.f32 %v497, %v498
        %v500 = vand.u32 %v499, 4294901760
        %501 = vmatpush1.msra.mxu0 %v500
        %502 = vmatprep.subr.mxu0 0.0
        %503 = vmatpush2.msra.mxu0 0.0
        %504 = vmatprep.subr.mxu0 0.0
        %505 = vmatpush2.msra.mxu0 0.0
        %506 = vmatprep.subr.mxu0 0.0
        %507 = vmatpush2.msra.mxu0 0.0
        %508 = vmatprep.subr.mxu0 0.0
        %509 = vmatpush2.msra.mxu0 0.0
        %510 = vmatprep.subr.mxu0 0.0
        %511 = vmatpush2.msra.mxu0 0.0
        %512 = vmatprep.subr.mxu0 0.0
        %513 = vmatpush2.msra.mxu0 0.0
        %514 = vmatprep.subr.mxu0 0.0
        %515 = vmatpush2.msra.mxu0 0.0
        %516 = vmatprep.subr.mxu0 0.0
        %517 = vmatpush2.msra.mxu0 0.0
        %518 = vmatprep.subr.mxu0 0.0
        %519 = vmatpush2.msra.mxu0 0.0
        %520 = vmatprep.subr.mxu0 0.0
        %521 = vmatpush2.msra.mxu0 0.0
        %522 = vmatprep.subr.mxu0 0.0
        %523 = vmatpush2.msra.mxu0 0.0
        %524 = vmatprep.subr.mxu0 0.0
        %525 = vmatpush2.msra.mxu0 0.0
        %526 = vmatprep.subr.mxu0 0.0
        %527 = vmatpush2.msra.mxu0 0.0
        %528 = vmatprep.subr.mxu0 0.0
        %529 = vmatpush2.msra.mxu0 0.0
        %530 = vmatprep.subr.mxu0 0.0
        %531 = vmatpush2.msra.mxu0 0.0
        %532 = vmatprep.subr.mxu0 0.0
        %533 = vmatpush2.msra.mxu0 0.0
        %534 = vmatprep.mubr.f32.mxu0 0.0
        %v535 = vand.u32 %v369, 4294901760
        %536 = vmatmul.mubr.f32.gmra.mxu0 %v535
        %v537 = vpop.f32.mrf.mxu0
        %v538 = vadd.f32 %v447, %v537
        %v539 = vpop.f32.mrf.mxu0
        %540 = vdwg.mxu0
        %541 = vmatprep.subr.mxu0 0.0
        %542 = vmatpush1.msra.mxu0 0.0
        %543 = vmatprep.subr.mxu0 0.0
        %544 = vmatpush1.msra.mxu0 0.0
        %545 = vmatprep.subr.mxu0 0.0
        %546 = vmatpush1.msra.mxu0 0.0
        %547 = vmatprep.subr.mxu0 0.0
        %548 = vmatpush1.msra.mxu0 0.0
        %549 = vmatprep.subr.mxu0 0.0
        %550 = vmatpush1.msra.mxu0 0.0
        %551 = vmatprep.subr.mxu0 0.0
        %552 = vmatpush1.msra.mxu0 0.0
        %553 = vmatprep.subr.mxu0 0.0
        %554 = vmatpush1.msra.mxu0 0.0
        %555 = vmatprep.subr.mxu0 0.0
        %556 = vmatpush1.msra.mxu0 0.0
        %557 = vmatprep.subr.mxu0 0.0
        %558 = vmatpush1.msra.mxu0 0.0
        %559 = vmatprep.subr.mxu0 0.0
        %560 = vmatpush1.msra.mxu0 0.0
        %561 = vmatprep.subr.mxu0 0.0
        %562 = vmatpush1.msra.mxu0 0.0
        %563 = vmatprep.subr.mxu0 0.0
        %564 = vmatpush1.msra.mxu0 0.0
        %565 = vmatprep.subr.mxu0 0.0
        %v566 = vand.u32 %v359, 4294901760
        %v567 = vsub.f32 %v359, %v566
        %568 = vmatpush1.msra.mxu0 %v567
        %569 = vmatprep.subr.mxu0 0.0
        %v570 = vand.u32 %v358, 4294901760
        %v571 = vsub.f32 %v358, %v570
        %572 = vmatpush1.msra.mxu0 %v571
        %573 = vmatprep.subr.mxu0 0.0
        %v574 = vand.u32 %v357, 4294901760
        %v575 = vsub.f32 %v357, %v574
        %576 = vmatpush1.msra.mxu0 %v575
        %577 = vmatprep.subr.mxu0 0.0
        %v578 = vand.u32 %v356, 4294901760
        %v579 = vsub.f32 %v356, %v578
        %580 = vmatpush1.msra.mxu0 %v579
        %581 = vmatprep.subr.mxu0 0.0
        %582 = vmatpush2.msra.mxu0 0.0
        %583 = vmatprep.subr.mxu0 0.0
        %584 = vmatpush2.msra.mxu0 0.0
        %585 = vmatprep.subr.mxu0 0.0
        %586 = vmatpush2.msra.mxu0 0.0
        %587 = vmatprep.subr.mxu0 0.0
        %588 = vmatpush2.msra.mxu0 0.0
        %589 = vmatprep.subr.mxu0 0.0
        %590 = vmatpush2.msra.mxu0 0.0
        %591 = vmatprep.subr.mxu0 0.0
        %592 = vmatpush2.msra.mxu0 0.0
        %593 = vmatprep.subr.mxu0 0.0
        %594 = vmatpush2.msra.mxu0 0.0
        %595 = vmatprep.subr.mxu0 0.0
        %596 = vmatpush2.msra.mxu0 0.0
        %597 = vmatprep.subr.mxu0 0.0
        %598 = vmatpush2.msra.mxu0 0.0
        %599 = vmatprep.subr.mxu0 0.0
        %600 = vmatpush2.msra.mxu0 0.0
        %601 = vmatprep.subr.mxu0 0.0
        %602 = vmatpush2.msra.mxu0 0.0
        %603 = vmatprep.subr.mxu0 0.0
        %604 = vmatpush2.msra.mxu0 0.0
        %605 = vmatprep.subr.mxu0 0.0
        %606 = vmatpush2.msra.mxu0 0.0
        %607 = vmatprep.subr.mxu0 0.0
        %608 = vmatpush2.msra.mxu0 0.0
        %609 = vmatprep.subr.mxu0 0.0
        %610 = vmatpush2.msra.mxu0 0.0
        %611 = vmatprep.subr.mxu0 0.0
        %612 = vmatpush2.msra.mxu0 0.0
        %613 = vmatprep.mubr.f32.mxu0 0.0
        %v614 = vand.u32 %v369, 4294901760
        %v615 = vsub.f32 %v369, %v614
        %616 = vmatmul.mubr.f32.gmra.mxu0 %v615
        %v617 = vpop.f32.mrf.mxu0
        %v618 = vadd.f32 %v538, %v617
        %v619 = vpop.f32.mrf.mxu0
        %620 = vdwg.mxu0
        %621 = vmatprep.subr.mxu0 0.0
        %622 = vmatpush1.msra.mxu0 0.0
        %623 = vmatprep.subr.mxu0 0.0
        %624 = vmatpush1.msra.mxu0 0.0
        %625 = vmatprep.subr.mxu0 0.0
        %626 = vmatpush1.msra.mxu0 0.0
        %627 = vmatprep.subr.mxu0 0.0
        %628 = vmatpush1.msra.mxu0 0.0
        %629 = vmatprep.subr.mxu0 0.0
        %630 = vmatpush1.msra.mxu0 0.0
        %631 = vmatprep.subr.mxu0 0.0
        %632 = vmatpush1.msra.mxu0 0.0
        %633 = vmatprep.subr.mxu0 0.0
        %634 = vmatpush1.msra.mxu0 0.0
        %635 = vmatprep.subr.mxu0 0.0
        %636 = vmatpush1.msra.mxu0 0.0
        %637 = vmatprep.subr.mxu0 0.0
        %638 = vmatpush1.msra.mxu0 0.0
        %639 = vmatprep.subr.mxu0 0.0
        %640 = vmatpush1.msra.mxu0 0.0
        %641 = vmatprep.subr.mxu0 0.0
        %642 = vmatpush1.msra.mxu0 0.0
        %643 = vmatprep.subr.mxu0 0.0
        %644 = vmatpush1.msra.mxu0 0.0
        %645 = vmatprep.subr.mxu0 0.0
        %v646 = vand.u32 %v359, 4294901760
        %647 = vmatpush1.msra.mxu0 %v646
        %648 = vmatprep.subr.mxu0 0.0
        %v649 = vand.u32 %v358, 4294901760
        %650 = vmatpush1.msra.mxu0 %v649
        %651 = vmatprep.subr.mxu0 0.0
        %v652 = vand.u32 %v357, 4294901760
        %653 = vmatpush1.msra.mxu0 %v652
        %654 = vmatprep.subr.mxu0 0.0
        %v655 = vand.u32 %v356, 4294901760
        %656 = vmatpush1.msra.mxu0 %v655
        %657 = vmatprep.subr.mxu0 0.0
        %658 = vmatpush2.msra.mxu0 0.0
        %659 = vmatprep.subr.mxu0 0.0
        %660 = vmatpush2.msra.mxu0 0.0
        %661 = vmatprep.subr.mxu0 0.0
        %662 = vmatpush2.msra.mxu0 0.0
        %663 = vmatprep.subr.mxu0 0.0
        %664 = vmatpush2.msra.mxu0 0.0
        %665 = vmatprep.subr.mxu0 0.0
        %666 = vmatpush2.msra.mxu0 0.0
        %667 = vmatprep.subr.mxu0 0.0
        %668 = vmatpush2.msra.mxu0 0.0
        %669 = vmatprep.subr.mxu0 0.0
        %670 = vmatpush2.msra.mxu0 0.0
        %671 = vmatprep.subr.mxu0 0.0
        %672 = vmatpush2.msra.mxu0 0.0
        %673 = vmatprep.subr.mxu0 0.0
        %674 = vmatpush2.msra.mxu0 0.0
        %675 = vmatprep.subr.mxu0 0.0
        %676 = vmatpush2.msra.mxu0 0.0
        %677 = vmatprep.subr.mxu0 0.0
        %678 = vmatpush2.msra.mxu0 0.0
        %679 = vmatprep.subr.mxu0 0.0
        %680 = vmatpush2.msra.mxu0 0.0
        %681 = vmatprep.subr.mxu0 0.0
        %682 = vmatpush2.msra.mxu0 0.0
        %683 = vmatprep.subr.mxu0 0.0
        %684 = vmatpush2.msra.mxu0 0.0
        %685 = vmatprep.subr.mxu0 0.0
        %686 = vmatpush2.msra.mxu0 0.0
        %687 = vmatprep.subr.mxu0 0.0
        %688 = vmatpush2.msra.mxu0 0.0
        %689 = vmatprep.mubr.f32.mxu0 0.0
        %v690 = vand.u32 %v369, 4294901760
        %v691 = vsub.f32 %v369, %v690
        %v692 = vand.u32 %v691, 4294901760
        %693 = vmatmul.mubr.f32.gmra.mxu0 %v692
        %v694 = vpop.f32.mrf.mxu0
        %v695 = vadd.f32 %v618, %v694
        %v696 = vpop.f32.mrf.mxu0
        %697 = vdwg.mxu0
        %698 = vmatprep.subr.mxu0 0.0
        %699 = vmatpush1.msra.mxu0 0.0
        %700 = vmatprep.subr.mxu0 0.0
        %701 = vmatpush1.msra.mxu0 0.0
        %702 = vmatprep.subr.mxu0 0.0
        %703 = vmatpush1.msra.mxu0 0.0
        %704 = vmatprep.subr.mxu0 0.0
        %705 = vmatpush1.msra.mxu0 0.0
        %706 = vmatprep.subr.mxu0 0.0
        %707 = vmatpush1.msra.mxu0 0.0
        %708 = vmatprep.subr.mxu0 0.0
        %709 = vmatpush1.msra.mxu0 0.0
        %710 = vmatprep.subr.mxu0 0.0
        %711 = vmatpush1.msra.mxu0 0.0
        %712 = vmatprep.subr.mxu0 0.0
        %713 = vmatpush1.msra.mxu0 0.0
        %714 = vmatprep.subr.mxu0 0.0
        %715 = vmatpush1.msra.mxu0 0.0
        %716 = vmatprep.subr.mxu0 0.0
        %717 = vmatpush1.msra.mxu0 0.0
        %718 = vmatprep.subr.mxu0 0.0
        %719 = vmatpush1.msra.mxu0 0.0
        %720 = vmatprep.subr.mxu0 0.0
        %721 = vmatpush1.msra.mxu0 0.0
        %722 = vmatprep.subr.mxu0 0.0
        %v723 = vand.u32 %v359, 4294901760
        %v724 = vsub.f32 %v359, %v723
        %v725 = vand.u32 %v724, 4294901760
        %726 = vmatpush1.msra.mxu0 %v725
        %727 = vmatprep.subr.mxu0 0.0
        %v728 = vand.u32 %v358, 4294901760
        %v729 = vsub.f32 %v358, %v728
        %v730 = vand.u32 %v729, 4294901760
        %731 = vmatpush1.msra.mxu0 %v730
        %732 = vmatprep.subr.mxu0 0.0
        %v733 = vand.u32 %v357, 4294901760
        %v734 = vsub.f32 %v357, %v733
        %v735 = vand.u32 %v734, 4294901760
        %736 = vmatpush1.msra.mxu0 %v735
        %737 = vmatprep.subr.mxu0 0.0
        %v738 = vand.u32 %v356, 4294901760
        %v739 = vsub.f32 %v356, %v738
        %v740 = vand.u32 %v739, 4294901760
        %741 = vmatpush1.msra.mxu0 %v740
        %742 = vmatprep.subr.mxu0 0.0
        %743 = vmatpush2.msra.mxu0 0.0
        %744 = vmatprep.subr.mxu0 0.0
        %745 = vmatpush2.msra.mxu0 0.0
        %746 = vmatprep.subr.mxu0 0.0
        %747 = vmatpush2.msra.mxu0 0.0
        %748 = vmatprep.subr.mxu0 0.0
        %749 = vmatpush2.msra.mxu0 0.0
        %750 = vmatprep.subr.mxu0 0.0
        %751 = vmatpush2.msra.mxu0 0.0
        %752 = vmatprep.subr.mxu0 0.0
        %753 = vmatpush2.msra.mxu0 0.0
        %754 = vmatprep.subr.mxu0 0.0
        %755 = vmatpush2.msra.mxu0 0.0
        %756 = vmatprep.subr.mxu0 0.0
        %757 = vmatpush2.msra.mxu0 0.0
        %758 = vmatprep.subr.mxu0 0.0
        %759 = vmatpush2.msra.mxu0 0.0
        %760 = vmatprep.subr.mxu0 0.0
        %761 = vmatpush2.msra.mxu0 0.0
        %762 = vmatprep.subr.mxu0 0.0
        %763 = vmatpush2.msra.mxu0 0.0
        %764 = vmatprep.subr.mxu0 0.0
        %765 = vmatpush2.msra.mxu0 0.0
        %766 = vmatprep.subr.mxu0 0.0
        %767 = vmatpush2.msra.mxu0 0.0
        %768 = vmatprep.subr.mxu0 0.0
        %769 = vmatpush2.msra.mxu0 0.0
        %770 = vmatprep.subr.mxu0 0.0
        %771 = vmatpush2.msra.mxu0 0.0
        %772 = vmatprep.subr.mxu0 0.0
        %773 = vmatpush2.msra.mxu0 0.0
        %774 = vmatprep.mubr.f32.mxu0 0.0
        %v775 = vand.u32 %v369, 4294901760
        %776 = vmatmul.mubr.f32.gmra.mxu0 %v775
        %v777 = vpop.f32.mrf.mxu0
        %v778 = vadd.f32 %v695, %v777
        %v779 = vpop.f32.mrf.mxu0
        %780 = vdwg.mxu0
        %781 = vmatprep.subr.mxu0 0.0
        %782 = vmatpush1.msra.mxu0 0.0
        %783 = vmatprep.subr.mxu0 0.0
        %784 = vmatpush1.msra.mxu0 0.0
        %785 = vmatprep.subr.mxu0 0.0
        %786 = vmatpush1.msra.mxu0 0.0
        %787 = vmatprep.subr.mxu0 0.0
        %788 = vmatpush1.msra.mxu0 0.0
        %789 = vmatprep.subr.mxu0 0.0
        %790 = vmatpush1.msra.mxu0 0.0
        %791 = vmatprep.subr.mxu0 0.0
        %792 = vmatpush1.msra.mxu0 0.0
        %793 = vmatprep.subr.mxu0 0.0
        %794 = vmatpush1.msra.mxu0 0.0
        %795 = vmatprep.subr.mxu0 0.0
        %796 = vmatpush1.msra.mxu0 0.0
        %797 = vmatprep.subr.mxu0 0.0
        %798 = vmatpush1.msra.mxu0 0.0
        %799 = vmatprep.subr.mxu0 0.0
        %800 = vmatpush1.msra.mxu0 0.0
        %801 = vmatprep.subr.mxu0 0.0
        %802 = vmatpush1.msra.mxu0 0.0
        %803 = vmatprep.subr.mxu0 0.0
        %804 = vmatpush1.msra.mxu0 0.0
        %805 = vmatprep.subr.mxu0 0.0
        %v806 = vand.u32 %v359, 4294901760
        %807 = vmatpush1.msra.mxu0 %v806
        %808 = vmatprep.subr.mxu0 0.0
        %v809 = vand.u32 %v358, 4294901760
        %810 = vmatpush1.msra.mxu0 %v809
        %811 = vmatprep.subr.mxu0 0.0
        %v812 = vand.u32 %v357, 4294901760
        %813 = vmatpush1.msra.mxu0 %v812
        %814 = vmatprep.subr.mxu0 0.0
        %v815 = vand.u32 %v356, 4294901760
        %816 = vmatpush1.msra.mxu0 %v815
        %817 = vmatprep.subr.mxu0 0.0
        %818 = vmatpush2.msra.mxu0 0.0
        %819 = vmatprep.subr.mxu0 0.0
        %820 = vmatpush2.msra.mxu0 0.0
        %821 = vmatprep.subr.mxu0 0.0
        %822 = vmatpush2.msra.mxu0 0.0
        %823 = vmatprep.subr.mxu0 0.0
        %824 = vmatpush2.msra.mxu0 0.0
        %825 = vmatprep.subr.mxu0 0.0
        %826 = vmatpush2.msra.mxu0 0.0
        %827 = vmatprep.subr.mxu0 0.0
        %828 = vmatpush2.msra.mxu0 0.0
        %829 = vmatprep.subr.mxu0 0.0
        %830 = vmatpush2.msra.mxu0 0.0
        %831 = vmatprep.subr.mxu0 0.0
        %832 = vmatpush2.msra.mxu0 0.0
        %833 = vmatprep.subr.mxu0 0.0
        %834 = vmatpush2.msra.mxu0 0.0
        %835 = vmatprep.subr.mxu0 0.0
        %836 = vmatpush2.msra.mxu0 0.0
        %837 = vmatprep.subr.mxu0 0.0
        %838 = vmatpush2.msra.mxu0 0.0
        %839 = vmatprep.subr.mxu0 0.0
        %840 = vmatpush2.msra.mxu0 0.0
        %841 = vmatprep.subr.mxu0 0.0
        %842 = vmatpush2.msra.mxu0 0.0
        %843 = vmatprep.subr.mxu0 0.0
        %844 = vmatpush2.msra.mxu0 0.0
        %845 = vmatprep.subr.mxu0 0.0
        %846 = vmatpush2.msra.mxu0 0.0
        %847 = vmatprep.subr.mxu0 0.0
        %848 = vmatpush2.msra.mxu0 0.0
        %849 = vmatprep.mubr.f32.mxu0 0.0
        %v850 = vand.u32 %v369, 4294901760
        %851 = vmatmul.mubr.f32.gmra.mxu0 %v850
        %v852 = vpop.f32.mrf.mxu0
        %v853 = vadd.f32 %v778, %v852
        %v854 = vpop.f32.mrf.mxu0
        %855 = vdwg.mxu0
        %v856 = vxor.u32 %v853, 2147483648
        %v857 = vmul.f32 %v856, 1.442695
        %v858 = vpow.pop %v857
        %v859 = vadd.f32 %v858, 1.0
        %v860 = vrcp.pop %v859
        %v861 = vmul.f32 1.0, %v860
        %v862 = vmul.f32 %v853, %v861
        %v863 = vld [vmem:[%s5] sm:$0x1]
        %v864 = vlaneseq
        %v865 = vshrl.u32 %v864, 7
        %v866 = vsub.s32 0, %v865
        %v867 = vrot.slane %v863, %v866
        %869 = vrot.lane.b32.xlu0 %v867, 32
        %v870 = vpop.permute.xlu0 %869
        %v872 = vmul.f32 %v853, %v870
        %v873 = vld [vmem:[%s5 + $0x1] sm:$0x1]
        %v874 = vlaneseq
        %v875 = vshrl.u32 %v874, 7
        %v876 = vsub.s32 0, %v875
        %v877 = vrot.slane %v873, %v876
        %879 = vrot.lane.b32.xlu0 %v877, 32
        %v880 = vpop.permute.xlu0 %879
        %v882 = vadd.f32 %v872, %v880
        %v883 = vmax.f32 %v882, 0.0
        %v884 = vand.u32 2147483647, %v882
        %v885 = vsub.f32 0.0, %v884
        %v886 = vmul.f32 %v885, 1.442695
        %v887 = vpow.pop %v886
        %v888 = vadd.f32 %v887, 1.0
        %v889 = vlog2.pop %v888
        %v890 = vmul.f32 %v889, 0.6931472
        %v891 = vadd.f32 %v883, %v890
        %v892 = vmax.f32 %v891, 0.0001
        %v893 = vmin.f32 %v892, 1.0
        %v894 = vld [vmem:[%s6] sm:$0xff]
        %s895 = scalar_lea.vmem %s6, 8
        %v896 = vld [vmem:[%s895] sm:$0xff]
        %s897 = scalar_lea.vmem %s6, 16
        %v898 = vld [vmem:[%s897] sm:$0xff]
        %s899 = scalar_lea.vmem %s6, 24
        %v900 = vld [vmem:[%s899] sm:$0xff]
        %v902 = vcombine.high %v893, %v893
        %v904 = vunpack.c.l.s4 1966171168
        %v905 = vunpack.c.0.s8 %v904
        %v906 = vlaneseq
        %v907 = vshrl.u32 %v906, 7
        %v908 = vsub.s32 %v905, %v907
        %v909 = vrot.slane %v893, %v908
        %v911 = vunpack.c.l.s4 1966171168
        %v912 = vunpack.c.0.s8 %v911
        %v913 = vlaneseq
        %v914 = vshrl.u32 %v913, 7
        %v915 = vsub.s32 %v912, %v914
        %v916 = vrot.slane %v902, %v915
        %v917 = vcombine.high %v909, %v909
        %v918 = vcombine.high %v916, %v916
        %v920 = vunpack.c.l.s4 1966171168
        %v921 = vunpack.c.0.s8 %v920
        %v922 = vlaneseq
        %v923 = vshrl.u32 %v922, 7
        %v924 = vsub.s32 %v921, %v923
        %v925 = vrot.slane %v909, %v924
        %v927 = vunpack.c.l.s4 1966171168
        %v928 = vunpack.c.0.s8 %v927
        %v929 = vlaneseq
        %v930 = vshrl.u32 %v929, 7
        %v931 = vsub.s32 %v928, %v930
        %v932 = vrot.slane %v916, %v931
        %v934 = vunpack.c.l.s4 1966171168
        %v935 = vunpack.c.0.s8 %v934
        %v936 = vlaneseq
        %v937 = vshrl.u32 %v936, 7
        %v938 = vsub.s32 %v935, %v937
        %v939 = vrot.slane %v917, %v938
        %v941 = vunpack.c.l.s4 1966171168
        %v942 = vunpack.c.0.s8 %v941
        %v943 = vlaneseq
        %v944 = vshrl.u32 %v943, 7
        %v945 = vsub.s32 %v942, %v944
        %v946 = vrot.slane %v918, %v945
        %v947 = vcombine.high %v925, %v925
        %v948 = vcombine.high %v932, %v932
        %v949 = vcombine.high %v939, %v939
        %v950 = vcombine.high %v946, %v946
        %v951 = vlaneseq
        %v952 = vshrl.u32 %v951, 7
        %v953 = vsub.s32 0, %v952
        %v954 = vrot.slane %v925, %v953
        %v955 = vlaneseq
        %v956 = vshrl.u32 %v955, 7
        %v957 = vsub.s32 0, %v956
        %v958 = vrot.slane %v939, %v957
        %v959 = vlaneseq
        %v960 = vshrl.u32 %v959, 7
        %v961 = vsub.s32 0, %v960
        %v962 = vrot.slane %v947, %v961
        %v963 = vlaneseq
        %v964 = vshrl.u32 %v963, 7
        %v965 = vsub.s32 0, %v964
        %v966 = vrot.slane %v949, %v965
        %v967 = vlaneseq
        %v968 = vshrl.u32 %v967, 7
        %v969 = vsub.s32 0, %v968
        %v970 = vrot.slane %v932, %v969
        %v971 = vlaneseq
        %v972 = vshrl.u32 %v971, 7
        %v973 = vsub.s32 0, %v972
        %v974 = vrot.slane %v946, %v973
        %v975 = vlaneseq
        %v976 = vshrl.u32 %v975, 7
        %v977 = vsub.s32 0, %v976
        %v978 = vrot.slane %v948, %v977
        %v979 = vlaneseq
        %v980 = vshrl.u32 %v979, 7
        %v981 = vsub.s32 0, %v980
        %v982 = vrot.slane %v950, %v981
        %992 = vrot.lane.b32.xlu0 %v894, 32
        %v993 = vpop.permute.xlu0 %992
        %v995 = vmul.f32 %v954, %v993
        %v996 = vmul.f32 %v958, %v993
        %v997 = vmul.f32 %v962, %v993
        %v998 = vmul.f32 %v966, %v993
        %v999 = vmul.f32 %v970, %v993
        %v1000 = vmul.f32 %v974, %v993
        %v1001 = vmul.f32 %v978, %v993
        %v1002 = vmul.f32 %v982, %v993
        %1004 = vrot.lane.b32.xlu0 %v896, 32
        %v1005 = vpop.permute.xlu0 %1004
        %v1007 = vmul.f32 %v954, %v1005
        %v1008 = vmul.f32 %v958, %v1005
        %v1009 = vmul.f32 %v962, %v1005
        %v1010 = vmul.f32 %v966, %v1005
        %v1011 = vmul.f32 %v970, %v1005
        %v1012 = vmul.f32 %v974, %v1005
        %v1013 = vmul.f32 %v978, %v1005
        %v1014 = vmul.f32 %v982, %v1005
        %v1015 = vmul.f32 %v995, 1.442695
        %v1016 = vpow.pop %v1015
        %v1017 = vmul.f32 %v996, 1.442695
        %v1018 = vpow.pop %v1017
        %v1019 = vmul.f32 %v997, 1.442695
        %v1020 = vpow.pop %v1019
        %v1021 = vmul.f32 %v998, 1.442695
        %v1022 = vpow.pop %v1021
        %v1023 = vmul.f32 %v999, 1.442695
        %v1024 = vpow.pop %v1023
        %v1025 = vmul.f32 %v1000, 1.442695
        %v1026 = vpow.pop %v1025
        %v1027 = vmul.f32 %v1001, 1.442695
        %v1028 = vpow.pop %v1027
        %v1029 = vmul.f32 %v1002, 1.442695
        %v1030 = vpow.pop %v1029
        %v1031 = vand.u32 2147483647, %v1007
        %vm1032 = vcmp.le.f32.partialorder %v1031, 0.7853982
        %vm1033 = vcmp.lt.s32.totalorder %v1007, 0
        %v1034 = vand.u32 %v1007, 2139095040
        %v1035 = vshrl.u32 %v1034, 23
        %v1036 = vsub.s32 %v1035, 127
        %v1037 = vand.u32 2147483647, %v1007
        %v1038 = vand.u32 %v1037, 8388607
        %v1039 = vor.u32 %v1038, 8388608
        %v1040 = vsub.s32 0, %v1039
        %v1041 = vadd.s32 %v1036, 1
        %vm1042 = vcmp.gt.s32.totalorder %v1041, 0
        %v1043 = vsel %vm1042, %v1041, 0
        %v1044 = vshrl.u32 %v1043, 5
        %v1045 = vand.u32 %v1043, 31
        %v1046 = vsub.s32 32, %v1045
        %v1047 = vshrl.u32 683565275, %v1046
        %v1048 = vshll.u32 683565275, %v1045
        %v1049 = vshrl.u32 2475754826, %v1046
        %v1050 = vor.u32 %v1048, %v1049
        %v1051 = vshll.u32 2475754826, %v1045
        %v1052 = vshrl.u32 2131351028, %v1046
        %v1053 = vor.u32 %v1051, %v1052
        %v1054 = vshll.u32 2131351028, %v1045
        %v1055 = vshrl.u32 2102212464, %v1046
        %v1056 = vor.u32 %v1054, %v1055
        %v1057 = vshll.u32 2102212464, %v1045
        %v1058 = vshrl.u32 920167782, %v1046
        %v1059 = vor.u32 %v1057, %v1058
        %v1060 = vshll.u32 920167782, %v1045
        %v1061 = vshrl.u32 1326507024, %v1046
        %v1062 = vor.u32 %v1060, %v1061
        %vm1063 = vcmp.lt.s32.totalorder %v1044, 1
        %vm1064 = vcmp.lt.s32.totalorder %v1044, 2
        %vm1065 = vcmp.lt.s32.totalorder %v1044, 3
        %vm1066 = vcmp.lt.s32.totalorder %v1044, 4
        %v1067 = vsel %vm1063, %v1047, %v1050
        %v1068 = vsel %vm1066, %v1056, 2102212464
        %v1069 = vsel %vm1065, %v1053, %v1068
        %v1070 = vsel %vm1064, %v1067, %v1069
        %v1071 = vsel %vm1063, %v1050, %v1053
        %v1072 = vsel %vm1066, %v1059, 920167782
        %v1073 = vsel %vm1065, %v1056, %v1072
        %v1074 = vsel %vm1064, %v1071, %v1073
        %v1075 = vsel %vm1063, %v1053, %v1056
        %v1076 = vsel %vm1066, %v1062, 1326507024
        %v1077 = vsel %vm1065, %v1059, %v1076
        %v1078 = vsel %vm1064, %v1075, %v1077
        %v1079 = vshll.u32 %v1039, 8
        %v1080 = vmul.u32.u64.compose %v1079, %v1078
        %v1081 = vextract.low.u32 %v1080
        %v1082 = vextract.high.u32 %v1080
        %v1083 = vmul.u32.u64.compose %v1079, %v1074
        %v1084 = vextract.low.u32 %v1083
        %v1085 = vextract.high.u32 %v1083
        %v1086 = vmul.u32 %v1079, %v1070
        %v1087 = vadd.s32 %v1082, %v1084
        %vm1088 = vc.u32 %v1082, %v1084
        %v1089 = vadd.s32 %v1085, 1
        %v1090 = vsel %vm1088, %v1089, %v1085
        %v1091 = vadd.s32 %v1086, %v1090
        %v1092 = vadd.s32 %v1091, 536870912
        %v1093 = vshrl.u32 %v1092, 30
        %v1094 = vshll.u32 %v1093, 30
        %v1095 = vsub.s32 %v1091, %v1094
        %vm1096 = vcmp.lt.s32.totalorder %v1095, 0
        %v1097 = vsub.s32 0, %v1095
        %v1098 = vsel %vm1096, %v1097, %v1095
        %v1099 = vclz %v1098
        %v1100 = vsub.s32 %v1099, 2
        %vm1101 = vcmp.gt.s32.totalorder 0, %v1100
        %v1102 = vsel %vm1101, 0, %v1100
        %v1103 = vsub.s32 32, %v1102
        %v1104 = vshll.u32 %v1095, %v1102
        %v1105 = vshrl.u32 %v1087, %v1103
        %v1106 = vor.u32 %v1104, %v1105
        %v1107 = vsub.s32 4294967266, %v1102
        %v1108 = vadd.s32 %v1107, 127
        %v1109 = vshll.u32 %v1108, 23
        %v1110 = vor.u32 4788187, %v1109
        %v1111 = vand.u32 2147483647, %v1110
        %v1113 = vcvt.s32.f32 %v1106
        %v1114 = vmul.f32 %v1113, %v1111
        %v1115 = vxor.u32 %v1114, 2147483648
        %v1116 = vsel %vm1033, %v1115, %v1114
        %v1117 = vsub.s32 4, %v1093
        %v1118 = vsel %vm1033, %v1117, %v1093
        %v1119 = vsel %vm1032, %v1007, %v1116
        %v1120 = vsel %vm1032, 0, %v1118
        %v1121 = vcosq.f32.pop %v1119
        %v1122 = vsinq.f32.pop %v1119
        %vm1123 = vweird.f32 %v1007
        %v1124 = vand.u32 %v1120, 3
        %vm1125 = vcmp.lt.s32.totalorder %v1124, 2
        %vm1126 = vcmp.eq.s32.totalorder %v1124, 0
        %v1127 = vxor.u32 %v1122, 2147483648
        %v1128 = vsel %vm1126, %v1121, %v1127
        %vm1129 = vcmp.eq.s32.totalorder %v1124, 2
        %v1130 = vxor.u32 %v1121, 2147483648
        %v1131 = vsel %vm1129, %v1130, %v1122
        %v1132 = vsel %vm1125, %v1128, %v1131
        %v1133 = vsel %vm1123, nan, %v1132
        %v1134 = vand.u32 2147483647, %v1008
        %vm1135 = vcmp.le.f32.partialorder %v1134, 0.7853982
        %vm1136 = vcmp.lt.s32.totalorder %v1008, 0
        %v1137 = vand.u32 %v1008, 2139095040
        %v1138 = vshrl.u32 %v1137, 23
        %v1139 = vsub.s32 %v1138, 127
        %v1140 = vand.u32 2147483647, %v1008
        %v1141 = vand.u32 %v1140, 8388607
        %v1142 = vor.u32 %v1141, 8388608
        %v1143 = vsub.s32 0, %v1142
        %v1144 = vadd.s32 %v1139, 1
        %vm1145 = vcmp.gt.s32.totalorder %v1144, 0
        %v1146 = vsel %vm1145, %v1144, 0
        %v1147 = vshrl.u32 %v1146, 5
        %v1148 = vand.u32 %v1146, 31
        %v1149 = vsub.s32 32, %v1148
        %v1150 = vshrl.u32 683565275, %v1149
        %v1151 = vshll.u32 683565275, %v1148
        %v1152 = vshrl.u32 2475754826, %v1149
        %v1153 = vor.u32 %v1151, %v1152
        %v1154 = vshll.u32 2475754826, %v1148
        %v1155 = vshrl.u32 2131351028, %v1149
        %v1156 = vor.u32 %v1154, %v1155
        %v1157 = vshll.u32 2131351028, %v1148
        %v1158 = vshrl.u32 2102212464, %v1149
        %v1159 = vor.u32 %v1157, %v1158
        %v1160 = vshll.u32 2102212464, %v1148
        %v1161 = vshrl.u32 920167782, %v1149
        %v1162 = vor.u32 %v1160, %v1161
        %v1163 = vshll.u32 920167782, %v1148
        %v1164 = vshrl.u32 1326507024, %v1149
        %v1165 = vor.u32 %v1163, %v1164
        %vm1166 = vcmp.lt.s32.totalorder %v1147, 1
        %vm1167 = vcmp.lt.s32.totalorder %v1147, 2
        %vm1168 = vcmp.lt.s32.totalorder %v1147, 3
        %vm1169 = vcmp.lt.s32.totalorder %v1147, 4
        %v1170 = vsel %vm1166, %v1150, %v1153
        %v1171 = vsel %vm1169, %v1159, 2102212464
        %v1172 = vsel %vm1168, %v1156, %v1171
        %v1173 = vsel %vm1167, %v1170, %v1172
        %v1174 = vsel %vm1166, %v1153, %v1156
        %v1175 = vsel %vm1169, %v1162, 920167782
        %v1176 = vsel %vm1168, %v1159, %v1175
        %v1177 = vsel %vm1167, %v1174, %v1176
        %v1178 = vsel %vm1166, %v1156, %v1159
        %v1179 = vsel %vm1169, %v1165, 1326507024
        %v1180 = vsel %vm1168, %v1162, %v1179
        %v1181 = vsel %vm1167, %v1178, %v1180
        %v1182 = vshll.u32 %v1142, 8
        %v1183 = vmul.u32.u64.compose %v1182, %v1181
        %v1184 = vextract.low.u32 %v1183
        %v1185 = vextract.high.u32 %v1183
        %v1186 = vmul.u32.u64.compose %v1182, %v1177
        %v1187 = vextract.low.u32 %v1186
        %v1188 = vextract.high.u32 %v1186
        %v1189 = vmul.u32 %v1182, %v1173
        %v1190 = vadd.s32 %v1185, %v1187
        %vm1191 = vc.u32 %v1185, %v1187
        %v1192 = vadd.s32 %v1188, 1
        %v1193 = vsel %vm1191, %v1192, %v1188
        %v1194 = vadd.s32 %v1189, %v1193
        %v1195 = vadd.s32 %v1194, 536870912
        %v1196 = vshrl.u32 %v1195, 30
        %v1197 = vshll.u32 %v1196, 30
        %v1198 = vsub.s32 %v1194, %v1197
        %vm1199 = vcmp.lt.s32.totalorder %v1198, 0
        %v1200 = vsub.s32 0, %v1198
        %v1201 = vsel %vm1199, %v1200, %v1198
        %v1202 = vclz %v1201
        %v1203 = vsub.s32 %v1202, 2
        %vm1204 = vcmp.gt.s32.totalorder 0, %v1203
        %v1205 = vsel %vm1204, 0, %v1203
        %v1206 = vsub.s32 32, %v1205
        %v1207 = vshll.u32 %v1198, %v1205
        %v1208 = vshrl.u32 %v1190, %v1206
        %v1209 = vor.u32 %v1207, %v1208
        %v1210 = vsub.s32 4294967266, %v1205
        %v1211 = vadd.s32 %v1210, 127
        %v1212 = vshll.u32 %v1211, 23
        %v1213 = vor.u32 4788187, %v1212
        %v1214 = vand.u32 2147483647, %v1213
        %v1216 = vcvt.s32.f32 %v1209
        %v1217 = vmul.f32 %v1216, %v1214
        %v1218 = vxor.u32 %v1217, 2147483648
        %v1219 = vsel %vm1136, %v1218, %v1217
        %v1220 = vsub.s32 4, %v1196
        %v1221 = vsel %vm1136, %v1220, %v1196
        %v1222 = vsel %vm1135, %v1008, %v1219
        %v1223 = vsel %vm1135, 0, %v1221
        %v1224 = vcosq.f32.pop %v1222
        %v1225 = vsinq.f32.pop %v1222
        %vm1226 = vweird.f32 %v1008
        %v1227 = vand.u32 %v1223, 3
        %vm1228 = vcmp.lt.s32.totalorder %v1227, 2
        %vm1229 = vcmp.eq.s32.totalorder %v1227, 0
        %v1230 = vxor.u32 %v1225, 2147483648
        %v1231 = vsel %vm1229, %v1224, %v1230
        %vm1232 = vcmp.eq.s32.totalorder %v1227, 2
        %v1233 = vxor.u32 %v1224, 2147483648
        %v1234 = vsel %vm1232, %v1233, %v1225
        %v1235 = vsel %vm1228, %v1231, %v1234
        %v1236 = vsel %vm1226, nan, %v1235
        %v1237 = vand.u32 2147483647, %v1009
        %vm1238 = vcmp.le.f32.partialorder %v1237, 0.7853982
        %vm1239 = vcmp.lt.s32.totalorder %v1009, 0
        %v1240 = vand.u32 %v1009, 2139095040
        %v1241 = vshrl.u32 %v1240, 23
        %v1242 = vsub.s32 %v1241, 127
        %v1243 = vand.u32 2147483647, %v1009
        %v1244 = vand.u32 %v1243, 8388607
        %v1245 = vor.u32 %v1244, 8388608
        %v1246 = vsub.s32 0, %v1245
        %v1247 = vadd.s32 %v1242, 1
        %vm1248 = vcmp.gt.s32.totalorder %v1247, 0
        %v1249 = vsel %vm1248, %v1247, 0
        %v1250 = vshrl.u32 %v1249, 5
        %v1251 = vand.u32 %v1249, 31
        %v1252 = vsub.s32 32, %v1251
        %v1253 = vshrl.u32 683565275, %v1252
        %v1254 = vshll.u32 683565275, %v1251
        %v1255 = vshrl.u32 2475754826, %v1252
        %v1256 = vor.u32 %v1254, %v1255
        %v1257 = vshll.u32 2475754826, %v1251
        %v1258 = vshrl.u32 2131351028, %v1252
        %v1259 = vor.u32 %v1257, %v1258
        %v1260 = vshll.u32 2131351028, %v1251
        %v1261 = vshrl.u32 2102212464, %v1252
        %v1262 = vor.u32 %v1260, %v1261
        %v1263 = vshll.u32 2102212464, %v1251
        %v1264 = vshrl.u32 920167782, %v1252
        %v1265 = vor.u32 %v1263, %v1264
        %v1266 = vshll.u32 920167782, %v1251
        %v1267 = vshrl.u32 1326507024, %v1252
        %v1268 = vor.u32 %v1266, %v1267
        %vm1269 = vcmp.lt.s32.totalorder %v1250, 1
        %vm1270 = vcmp.lt.s32.totalorder %v1250, 2
        %vm1271 = vcmp.lt.s32.totalorder %v1250, 3
        %vm1272 = vcmp.lt.s32.totalorder %v1250, 4
        %v1273 = vsel %vm1269, %v1253, %v1256
        %v1274 = vsel %vm1272, %v1262, 2102212464
        %v1275 = vsel %vm1271, %v1259, %v1274
        %v1276 = vsel %vm1270, %v1273, %v1275
        %v1277 = vsel %vm1269, %v1256, %v1259
        %v1278 = vsel %vm1272, %v1265, 920167782
        %v1279 = vsel %vm1271, %v1262, %v1278
        %v1280 = vsel %vm1270, %v1277, %v1279
        %v1281 = vsel %vm1269, %v1259, %v1262
        %v1282 = vsel %vm1272, %v1268, 1326507024
        %v1283 = vsel %vm1271, %v1265, %v1282
        %v1284 = vsel %vm1270, %v1281, %v1283
        %v1285 = vshll.u32 %v1245, 8
        %v1286 = vmul.u32.u64.compose %v1285, %v1284
        %v1287 = vextract.low.u32 %v1286
        %v1288 = vextract.high.u32 %v1286
        %v1289 = vmul.u32.u64.compose %v1285, %v1280
        %v1290 = vextract.low.u32 %v1289
        %v1291 = vextract.high.u32 %v1289
        %v1292 = vmul.u32 %v1285, %v1276
        %v1293 = vadd.s32 %v1288, %v1290
        %vm1294 = vc.u32 %v1288, %v1290
        %v1295 = vadd.s32 %v1291, 1
        %v1296 = vsel %vm1294, %v1295, %v1291
        %v1297 = vadd.s32 %v1292, %v1296
        %v1298 = vadd.s32 %v1297, 536870912
        %v1299 = vshrl.u32 %v1298, 30
        %v1300 = vshll.u32 %v1299, 30
        %v1301 = vsub.s32 %v1297, %v1300
        %vm1302 = vcmp.lt.s32.totalorder %v1301, 0
        %v1303 = vsub.s32 0, %v1301
        %v1304 = vsel %vm1302, %v1303, %v1301
        %v1305 = vclz %v1304
        %v1306 = vsub.s32 %v1305, 2
        %vm1307 = vcmp.gt.s32.totalorder 0, %v1306
        %v1308 = vsel %vm1307, 0, %v1306
        %v1309 = vsub.s32 32, %v1308
        %v1310 = vshll.u32 %v1301, %v1308
        %v1311 = vshrl.u32 %v1293, %v1309
        %v1312 = vor.u32 %v1310, %v1311
        %v1313 = vsub.s32 4294967266, %v1308
        %v1314 = vadd.s32 %v1313, 127
        %v1315 = vshll.u32 %v1314, 23
        %v1316 = vor.u32 4788187, %v1315
        %v1317 = vand.u32 2147483647, %v1316
        %v1319 = vcvt.s32.f32 %v1312
        %v1320 = vmul.f32 %v1319, %v1317
        %v1321 = vxor.u32 %v1320, 2147483648
        %v1322 = vsel %vm1239, %v1321, %v1320
        %v1323 = vsub.s32 4, %v1299
        %v1324 = vsel %vm1239, %v1323, %v1299
        %v1325 = vsel %vm1238, %v1009, %v1322
        %v1326 = vsel %vm1238, 0, %v1324
        %v1327 = vcosq.f32.pop %v1325
        %v1328 = vsinq.f32.pop %v1325
        %vm1329 = vweird.f32 %v1009
        %v1330 = vand.u32 %v1326, 3
        %vm1331 = vcmp.lt.s32.totalorder %v1330, 2
        %vm1332 = vcmp.eq.s32.totalorder %v1330, 0
        %v1333 = vxor.u32 %v1328, 2147483648
        %v1334 = vsel %vm1332, %v1327, %v1333
        %vm1335 = vcmp.eq.s32.totalorder %v1330, 2
        %v1336 = vxor.u32 %v1327, 2147483648
        %v1337 = vsel %vm1335, %v1336, %v1328
        %v1338 = vsel %vm1331, %v1334, %v1337
        %v1339 = vsel %vm1329, nan, %v1338
        %v1340 = vand.u32 2147483647, %v1010
        %vm1341 = vcmp.le.f32.partialorder %v1340, 0.7853982
        %vm1342 = vcmp.lt.s32.totalorder %v1010, 0
        %v1343 = vand.u32 %v1010, 2139095040
        %v1344 = vshrl.u32 %v1343, 23
        %v1345 = vsub.s32 %v1344, 127
        %v1346 = vand.u32 2147483647, %v1010
        %v1347 = vand.u32 %v1346, 8388607
        %v1348 = vor.u32 %v1347, 8388608
        %v1349 = vsub.s32 0, %v1348
        %v1350 = vadd.s32 %v1345, 1
        %vm1351 = vcmp.gt.s32.totalorder %v1350, 0
        %v1352 = vsel %vm1351, %v1350, 0
        %v1353 = vshrl.u32 %v1352, 5
        %v1354 = vand.u32 %v1352, 31
        %v1355 = vsub.s32 32, %v1354
        %v1356 = vshrl.u32 683565275, %v1355
        %v1357 = vshll.u32 683565275, %v1354
        %v1358 = vshrl.u32 2475754826, %v1355
        %v1359 = vor.u32 %v1357, %v1358
        %v1360 = vshll.u32 2475754826, %v1354
        %v1361 = vshrl.u32 2131351028, %v1355
        %v1362 = vor.u32 %v1360, %v1361
        %v1363 = vshll.u32 2131351028, %v1354
        %v1364 = vshrl.u32 2102212464, %v1355
        %v1365 = vor.u32 %v1363, %v1364
        %v1366 = vshll.u32 2102212464, %v1354
        %v1367 = vshrl.u32 920167782, %v1355
        %v1368 = vor.u32 %v1366, %v1367
        %v1369 = vshll.u32 920167782, %v1354
        %v1370 = vshrl.u32 1326507024, %v1355
        %v1371 = vor.u32 %v1369, %v1370
        %vm1372 = vcmp.lt.s32.totalorder %v1353, 1
        %vm1373 = vcmp.lt.s32.totalorder %v1353, 2
        %vm1374 = vcmp.lt.s32.totalorder %v1353, 3
        %vm1375 = vcmp.lt.s32.totalorder %v1353, 4
        %v1376 = vsel %vm1372, %v1356, %v1359
        %v1377 = vsel %vm1375, %v1365, 2102212464
        %v1378 = vsel %vm1374, %v1362, %v1377
        %v1379 = vsel %vm1373, %v1376, %v1378
        %v1380 = vsel %vm1372, %v1359, %v1362
        %v1381 = vsel %vm1375, %v1368, 920167782
        %v1382 = vsel %vm1374, %v1365, %v1381
        %v1383 = vsel %vm1373, %v1380, %v1382
        %v1384 = vsel %vm1372, %v1362, %v1365
        %v1385 = vsel %vm1375, %v1371, 1326507024
        %v1386 = vsel %vm1374, %v1368, %v1385
        %v1387 = vsel %vm1373, %v1384, %v1386
        %v1388 = vshll.u32 %v1348, 8
        %v1389 = vmul.u32.u64.compose %v1388, %v1387
        %v1390 = vextract.low.u32 %v1389
        %v1391 = vextract.high.u32 %v1389
        %v1392 = vmul.u32.u64.compose %v1388, %v1383
        %v1393 = vextract.low.u32 %v1392
        %v1394 = vextract.high.u32 %v1392
        %v1395 = vmul.u32 %v1388, %v1379
        %v1396 = vadd.s32 %v1391, %v1393
        %vm1397 = vc.u32 %v1391, %v1393
        %v1398 = vadd.s32 %v1394, 1
        %v1399 = vsel %vm1397, %v1398, %v1394
        %v1400 = vadd.s32 %v1395, %v1399
        %v1401 = vadd.s32 %v1400, 536870912
        %v1402 = vshrl.u32 %v1401, 30
        %v1403 = vshll.u32 %v1402, 30
        %v1404 = vsub.s32 %v1400, %v1403
        %vm1405 = vcmp.lt.s32.totalorder %v1404, 0
        %v1406 = vsub.s32 0, %v1404
        %v1407 = vsel %vm1405, %v1406, %v1404
        %v1408 = vclz %v1407
        %v1409 = vsub.s32 %v1408, 2
        %vm1410 = vcmp.gt.s32.totalorder 0, %v1409
        %v1411 = vsel %vm1410, 0, %v1409
        %v1412 = vsub.s32 32, %v1411
        %v1413 = vshll.u32 %v1404, %v1411
        %v1414 = vshrl.u32 %v1396, %v1412
        %v1415 = vor.u32 %v1413, %v1414
        %v1416 = vsub.s32 4294967266, %v1411
        %v1417 = vadd.s32 %v1416, 127
        %v1418 = vshll.u32 %v1417, 23
        %v1419 = vor.u32 4788187, %v1418
        %v1420 = vand.u32 2147483647, %v1419
        %v1422 = vcvt.s32.f32 %v1415
        %v1423 = vmul.f32 %v1422, %v1420
        %v1424 = vxor.u32 %v1423, 2147483648
        %v1425 = vsel %vm1342, %v1424, %v1423
        %v1426 = vsub.s32 4, %v1402
        %v1427 = vsel %vm1342, %v1426, %v1402
        %v1428 = vsel %vm1341, %v1010, %v1425
        %v1429 = vsel %vm1341, 0, %v1427
        %v1430 = vcosq.f32.pop %v1428
        %v1431 = vsinq.f32.pop %v1428
        %vm1432 = vweird.f32 %v1010
        %v1433 = vand.u32 %v1429, 3
        %vm1434 = vcmp.lt.s32.totalorder %v1433, 2
        %vm1435 = vcmp.eq.s32.totalorder %v1433, 0
        %v1436 = vxor.u32 %v1431, 2147483648
        %v1437 = vsel %vm1435, %v1430, %v1436
        %vm1438 = vcmp.eq.s32.totalorder %v1433, 2
        %v1439 = vxor.u32 %v1430, 2147483648
        %v1440 = vsel %vm1438, %v1439, %v1431
        %v1441 = vsel %vm1434, %v1437, %v1440
        %v1442 = vsel %vm1432, nan, %v1441
        %v1443 = vand.u32 2147483647, %v1011
        %vm1444 = vcmp.le.f32.partialorder %v1443, 0.7853982
        %vm1445 = vcmp.lt.s32.totalorder %v1011, 0
        %v1446 = vand.u32 %v1011, 2139095040
        %v1447 = vshrl.u32 %v1446, 23
        %v1448 = vsub.s32 %v1447, 127
        %v1449 = vand.u32 2147483647, %v1011
        %v1450 = vand.u32 %v1449, 8388607
        %v1451 = vor.u32 %v1450, 8388608
        %v1452 = vsub.s32 0, %v1451
        %v1453 = vadd.s32 %v1448, 1
        %vm1454 = vcmp.gt.s32.totalorder %v1453, 0
        %v1455 = vsel %vm1454, %v1453, 0
        %v1456 = vshrl.u32 %v1455, 5
        %v1457 = vand.u32 %v1455, 31
        %v1458 = vsub.s32 32, %v1457
        %v1459 = vshrl.u32 683565275, %v1458
        %v1460 = vshll.u32 683565275, %v1457
        %v1461 = vshrl.u32 2475754826, %v1458
        %v1462 = vor.u32 %v1460, %v1461
        %v1463 = vshll.u32 2475754826, %v1457
        %v1464 = vshrl.u32 2131351028, %v1458
        %v1465 = vor.u32 %v1463, %v1464
        %v1466 = vshll.u32 2131351028, %v1457
        %v1467 = vshrl.u32 2102212464, %v1458
        %v1468 = vor.u32 %v1466, %v1467
        %v1469 = vshll.u32 2102212464, %v1457
        %v1470 = vshrl.u32 920167782, %v1458
        %v1471 = vor.u32 %v1469, %v1470
        %v1472 = vshll.u32 920167782, %v1457
        %v1473 = vshrl.u32 1326507024, %v1458
        %v1474 = vor.u32 %v1472, %v1473
        %vm1475 = vcmp.lt.s32.totalorder %v1456, 1
        %vm1476 = vcmp.lt.s32.totalorder %v1456, 2
        %vm1477 = vcmp.lt.s32.totalorder %v1456, 3
        %vm1478 = vcmp.lt.s32.totalorder %v1456, 4
        %v1479 = vsel %vm1475, %v1459, %v1462
        %v1480 = vsel %vm1478, %v1468, 2102212464
        %v1481 = vsel %vm1477, %v1465, %v1480
        %v1482 = vsel %vm1476, %v1479, %v1481
        %v1483 = vsel %vm1475, %v1462, %v1465
        %v1484 = vsel %vm1478, %v1471, 920167782
        %v1485 = vsel %vm1477, %v1468, %v1484
        %v1486 = vsel %vm1476, %v1483, %v1485
        %v1487 = vsel %vm1475, %v1465, %v1468
        %v1488 = vsel %vm1478, %v1474, 1326507024
        %v1489 = vsel %vm1477, %v1471, %v1488
        %v1490 = vsel %vm1476, %v1487, %v1489
        %v1491 = vshll.u32 %v1451, 8
        %v1492 = vmul.u32.u64.compose %v1491, %v1490
        %v1493 = vextract.low.u32 %v1492
        %v1494 = vextract.high.u32 %v1492
        %v1495 = vmul.u32.u64.compose %v1491, %v1486
        %v1496 = vextract.low.u32 %v1495
        %v1497 = vextract.high.u32 %v1495
        %v1498 = vmul.u32 %v1491, %v1482
        %v1499 = vadd.s32 %v1494, %v1496
        %vm1500 = vc.u32 %v1494, %v1496
        %v1501 = vadd.s32 %v1497, 1
        %v1502 = vsel %vm1500, %v1501, %v1497
        %v1503 = vadd.s32 %v1498, %v1502
        %v1504 = vadd.s32 %v1503, 536870912
        %v1505 = vshrl.u32 %v1504, 30
        %v1506 = vshll.u32 %v1505, 30
        %v1507 = vsub.s32 %v1503, %v1506
        %vm1508 = vcmp.lt.s32.totalorder %v1507, 0
        %v1509 = vsub.s32 0, %v1507
        %v1510 = vsel %vm1508, %v1509, %v1507
        %v1511 = vclz %v1510
        %v1512 = vsub.s32 %v1511, 2
        %vm1513 = vcmp.gt.s32.totalorder 0, %v1512
        %v1514 = vsel %vm1513, 0, %v1512
        %v1515 = vsub.s32 32, %v1514
        %v1516 = vshll.u32 %v1507, %v1514
        %v1517 = vshrl.u32 %v1499, %v1515
        %v1518 = vor.u32 %v1516, %v1517
        %v1519 = vsub.s32 4294967266, %v1514
        %v1520 = vadd.s32 %v1519, 127
        %v1521 = vshll.u32 %v1520, 23
        %v1522 = vor.u32 4788187, %v1521
        %v1523 = vand.u32 2147483647, %v1522
        %v1525 = vcvt.s32.f32 %v1518
        %v1526 = vmul.f32 %v1525, %v1523
        %v1527 = vxor.u32 %v1526, 2147483648
        %v1528 = vsel %vm1445, %v1527, %v1526
        %v1529 = vsub.s32 4, %v1505
        %v1530 = vsel %vm1445, %v1529, %v1505
        %v1531 = vsel %vm1444, %v1011, %v1528
        %v1532 = vsel %vm1444, 0, %v1530
        %v1533 = vcosq.f32.pop %v1531
        %v1534 = vsinq.f32.pop %v1531
        %vm1535 = vweird.f32 %v1011
        %v1536 = vand.u32 %v1532, 3
        %vm1537 = vcmp.lt.s32.totalorder %v1536, 2
        %vm1538 = vcmp.eq.s32.totalorder %v1536, 0
        %v1539 = vxor.u32 %v1534, 2147483648
        %v1540 = vsel %vm1538, %v1533, %v1539
        %vm1541 = vcmp.eq.s32.totalorder %v1536, 2
        %v1542 = vxor.u32 %v1533, 2147483648
        %v1543 = vsel %vm1541, %v1542, %v1534
        %v1544 = vsel %vm1537, %v1540, %v1543
        %v1545 = vsel %vm1535, nan, %v1544
        %v1546 = vand.u32 2147483647, %v1012
        %vm1547 = vcmp.le.f32.partialorder %v1546, 0.7853982
        %vm1548 = vcmp.lt.s32.totalorder %v1012, 0
        %v1549 = vand.u32 %v1012, 2139095040
        %v1550 = vshrl.u32 %v1549, 23
        %v1551 = vsub.s32 %v1550, 127
        %v1552 = vand.u32 2147483647, %v1012
        %v1553 = vand.u32 %v1552, 8388607
        %v1554 = vor.u32 %v1553, 8388608
        %v1555 = vsub.s32 0, %v1554
        %v1556 = vadd.s32 %v1551, 1
        %vm1557 = vcmp.gt.s32.totalorder %v1556, 0
        %v1558 = vsel %vm1557, %v1556, 0
        %v1559 = vshrl.u32 %v1558, 5
        %v1560 = vand.u32 %v1558, 31
        %v1561 = vsub.s32 32, %v1560
        %v1562 = vshrl.u32 683565275, %v1561
        %v1563 = vshll.u32 683565275, %v1560
        %v1564 = vshrl.u32 2475754826, %v1561
        %v1565 = vor.u32 %v1563, %v1564
        %v1566 = vshll.u32 2475754826, %v1560
        %v1567 = vshrl.u32 2131351028, %v1561
        %v1568 = vor.u32 %v1566, %v1567
        %v1569 = vshll.u32 2131351028, %v1560
        %v1570 = vshrl.u32 2102212464, %v1561
        %v1571 = vor.u32 %v1569, %v1570
        %v1572 = vshll.u32 2102212464, %v1560
        %v1573 = vshrl.u32 920167782, %v1561
        %v1574 = vor.u32 %v1572, %v1573
        %v1575 = vshll.u32 920167782, %v1560
        %v1576 = vshrl.u32 1326507024, %v1561
        %v1577 = vor.u32 %v1575, %v1576
        %vm1578 = vcmp.lt.s32.totalorder %v1559, 1
        %vm1579 = vcmp.lt.s32.totalorder %v1559, 2
        %vm1580 = vcmp.lt.s32.totalorder %v1559, 3
        %vm1581 = vcmp.lt.s32.totalorder %v1559, 4
        %v1582 = vsel %vm1578, %v1562, %v1565
        %v1583 = vsel %vm1581, %v1571, 2102212464
        %v1584 = vsel %vm1580, %v1568, %v1583
        %v1585 = vsel %vm1579, %v1582, %v1584
        %v1586 = vsel %vm1578, %v1565, %v1568
        %v1587 = vsel %vm1581, %v1574, 920167782
        %v1588 = vsel %vm1580, %v1571, %v1587
        %v1589 = vsel %vm1579, %v1586, %v1588
        %v1590 = vsel %vm1578, %v1568, %v1571
        %v1591 = vsel %vm1581, %v1577, 1326507024
        %v1592 = vsel %vm1580, %v1574, %v1591
        %v1593 = vsel %vm1579, %v1590, %v1592
        %v1594 = vshll.u32 %v1554, 8
        %v1595 = vmul.u32.u64.compose %v1594, %v1593
        %v1596 = vextract.low.u32 %v1595
        %v1597 = vextract.high.u32 %v1595
        %v1598 = vmul.u32.u64.compose %v1594, %v1589
        %v1599 = vextract.low.u32 %v1598
        %v1600 = vextract.high.u32 %v1598
        %v1601 = vmul.u32 %v1594, %v1585
        %v1602 = vadd.s32 %v1597, %v1599
        %vm1603 = vc.u32 %v1597, %v1599
        %v1604 = vadd.s32 %v1600, 1
        %v1605 = vsel %vm1603, %v1604, %v1600
        %v1606 = vadd.s32 %v1601, %v1605
        %v1607 = vadd.s32 %v1606, 536870912
        %v1608 = vshrl.u32 %v1607, 30
        %v1609 = vshll.u32 %v1608, 30
        %v1610 = vsub.s32 %v1606, %v1609
        %vm1611 = vcmp.lt.s32.totalorder %v1610, 0
        %v1612 = vsub.s32 0, %v1610
        %v1613 = vsel %vm1611, %v1612, %v1610
        %v1614 = vclz %v1613
        %v1615 = vsub.s32 %v1614, 2
        %vm1616 = vcmp.gt.s32.totalorder 0, %v1615
        %v1617 = vsel %vm1616, 0, %v1615
        %v1618 = vsub.s32 32, %v1617
        %v1619 = vshll.u32 %v1610, %v1617
        %v1620 = vshrl.u32 %v1602, %v1618
        %v1621 = vor.u32 %v1619, %v1620
        %v1622 = vsub.s32 4294967266, %v1617
        %v1623 = vadd.s32 %v1622, 127
        %v1624 = vshll.u32 %v1623, 23
        %v1625 = vor.u32 4788187, %v1624
        %v1626 = vand.u32 2147483647, %v1625
        %v1628 = vcvt.s32.f32 %v1621
        %v1629 = vmul.f32 %v1628, %v1626
        %v1630 = vxor.u32 %v1629, 2147483648
        %v1631 = vsel %vm1548, %v1630, %v1629
        %v1632 = vsub.s32 4, %v1608
        %v1633 = vsel %vm1548, %v1632, %v1608
        %v1634 = vsel %vm1547, %v1012, %v1631
        %v1635 = vsel %vm1547, 0, %v1633
        %v1636 = vcosq.f32.pop %v1634
        %v1637 = vsinq.f32.pop %v1634
        %vm1638 = vweird.f32 %v1012
        %v1639 = vand.u32 %v1635, 3
        %vm1640 = vcmp.lt.s32.totalorder %v1639, 2
        %vm1641 = vcmp.eq.s32.totalorder %v1639, 0
        %v1642 = vxor.u32 %v1637, 2147483648
        %v1643 = vsel %vm1641, %v1636, %v1642
        %vm1644 = vcmp.eq.s32.totalorder %v1639, 2
        %v1645 = vxor.u32 %v1636, 2147483648
        %v1646 = vsel %vm1644, %v1645, %v1637
        %v1647 = vsel %vm1640, %v1643, %v1646
        %v1648 = vsel %vm1638, nan, %v1647
        %v1649 = vand.u32 2147483647, %v1013
        %vm1650 = vcmp.le.f32.partialorder %v1649, 0.7853982
        %vm1651 = vcmp.lt.s32.totalorder %v1013, 0
        %v1652 = vand.u32 %v1013, 2139095040
        %v1653 = vshrl.u32 %v1652, 23
        %v1654 = vsub.s32 %v1653, 127
        %v1655 = vand.u32 2147483647, %v1013
        %v1656 = vand.u32 %v1655, 8388607
        %v1657 = vor.u32 %v1656, 8388608
        %v1658 = vsub.s32 0, %v1657
        %v1659 = vadd.s32 %v1654, 1
        %vm1660 = vcmp.gt.s32.totalorder %v1659, 0
        %v1661 = vsel %vm1660, %v1659, 0
        %v1662 = vshrl.u32 %v1661, 5
        %v1663 = vand.u32 %v1661, 31
        %v1664 = vsub.s32 32, %v1663
        %v1665 = vshrl.u32 683565275, %v1664
        %v1666 = vshll.u32 683565275, %v1663
        %v1667 = vshrl.u32 2475754826, %v1664
        %v1668 = vor.u32 %v1666, %v1667
        %v1669 = vshll.u32 2475754826, %v1663
        %v1670 = vshrl.u32 2131351028, %v1664
        %v1671 = vor.u32 %v1669, %v1670
        %v1672 = vshll.u32 2131351028, %v1663
        %v1673 = vshrl.u32 2102212464, %v1664
        %v1674 = vor.u32 %v1672, %v1673
        %v1675 = vshll.u32 2102212464, %v1663
        %v1676 = vshrl.u32 920167782, %v1664
        %v1677 = vor.u32 %v1675, %v1676
        %v1678 = vshll.u32 920167782, %v1663
        %v1679 = vshrl.u32 1326507024, %v1664
        %v1680 = vor.u32 %v1678, %v1679
        %vm1681 = vcmp.lt.s32.totalorder %v1662, 1
        %vm1682 = vcmp.lt.s32.totalorder %v1662, 2
        %vm1683 = vcmp.lt.s32.totalorder %v1662, 3
        %vm1684 = vcmp.lt.s32.totalorder %v1662, 4
        %v1685 = vsel %vm1681, %v1665, %v1668
        %v1686 = vsel %vm1684, %v1674, 2102212464
        %v1687 = vsel %vm1683, %v1671, %v1686
        %v1688 = vsel %vm1682, %v1685, %v1687
        %v1689 = vsel %vm1681, %v1668, %v1671
        %v1690 = vsel %vm1684, %v1677, 920167782
        %v1691 = vsel %vm1683, %v1674, %v1690
        %v1692 = vsel %vm1682, %v1689, %v1691
        %v1693 = vsel %vm1681, %v1671, %v1674
        %v1694 = vsel %vm1684, %v1680, 1326507024
        %v1695 = vsel %vm1683, %v1677, %v1694
        %v1696 = vsel %vm1682, %v1693, %v1695
        %v1697 = vshll.u32 %v1657, 8
        %v1698 = vmul.u32.u64.compose %v1697, %v1696
        %v1699 = vextract.low.u32 %v1698
        %v1700 = vextract.high.u32 %v1698
        %v1701 = vmul.u32.u64.compose %v1697, %v1692
        %v1702 = vextract.low.u32 %v1701
        %v1703 = vextract.high.u32 %v1701
        %v1704 = vmul.u32 %v1697, %v1688
        %v1705 = vadd.s32 %v1700, %v1702
        %vm1706 = vc.u32 %v1700, %v1702
        %v1707 = vadd.s32 %v1703, 1
        %v1708 = vsel %vm1706, %v1707, %v1703
        %v1709 = vadd.s32 %v1704, %v1708
        %v1710 = vadd.s32 %v1709, 536870912
        %v1711 = vshrl.u32 %v1710, 30
        %v1712 = vshll.u32 %v1711, 30
        %v1713 = vsub.s32 %v1709, %v1712
        %vm1714 = vcmp.lt.s32.totalorder %v1713, 0
        %v1715 = vsub.s32 0, %v1713
        %v1716 = vsel %vm1714, %v1715, %v1713
        %v1717 = vclz %v1716
        %v1718 = vsub.s32 %v1717, 2
        %vm1719 = vcmp.gt.s32.totalorder 0, %v1718
        %v1720 = vsel %vm1719, 0, %v1718
        %v1721 = vsub.s32 32, %v1720
        %v1722 = vshll.u32 %v1713, %v1720
        %v1723 = vshrl.u32 %v1705, %v1721
        %v1724 = vor.u32 %v1722, %v1723
        %v1725 = vsub.s32 4294967266, %v1720
        %v1726 = vadd.s32 %v1725, 127
        %v1727 = vshll.u32 %v1726, 23
        %v1728 = vor.u32 4788187, %v1727
        %v1729 = vand.u32 2147483647, %v1728
        %v1731 = vcvt.s32.f32 %v1724
        %v1732 = vmul.f32 %v1731, %v1729
        %v1733 = vxor.u32 %v1732, 2147483648
        %v1734 = vsel %vm1651, %v1733, %v1732
        %v1735 = vsub.s32 4, %v1711
        %v1736 = vsel %vm1651, %v1735, %v1711
        %v1737 = vsel %vm1650, %v1013, %v1734
        %v1738 = vsel %vm1650, 0, %v1736
        %v1739 = vcosq.f32.pop %v1737
        %v1740 = vsinq.f32.pop %v1737
        %vm1741 = vweird.f32 %v1013
        %v1742 = vand.u32 %v1738, 3
        %vm1743 = vcmp.lt.s32.totalorder %v1742, 2
        %vm1744 = vcmp.eq.s32.totalorder %v1742, 0
        %v1745 = vxor.u32 %v1740, 2147483648
        %v1746 = vsel %vm1744, %v1739, %v1745
        %vm1747 = vcmp.eq.s32.totalorder %v1742, 2
        %v1748 = vxor.u32 %v1739, 2147483648
        %v1749 = vsel %vm1747, %v1748, %v1740
        %v1750 = vsel %vm1743, %v1746, %v1749
        %v1751 = vsel %vm1741, nan, %v1750
        %v1752 = vand.u32 2147483647, %v1014
        %vm1753 = vcmp.le.f32.partialorder %v1752, 0.7853982
        %vm1754 = vcmp.lt.s32.totalorder %v1014, 0
        %v1755 = vand.u32 %v1014, 2139095040
        %v1756 = vshrl.u32 %v1755, 23
        %v1757 = vsub.s32 %v1756, 127
        %v1758 = vand.u32 2147483647, %v1014
        %v1759 = vand.u32 %v1758, 8388607
        %v1760 = vor.u32 %v1759, 8388608
        %v1761 = vsub.s32 0, %v1760
        %v1762 = vadd.s32 %v1757, 1
        %vm1763 = vcmp.gt.s32.totalorder %v1762, 0
        %v1764 = vsel %vm1763, %v1762, 0
        %v1765 = vshrl.u32 %v1764, 5
        %v1766 = vand.u32 %v1764, 31
        %v1767 = vsub.s32 32, %v1766
        %v1768 = vshrl.u32 683565275, %v1767
        %v1769 = vshll.u32 683565275, %v1766
        %v1770 = vshrl.u32 2475754826, %v1767
        %v1771 = vor.u32 %v1769, %v1770
        %v1772 = vshll.u32 2475754826, %v1766
        %v1773 = vshrl.u32 2131351028, %v1767
        %v1774 = vor.u32 %v1772, %v1773
        %v1775 = vshll.u32 2131351028, %v1766
        %v1776 = vshrl.u32 2102212464, %v1767
        %v1777 = vor.u32 %v1775, %v1776
        %v1778 = vshll.u32 2102212464, %v1766
        %v1779 = vshrl.u32 920167782, %v1767
        %v1780 = vor.u32 %v1778, %v1779
        %v1781 = vshll.u32 920167782, %v1766
        %v1782 = vshrl.u32 1326507024, %v1767
        %v1783 = vor.u32 %v1781, %v1782
        %vm1784 = vcmp.lt.s32.totalorder %v1765, 1
        %vm1785 = vcmp.lt.s32.totalorder %v1765, 2
        %vm1786 = vcmp.lt.s32.totalorder %v1765, 3
        %vm1787 = vcmp.lt.s32.totalorder %v1765, 4
        %v1788 = vsel %vm1784, %v1768, %v1771
        %v1789 = vsel %vm1787, %v1777, 2102212464
        %v1790 = vsel %vm1786, %v1774, %v1789
        %v1791 = vsel %vm1785, %v1788, %v1790
        %v1792 = vsel %vm1784, %v1771, %v1774
        %v1793 = vsel %vm1787, %v1780, 920167782
        %v1794 = vsel %vm1786, %v1777, %v1793
        %v1795 = vsel %vm1785, %v1792, %v1794
        %v1796 = vsel %vm1784, %v1774, %v1777
        %v1797 = vsel %vm1787, %v1783, 1326507024
        %v1798 = vsel %vm1786, %v1780, %v1797
        %v1799 = vsel %vm1785, %v1796, %v1798
        %v1800 = vshll.u32 %v1760, 8
        %v1801 = vmul.u32.u64.compose %v1800, %v1799
        %v1802 = vextract.low.u32 %v1801
        %v1803 = vextract.high.u32 %v1801
        %v1804 = vmul.u32.u64.compose %v1800, %v1795
        %v1805 = vextract.low.u32 %v1804
        %v1806 = vextract.high.u32 %v1804
        %v1807 = vmul.u32 %v1800, %v1791
        %v1808 = vadd.s32 %v1803, %v1805
        %vm1809 = vc.u32 %v1803, %v1805
        %v1810 = vadd.s32 %v1806, 1
        %v1811 = vsel %vm1809, %v1810, %v1806
        %v1812 = vadd.s32 %v1807, %v1811
        %v1813 = vadd.s32 %v1812, 536870912
        %v1814 = vshrl.u32 %v1813, 30
        %v1815 = vshll.u32 %v1814, 30
        %v1816 = vsub.s32 %v1812, %v1815
        %vm1817 = vcmp.lt.s32.totalorder %v1816, 0
        %v1818 = vsub.s32 0, %v1816
        %v1819 = vsel %vm1817, %v1818, %v1816
        %v1820 = vclz %v1819
        %v1821 = vsub.s32 %v1820, 2
        %vm1822 = vcmp.gt.s32.totalorder 0, %v1821
        %v1823 = vsel %vm1822, 0, %v1821
        %v1824 = vsub.s32 32, %v1823
        %v1825 = vshll.u32 %v1816, %v1823
        %v1826 = vshrl.u32 %v1808, %v1824
        %v1827 = vor.u32 %v1825, %v1826
        %v1828 = vsub.s32 4294967266, %v1823
        %v1829 = vadd.s32 %v1828, 127
        %v1830 = vshll.u32 %v1829, 23
        %v1831 = vor.u32 4788187, %v1830
        %v1832 = vand.u32 2147483647, %v1831
        %v1834 = vcvt.s32.f32 %v1827
        %v1835 = vmul.f32 %v1834, %v1832
        %v1836 = vxor.u32 %v1835, 2147483648
        %v1837 = vsel %vm1754, %v1836, %v1835
        %v1838 = vsub.s32 4, %v1814
        %v1839 = vsel %vm1754, %v1838, %v1814
        %v1840 = vsel %vm1753, %v1014, %v1837
        %v1841 = vsel %vm1753, 0, %v1839
        %v1842 = vcosq.f32.pop %v1840
        %v1843 = vsinq.f32.pop %v1840
        %vm1844 = vweird.f32 %v1014
        %v1845 = vand.u32 %v1841, 3
        %vm1846 = vcmp.lt.s32.totalorder %v1845, 2
        %vm1847 = vcmp.eq.s32.totalorder %v1845, 0
        %v1848 = vxor.u32 %v1843, 2147483648
        %v1849 = vsel %vm1847, %v1842, %v1848
        %vm1850 = vcmp.eq.s32.totalorder %v1845, 2
        %v1851 = vxor.u32 %v1842, 2147483648
        %v1852 = vsel %vm1850, %v1851, %v1843
        %v1853 = vsel %vm1846, %v1849, %v1852
        %v1854 = vsel %vm1844, nan, %v1853
        %v1855 = vmul.f32 %v1016, %v1133
        %v1856 = vmul.f32 %v1018, %v1236
        %v1857 = vmul.f32 %v1020, %v1339
        %v1858 = vmul.f32 %v1022, %v1442
        %v1859 = vmul.f32 %v1024, %v1545
        %v1860 = vmul.f32 %v1026, %v1648
        %v1861 = vmul.f32 %v1028, %v1751
        %v1862 = vmul.f32 %v1030, %v1854
        %v1863 = vand.u32 2147483647, %v1007
        %vm1864 = vcmp.le.f32.partialorder %v1863, 0.7853982
        %vm1865 = vcmp.lt.s32.totalorder %v1007, 0
        %v1866 = vand.u32 %v1007, 2139095040
        %v1867 = vshrl.u32 %v1866, 23
        %v1868 = vsub.s32 %v1867, 127
        %v1869 = vand.u32 2147483647, %v1007
        %v1870 = vand.u32 %v1869, 8388607
        %v1871 = vor.u32 %v1870, 8388608
        %v1872 = vsub.s32 0, %v1871
        %v1873 = vadd.s32 %v1868, 1
        %vm1874 = vcmp.gt.s32.totalorder %v1873, 0
        %v1875 = vsel %vm1874, %v1873, 0
        %v1876 = vshrl.u32 %v1875, 5
        %v1877 = vand.u32 %v1875, 31
        %v1878 = vsub.s32 32, %v1877
        %v1879 = vshrl.u32 683565275, %v1878
        %v1880 = vshll.u32 683565275, %v1877
        %v1881 = vshrl.u32 2475754826, %v1878
        %v1882 = vor.u32 %v1880, %v1881
        %v1883 = vshll.u32 2475754826, %v1877
        %v1884 = vshrl.u32 2131351028, %v1878
        %v1885 = vor.u32 %v1883, %v1884
        %v1886 = vshll.u32 2131351028, %v1877
        %v1887 = vshrl.u32 2102212464, %v1878
        %v1888 = vor.u32 %v1886, %v1887
        %v1889 = vshll.u32 2102212464, %v1877
        %v1890 = vshrl.u32 920167782, %v1878
        %v1891 = vor.u32 %v1889, %v1890
        %v1892 = vshll.u32 920167782, %v1877
        %v1893 = vshrl.u32 1326507024, %v1878
        %v1894 = vor.u32 %v1892, %v1893
        %vm1895 = vcmp.lt.s32.totalorder %v1876, 1
        %vm1896 = vcmp.lt.s32.totalorder %v1876, 2
        %vm1897 = vcmp.lt.s32.totalorder %v1876, 3
        %vm1898 = vcmp.lt.s32.totalorder %v1876, 4
        %v1899 = vsel %vm1895, %v1879, %v1882
        %v1900 = vsel %vm1898, %v1888, 2102212464
        %v1901 = vsel %vm1897, %v1885, %v1900
        %v1902 = vsel %vm1896, %v1899, %v1901
        %v1903 = vsel %vm1895, %v1882, %v1885
        %v1904 = vsel %vm1898, %v1891, 920167782
        %v1905 = vsel %vm1897, %v1888, %v1904
        %v1906 = vsel %vm1896, %v1903, %v1905
        %v1907 = vsel %vm1895, %v1885, %v1888
        %v1908 = vsel %vm1898, %v1894, 1326507024
        %v1909 = vsel %vm1897, %v1891, %v1908
        %v1910 = vsel %vm1896, %v1907, %v1909
        %v1911 = vshll.u32 %v1871, 8
        %v1912 = vmul.u32.u64.compose %v1911, %v1910
        %v1913 = vextract.low.u32 %v1912
        %v1914 = vextract.high.u32 %v1912
        %v1915 = vmul.u32.u64.compose %v1911, %v1906
        %v1916 = vextract.low.u32 %v1915
        %v1917 = vextract.high.u32 %v1915
        %v1918 = vmul.u32 %v1911, %v1902
        %v1919 = vadd.s32 %v1914, %v1916
        %vm1920 = vc.u32 %v1914, %v1916
        %v1921 = vadd.s32 %v1917, 1
        %v1922 = vsel %vm1920, %v1921, %v1917
        %v1923 = vadd.s32 %v1918, %v1922
        %v1924 = vadd.s32 %v1923, 536870912
        %v1925 = vshrl.u32 %v1924, 30
        %v1926 = vshll.u32 %v1925, 30
        %v1927 = vsub.s32 %v1923, %v1926
        %vm1928 = vcmp.lt.s32.totalorder %v1927, 0
        %v1929 = vsub.s32 0, %v1927
        %v1930 = vsel %vm1928, %v1929, %v1927
        %v1931 = vclz %v1930
        %v1932 = vsub.s32 %v1931, 2
        %vm1933 = vcmp.gt.s32.totalorder 0, %v1932
        %v1934 = vsel %vm1933, 0, %v1932
        %v1935 = vsub.s32 32, %v1934
        %v1936 = vshll.u32 %v1927, %v1934
        %v1937 = vshrl.u32 %v1919, %v1935
        %v1938 = vor.u32 %v1936, %v1937
        %v1939 = vsub.s32 4294967266, %v1934
        %v1940 = vadd.s32 %v1939, 127
        %v1941 = vshll.u32 %v1940, 23
        %v1942 = vor.u32 4788187, %v1941
        %v1943 = vand.u32 2147483647, %v1942
        %v1945 = vcvt.s32.f32 %v1938
        %v1946 = vmul.f32 %v1945, %v1943
        %v1947 = vxor.u32 %v1946, 2147483648
        %v1948 = vsel %vm1865, %v1947, %v1946
        %v1949 = vsub.s32 4, %v1925
        %v1950 = vsel %vm1865, %v1949, %v1925
        %v1951 = vsel %vm1864, %v1007, %v1948
        %v1952 = vsel %vm1864, 0, %v1950
        %v1953 = vcosq.f32.pop %v1951
        %v1954 = vsinq.f32.pop %v1951
        %vm1955 = vweird.f32 %v1007
        %v1956 = vadd.s32 %v1952, 3
        %v1957 = vand.u32 %v1956, 3
        %vm1958 = vcmp.lt.s32.totalorder %v1957, 2
        %vm1959 = vcmp.eq.s32.totalorder %v1957, 0
        %v1960 = vxor.u32 %v1954, 2147483648
        %v1961 = vsel %vm1959, %v1953, %v1960
        %vm1962 = vcmp.eq.s32.totalorder %v1957, 2
        %v1963 = vxor.u32 %v1953, 2147483648
        %v1964 = vsel %vm1962, %v1963, %v1954
        %v1965 = vsel %vm1958, %v1961, %v1964
        %v1966 = vsel %vm1955, nan, %v1965
        %v1967 = vand.u32 2147483647, %v1008
        %vm1968 = vcmp.le.f32.partialorder %v1967, 0.7853982
        %vm1969 = vcmp.lt.s32.totalorder %v1008, 0
        %v1970 = vand.u32 %v1008, 2139095040
        %v1971 = vshrl.u32 %v1970, 23
        %v1972 = vsub.s32 %v1971, 127
        %v1973 = vand.u32 2147483647, %v1008
        %v1974 = vand.u32 %v1973, 8388607
        %v1975 = vor.u32 %v1974, 8388608
        %v1976 = vsub.s32 0, %v1975
        %v1977 = vadd.s32 %v1972, 1
        %vm1978 = vcmp.gt.s32.totalorder %v1977, 0
        %v1979 = vsel %vm1978, %v1977, 0
        %v1980 = vshrl.u32 %v1979, 5
        %v1981 = vand.u32 %v1979, 31
        %v1982 = vsub.s32 32, %v1981
        %v1983 = vshrl.u32 683565275, %v1982
        %v1984 = vshll.u32 683565275, %v1981
        %v1985 = vshrl.u32 2475754826, %v1982
        %v1986 = vor.u32 %v1984, %v1985
        %v1987 = vshll.u32 2475754826, %v1981
        %v1988 = vshrl.u32 2131351028, %v1982
        %v1989 = vor.u32 %v1987, %v1988
        %v1990 = vshll.u32 2131351028, %v1981
        %v1991 = vshrl.u32 2102212464, %v1982
        %v1992 = vor.u32 %v1990, %v1991
        %v1993 = vshll.u32 2102212464, %v1981
        %v1994 = vshrl.u32 920167782, %v1982
        %v1995 = vor.u32 %v1993, %v1994
        %v1996 = vshll.u32 920167782, %v1981
        %v1997 = vshrl.u32 1326507024, %v1982
        %v1998 = vor.u32 %v1996, %v1997
        %vm1999 = vcmp.lt.s32.totalorder %v1980, 1
        %vm2000 = vcmp.lt.s32.totalorder %v1980, 2
        %vm2001 = vcmp.lt.s32.totalorder %v1980, 3
        %vm2002 = vcmp.lt.s32.totalorder %v1980, 4
        %v2003 = vsel %vm1999, %v1983, %v1986
        %v2004 = vsel %vm2002, %v1992, 2102212464
        %v2005 = vsel %vm2001, %v1989, %v2004
        %v2006 = vsel %vm2000, %v2003, %v2005
        %v2007 = vsel %vm1999, %v1986, %v1989
        %v2008 = vsel %vm2002, %v1995, 920167782
        %v2009 = vsel %vm2001, %v1992, %v2008
        %v2010 = vsel %vm2000, %v2007, %v2009
        %v2011 = vsel %vm1999, %v1989, %v1992
        %v2012 = vsel %vm2002, %v1998, 1326507024
        %v2013 = vsel %vm2001, %v1995, %v2012
        %v2014 = vsel %vm2000, %v2011, %v2013
        %v2015 = vshll.u32 %v1975, 8
        %v2016 = vmul.u32.u64.compose %v2015, %v2014
        %v2017 = vextract.low.u32 %v2016
        %v2018 = vextract.high.u32 %v2016
        %v2019 = vmul.u32.u64.compose %v2015, %v2010
        %v2020 = vextract.low.u32 %v2019
        %v2021 = vextract.high.u32 %v2019
        %v2022 = vmul.u32 %v2015, %v2006
        %v2023 = vadd.s32 %v2018, %v2020
        %vm2024 = vc.u32 %v2018, %v2020
        %v2025 = vadd.s32 %v2021, 1
        %v2026 = vsel %vm2024, %v2025, %v2021
        %v2027 = vadd.s32 %v2022, %v2026
        %v2028 = vadd.s32 %v2027, 536870912
        %v2029 = vshrl.u32 %v2028, 30
        %v2030 = vshll.u32 %v2029, 30
        %v2031 = vsub.s32 %v2027, %v2030
        %vm2032 = vcmp.lt.s32.totalorder %v2031, 0
        %v2033 = vsub.s32 0, %v2031
        %v2034 = vsel %vm2032, %v2033, %v2031
        %v2035 = vclz %v2034
        %v2036 = vsub.s32 %v2035, 2
        %vm2037 = vcmp.gt.s32.totalorder 0, %v2036
        %v2038 = vsel %vm2037, 0, %v2036
        %v2039 = vsub.s32 32, %v2038
        %v2040 = vshll.u32 %v2031, %v2038
        %v2041 = vshrl.u32 %v2023, %v2039
        %v2042 = vor.u32 %v2040, %v2041
        %v2043 = vsub.s32 4294967266, %v2038
        %v2044 = vadd.s32 %v2043, 127
        %v2045 = vshll.u32 %v2044, 23
        %v2046 = vor.u32 4788187, %v2045
        %v2047 = vand.u32 2147483647, %v2046
        %v2049 = vcvt.s32.f32 %v2042
        %v2050 = vmul.f32 %v2049, %v2047
        %v2051 = vxor.u32 %v2050, 2147483648
        %v2052 = vsel %vm1969, %v2051, %v2050
        %v2053 = vsub.s32 4, %v2029
        %v2054 = vsel %vm1969, %v2053, %v2029
        %v2055 = vsel %vm1968, %v1008, %v2052
        %v2056 = vsel %vm1968, 0, %v2054
        %v2057 = vcosq.f32.pop %v2055
        %v2058 = vsinq.f32.pop %v2055
        %vm2059 = vweird.f32 %v1008
        %v2060 = vadd.s32 %v2056, 3
        %v2061 = vand.u32 %v2060, 3
        %vm2062 = vcmp.lt.s32.totalorder %v2061, 2
        %vm2063 = vcmp.eq.s32.totalorder %v2061, 0
        %v2064 = vxor.u32 %v2058, 2147483648
        %v2065 = vsel %vm2063, %v2057, %v2064
        %vm2066 = vcmp.eq.s32.totalorder %v2061, 2
        %v2067 = vxor.u32 %v2057, 2147483648
        %v2068 = vsel %vm2066, %v2067, %v2058
        %v2069 = vsel %vm2062, %v2065, %v2068
        %v2070 = vsel %vm2059, nan, %v2069
        %v2071 = vand.u32 2147483647, %v1009
        %vm2072 = vcmp.le.f32.partialorder %v2071, 0.7853982
        %vm2073 = vcmp.lt.s32.totalorder %v1009, 0
        %v2074 = vand.u32 %v1009, 2139095040
        %v2075 = vshrl.u32 %v2074, 23
        %v2076 = vsub.s32 %v2075, 127
        %v2077 = vand.u32 2147483647, %v1009
        %v2078 = vand.u32 %v2077, 8388607
        %v2079 = vor.u32 %v2078, 8388608
        %v2080 = vsub.s32 0, %v2079
        %v2081 = vadd.s32 %v2076, 1
        %vm2082 = vcmp.gt.s32.totalorder %v2081, 0
        %v2083 = vsel %vm2082, %v2081, 0
        %v2084 = vshrl.u32 %v2083, 5
        %v2085 = vand.u32 %v2083, 31
        %v2086 = vsub.s32 32, %v2085
        %v2087 = vshrl.u32 683565275, %v2086
        %v2088 = vshll.u32 683565275, %v2085
        %v2089 = vshrl.u32 2475754826, %v2086
        %v2090 = vor.u32 %v2088, %v2089
        %v2091 = vshll.u32 2475754826, %v2085
        %v2092 = vshrl.u32 2131351028, %v2086
        %v2093 = vor.u32 %v2091, %v2092
        %v2094 = vshll.u32 2131351028, %v2085
        %v2095 = vshrl.u32 2102212464, %v2086
        %v2096 = vor.u32 %v2094, %v2095
        %v2097 = vshll.u32 2102212464, %v2085
        %v2098 = vshrl.u32 920167782, %v2086
        %v2099 = vor.u32 %v2097, %v2098
        %v2100 = vshll.u32 920167782, %v2085
        %v2101 = vshrl.u32 1326507024, %v2086
        %v2102 = vor.u32 %v2100, %v2101
        %vm2103 = vcmp.lt.s32.totalorder %v2084, 1
        %vm2104 = vcmp.lt.s32.totalorder %v2084, 2
        %vm2105 = vcmp.lt.s32.totalorder %v2084, 3
        %vm2106 = vcmp.lt.s32.totalorder %v2084, 4
        %v2107 = vsel %vm2103, %v2087, %v2090
        %v2108 = vsel %vm2106, %v2096, 2102212464
        %v2109 = vsel %vm2105, %v2093, %v2108
        %v2110 = vsel %vm2104, %v2107, %v2109
        %v2111 = vsel %vm2103, %v2090, %v2093
        %v2112 = vsel %vm2106, %v2099, 920167782
        %v2113 = vsel %vm2105, %v2096, %v2112
        %v2114 = vsel %vm2104, %v2111, %v2113
        %v2115 = vsel %vm2103, %v2093, %v2096
        %v2116 = vsel %vm2106, %v2102, 1326507024
        %v2117 = vsel %vm2105, %v2099, %v2116
        %v2118 = vsel %vm2104, %v2115, %v2117
        %v2119 = vshll.u32 %v2079, 8
        %v2120 = vmul.u32.u64.compose %v2119, %v2118
        %v2121 = vextract.low.u32 %v2120
        %v2122 = vextract.high.u32 %v2120
        %v2123 = vmul.u32.u64.compose %v2119, %v2114
        %v2124 = vextract.low.u32 %v2123
        %v2125 = vextract.high.u32 %v2123
        %v2126 = vmul.u32 %v2119, %v2110
        %v2127 = vadd.s32 %v2122, %v2124
        %vm2128 = vc.u32 %v2122, %v2124
        %v2129 = vadd.s32 %v2125, 1
        %v2130 = vsel %vm2128, %v2129, %v2125
        %v2131 = vadd.s32 %v2126, %v2130
        %v2132 = vadd.s32 %v2131, 536870912
        %v2133 = vshrl.u32 %v2132, 30
        %v2134 = vshll.u32 %v2133, 30
        %v2135 = vsub.s32 %v2131, %v2134
        %vm2136 = vcmp.lt.s32.totalorder %v2135, 0
        %v2137 = vsub.s32 0, %v2135
        %v2138 = vsel %vm2136, %v2137, %v2135
        %v2139 = vclz %v2138
        %v2140 = vsub.s32 %v2139, 2
        %vm2141 = vcmp.gt.s32.totalorder 0, %v2140
        %v2142 = vsel %vm2141, 0, %v2140
        %v2143 = vsub.s32 32, %v2142
        %v2144 = vshll.u32 %v2135, %v2142
        %v2145 = vshrl.u32 %v2127, %v2143
        %v2146 = vor.u32 %v2144, %v2145
        %v2147 = vsub.s32 4294967266, %v2142
        %v2148 = vadd.s32 %v2147, 127
        %v2149 = vshll.u32 %v2148, 23
        %v2150 = vor.u32 4788187, %v2149
        %v2151 = vand.u32 2147483647, %v2150
        %v2153 = vcvt.s32.f32 %v2146
        %v2154 = vmul.f32 %v2153, %v2151
        %v2155 = vxor.u32 %v2154, 2147483648
        %v2156 = vsel %vm2073, %v2155, %v2154
        %v2157 = vsub.s32 4, %v2133
        %v2158 = vsel %vm2073, %v2157, %v2133
        %v2159 = vsel %vm2072, %v1009, %v2156
        %v2160 = vsel %vm2072, 0, %v2158
        %v2161 = vcosq.f32.pop %v2159
        %v2162 = vsinq.f32.pop %v2159
        %vm2163 = vweird.f32 %v1009
        %v2164 = vadd.s32 %v2160, 3
        %v2165 = vand.u32 %v2164, 3
        %vm2166 = vcmp.lt.s32.totalorder %v2165, 2
        %vm2167 = vcmp.eq.s32.totalorder %v2165, 0
        %v2168 = vxor.u32 %v2162, 2147483648
        %v2169 = vsel %vm2167, %v2161, %v2168
        %vm2170 = vcmp.eq.s32.totalorder %v2165, 2
        %v2171 = vxor.u32 %v2161, 2147483648
        %v2172 = vsel %vm2170, %v2171, %v2162
        %v2173 = vsel %vm2166, %v2169, %v2172
        %v2174 = vsel %vm2163, nan, %v2173
        %v2175 = vand.u32 2147483647, %v1010
        %vm2176 = vcmp.le.f32.partialorder %v2175, 0.7853982
        %vm2177 = vcmp.lt.s32.totalorder %v1010, 0
        %v2178 = vand.u32 %v1010, 2139095040
        %v2179 = vshrl.u32 %v2178, 23
        %v2180 = vsub.s32 %v2179, 127
        %v2181 = vand.u32 2147483647, %v1010
        %v2182 = vand.u32 %v2181, 8388607
        %v2183 = vor.u32 %v2182, 8388608
        %v2184 = vsub.s32 0, %v2183
        %v2185 = vadd.s32 %v2180, 1
        %vm2186 = vcmp.gt.s32.totalorder %v2185, 0
        %v2187 = vsel %vm2186, %v2185, 0
        %v2188 = vshrl.u32 %v2187, 5
        %v2189 = vand.u32 %v2187, 31
        %v2190 = vsub.s32 32, %v2189
        %v2191 = vshrl.u32 683565275, %v2190
        %v2192 = vshll.u32 683565275, %v2189
        %v2193 = vshrl.u32 2475754826, %v2190
        %v2194 = vor.u32 %v2192, %v2193
        %v2195 = vshll.u32 2475754826, %v2189
        %v2196 = vshrl.u32 2131351028, %v2190
        %v2197 = vor.u32 %v2195, %v2196
        %v2198 = vshll.u32 2131351028, %v2189
        %v2199 = vshrl.u32 2102212464, %v2190
        %v2200 = vor.u32 %v2198, %v2199
        %v2201 = vshll.u32 2102212464, %v2189
        %v2202 = vshrl.u32 920167782, %v2190
        %v2203 = vor.u32 %v2201, %v2202
        %v2204 = vshll.u32 920167782, %v2189
        %v2205 = vshrl.u32 1326507024, %v2190
        %v2206 = vor.u32 %v2204, %v2205
        %vm2207 = vcmp.lt.s32.totalorder %v2188, 1
        %vm2208 = vcmp.lt.s32.totalorder %v2188, 2
        %vm2209 = vcmp.lt.s32.totalorder %v2188, 3
        %vm2210 = vcmp.lt.s32.totalorder %v2188, 4
        %v2211 = vsel %vm2207, %v2191, %v2194
        %v2212 = vsel %vm2210, %v2200, 2102212464
        %v2213 = vsel %vm2209, %v2197, %v2212
        %v2214 = vsel %vm2208, %v2211, %v2213
        %v2215 = vsel %vm2207, %v2194, %v2197
        %v2216 = vsel %vm2210, %v2203, 920167782
        %v2217 = vsel %vm2209, %v2200, %v2216
        %v2218 = vsel %vm2208, %v2215, %v2217
        %v2219 = vsel %vm2207, %v2197, %v2200
        %v2220 = vsel %vm2210, %v2206, 1326507024
        %v2221 = vsel %vm2209, %v2203, %v2220
        %v2222 = vsel %vm2208, %v2219, %v2221
        %v2223 = vshll.u32 %v2183, 8
        %v2224 = vmul.u32.u64.compose %v2223, %v2222
        %v2225 = vextract.low.u32 %v2224
        %v2226 = vextract.high.u32 %v2224
        %v2227 = vmul.u32.u64.compose %v2223, %v2218
        %v2228 = vextract.low.u32 %v2227
        %v2229 = vextract.high.u32 %v2227
        %v2230 = vmul.u32 %v2223, %v2214
        %v2231 = vadd.s32 %v2226, %v2228
        %vm2232 = vc.u32 %v2226, %v2228
        %v2233 = vadd.s32 %v2229, 1
        %v2234 = vsel %vm2232, %v2233, %v2229
        %v2235 = vadd.s32 %v2230, %v2234
        %v2236 = vadd.s32 %v2235, 536870912
        %v2237 = vshrl.u32 %v2236, 30
        %v2238 = vshll.u32 %v2237, 30
        %v2239 = vsub.s32 %v2235, %v2238
        %vm2240 = vcmp.lt.s32.totalorder %v2239, 0
        %v2241 = vsub.s32 0, %v2239
        %v2242 = vsel %vm2240, %v2241, %v2239
        %v2243 = vclz %v2242
        %v2244 = vsub.s32 %v2243, 2
        %vm2245 = vcmp.gt.s32.totalorder 0, %v2244
        %v2246 = vsel %vm2245, 0, %v2244
        %v2247 = vsub.s32 32, %v2246
        %v2248 = vshll.u32 %v2239, %v2246
        %v2249 = vshrl.u32 %v2231, %v2247
        %v2250 = vor.u32 %v2248, %v2249
        %v2251 = vsub.s32 4294967266, %v2246
        %v2252 = vadd.s32 %v2251, 127
        %v2253 = vshll.u32 %v2252, 23
        %v2254 = vor.u32 4788187, %v2253
        %v2255 = vand.u32 2147483647, %v2254
        %v2257 = vcvt.s32.f32 %v2250
        %v2258 = vmul.f32 %v2257, %v2255
        %v2259 = vxor.u32 %v2258, 2147483648
        %v2260 = vsel %vm2177, %v2259, %v2258
        %v2261 = vsub.s32 4, %v2237
        %v2262 = vsel %vm2177, %v2261, %v2237
        %v2263 = vsel %vm2176, %v1010, %v2260
        %v2264 = vsel %vm2176, 0, %v2262
        %v2265 = vcosq.f32.pop %v2263
        %v2266 = vsinq.f32.pop %v2263
        %vm2267 = vweird.f32 %v1010
        %v2268 = vadd.s32 %v2264, 3
        %v2269 = vand.u32 %v2268, 3
        %vm2270 = vcmp.lt.s32.totalorder %v2269, 2
        %vm2271 = vcmp.eq.s32.totalorder %v2269, 0
        %v2272 = vxor.u32 %v2266, 2147483648
        %v2273 = vsel %vm2271, %v2265, %v2272
        %vm2274 = vcmp.eq.s32.totalorder %v2269, 2
        %v2275 = vxor.u32 %v2265, 2147483648
        %v2276 = vsel %vm2274, %v2275, %v2266
        %v2277 = vsel %vm2270, %v2273, %v2276
        %v2278 = vsel %vm2267, nan, %v2277
        %v2279 = vand.u32 2147483647, %v1011
        %vm2280 = vcmp.le.f32.partialorder %v2279, 0.7853982
        %vm2281 = vcmp.lt.s32.totalorder %v1011, 0
        %v2282 = vand.u32 %v1011, 2139095040
        %v2283 = vshrl.u32 %v2282, 23
        %v2284 = vsub.s32 %v2283, 127
        %v2285 = vand.u32 2147483647, %v1011
        %v2286 = vand.u32 %v2285, 8388607
        %v2287 = vor.u32 %v2286, 8388608
        %v2288 = vsub.s32 0, %v2287
        %v2289 = vadd.s32 %v2284, 1
        %vm2290 = vcmp.gt.s32.totalorder %v2289, 0
        %v2291 = vsel %vm2290, %v2289, 0
        %v2292 = vshrl.u32 %v2291, 5
        %v2293 = vand.u32 %v2291, 31
        %v2294 = vsub.s32 32, %v2293
        %v2295 = vshrl.u32 683565275, %v2294
        %v2296 = vshll.u32 683565275, %v2293
        %v2297 = vshrl.u32 2475754826, %v2294
        %v2298 = vor.u32 %v2296, %v2297
        %v2299 = vshll.u32 2475754826, %v2293
        %v2300 = vshrl.u32 2131351028, %v2294
        %v2301 = vor.u32 %v2299, %v2300
        %v2302 = vshll.u32 2131351028, %v2293
        %v2303 = vshrl.u32 2102212464, %v2294
        %v2304 = vor.u32 %v2302, %v2303
        %v2305 = vshll.u32 2102212464, %v2293
        %v2306 = vshrl.u32 920167782, %v2294
        %v2307 = vor.u32 %v2305, %v2306
        %v2308 = vshll.u32 920167782, %v2293
        %v2309 = vshrl.u32 1326507024, %v2294
        %v2310 = vor.u32 %v2308, %v2309
        %vm2311 = vcmp.lt.s32.totalorder %v2292, 1
        %vm2312 = vcmp.lt.s32.totalorder %v2292, 2
        %vm2313 = vcmp.lt.s32.totalorder %v2292, 3
        %vm2314 = vcmp.lt.s32.totalorder %v2292, 4
        %v2315 = vsel %vm2311, %v2295, %v2298
        %v2316 = vsel %vm2314, %v2304, 2102212464
        %v2317 = vsel %vm2313, %v2301, %v2316
        %v2318 = vsel %vm2312, %v2315, %v2317
        %v2319 = vsel %vm2311, %v2298, %v2301
        %v2320 = vsel %vm2314, %v2307, 920167782
        %v2321 = vsel %vm2313, %v2304, %v2320
        %v2322 = vsel %vm2312, %v2319, %v2321
        %v2323 = vsel %vm2311, %v2301, %v2304
        %v2324 = vsel %vm2314, %v2310, 1326507024
        %v2325 = vsel %vm2313, %v2307, %v2324
        %v2326 = vsel %vm2312, %v2323, %v2325
        %v2327 = vshll.u32 %v2287, 8
        %v2328 = vmul.u32.u64.compose %v2327, %v2326
        %v2329 = vextract.low.u32 %v2328
        %v2330 = vextract.high.u32 %v2328
        %v2331 = vmul.u32.u64.compose %v2327, %v2322
        %v2332 = vextract.low.u32 %v2331
        %v2333 = vextract.high.u32 %v2331
        %v2334 = vmul.u32 %v2327, %v2318
        %v2335 = vadd.s32 %v2330, %v2332
        %vm2336 = vc.u32 %v2330, %v2332
        %v2337 = vadd.s32 %v2333, 1
        %v2338 = vsel %vm2336, %v2337, %v2333
        %v2339 = vadd.s32 %v2334, %v2338
        %v2340 = vadd.s32 %v2339, 536870912
        %v2341 = vshrl.u32 %v2340, 30
        %v2342 = vshll.u32 %v2341, 30
        %v2343 = vsub.s32 %v2339, %v2342
        %vm2344 = vcmp.lt.s32.totalorder %v2343, 0
        %v2345 = vsub.s32 0, %v2343
        %v2346 = vsel %vm2344, %v2345, %v2343
        %v2347 = vclz %v2346
        %v2348 = vsub.s32 %v2347, 2
        %vm2349 = vcmp.gt.s32.totalorder 0, %v2348
        %v2350 = vsel %vm2349, 0, %v2348
        %v2351 = vsub.s32 32, %v2350
        %v2352 = vshll.u32 %v2343, %v2350
        %v2353 = vshrl.u32 %v2335, %v2351
        %v2354 = vor.u32 %v2352, %v2353
        %v2355 = vsub.s32 4294967266, %v2350
        %v2356 = vadd.s32 %v2355, 127
        %v2357 = vshll.u32 %v2356, 23
        %v2358 = vor.u32 4788187, %v2357
        %v2359 = vand.u32 2147483647, %v2358
        %v2361 = vcvt.s32.f32 %v2354
        %v2362 = vmul.f32 %v2361, %v2359
        %v2363 = vxor.u32 %v2362, 2147483648
        %v2364 = vsel %vm2281, %v2363, %v2362
        %v2365 = vsub.s32 4, %v2341
        %v2366 = vsel %vm2281, %v2365, %v2341
        %v2367 = vsel %vm2280, %v1011, %v2364
        %v2368 = vsel %vm2280, 0, %v2366
        %v2369 = vcosq.f32.pop %v2367
        %v2370 = vsinq.f32.pop %v2367
        %vm2371 = vweird.f32 %v1011
        %v2372 = vadd.s32 %v2368, 3
        %v2373 = vand.u32 %v2372, 3
        %vm2374 = vcmp.lt.s32.totalorder %v2373, 2
        %vm2375 = vcmp.eq.s32.totalorder %v2373, 0
        %v2376 = vxor.u32 %v2370, 2147483648
        %v2377 = vsel %vm2375, %v2369, %v2376
        %vm2378 = vcmp.eq.s32.totalorder %v2373, 2
        %v2379 = vxor.u32 %v2369, 2147483648
        %v2380 = vsel %vm2378, %v2379, %v2370
        %v2381 = vsel %vm2374, %v2377, %v2380
        %v2382 = vsel %vm2371, nan, %v2381
        %v2383 = vand.u32 2147483647, %v1012
        %vm2384 = vcmp.le.f32.partialorder %v2383, 0.7853982
        %vm2385 = vcmp.lt.s32.totalorder %v1012, 0
        %v2386 = vand.u32 %v1012, 2139095040
        %v2387 = vshrl.u32 %v2386, 23
        %v2388 = vsub.s32 %v2387, 127
        %v2389 = vand.u32 2147483647, %v1012
        %v2390 = vand.u32 %v2389, 8388607
        %v2391 = vor.u32 %v2390, 8388608
        %v2392 = vsub.s32 0, %v2391
        %v2393 = vadd.s32 %v2388, 1
        %vm2394 = vcmp.gt.s32.totalorder %v2393, 0
        %v2395 = vsel %vm2394, %v2393, 0
        %v2396 = vshrl.u32 %v2395, 5
        %v2397 = vand.u32 %v2395, 31
        %v2398 = vsub.s32 32, %v2397
        %v2399 = vshrl.u32 683565275, %v2398
        %v2400 = vshll.u32 683565275, %v2397
        %v2401 = vshrl.u32 2475754826, %v2398
        %v2402 = vor.u32 %v2400, %v2401
        %v2403 = vshll.u32 2475754826, %v2397
        %v2404 = vshrl.u32 2131351028, %v2398
        %v2405 = vor.u32 %v2403, %v2404
        %v2406 = vshll.u32 2131351028, %v2397
        %v2407 = vshrl.u32 2102212464, %v2398
        %v2408 = vor.u32 %v2406, %v2407
        %v2409 = vshll.u32 2102212464, %v2397
        %v2410 = vshrl.u32 920167782, %v2398
        %v2411 = vor.u32 %v2409, %v2410
        %v2412 = vshll.u32 920167782, %v2397
        %v2413 = vshrl.u32 1326507024, %v2398
        %v2414 = vor.u32 %v2412, %v2413
        %vm2415 = vcmp.lt.s32.totalorder %v2396, 1
        %vm2416 = vcmp.lt.s32.totalorder %v2396, 2
        %vm2417 = vcmp.lt.s32.totalorder %v2396, 3
        %vm2418 = vcmp.lt.s32.totalorder %v2396, 4
        %v2419 = vsel %vm2415, %v2399, %v2402
        %v2420 = vsel %vm2418, %v2408, 2102212464
        %v2421 = vsel %vm2417, %v2405, %v2420
        %v2422 = vsel %vm2416, %v2419, %v2421
        %v2423 = vsel %vm2415, %v2402, %v2405
        %v2424 = vsel %vm2418, %v2411, 920167782
        %v2425 = vsel %vm2417, %v2408, %v2424
        %v2426 = vsel %vm2416, %v2423, %v2425
        %v2427 = vsel %vm2415, %v2405, %v2408
        %v2428 = vsel %vm2418, %v2414, 1326507024
        %v2429 = vsel %vm2417, %v2411, %v2428
        %v2430 = vsel %vm2416, %v2427, %v2429
        %v2431 = vshll.u32 %v2391, 8
        %v2432 = vmul.u32.u64.compose %v2431, %v2430
        %v2433 = vextract.low.u32 %v2432
        %v2434 = vextract.high.u32 %v2432
        %v2435 = vmul.u32.u64.compose %v2431, %v2426
        %v2436 = vextract.low.u32 %v2435
        %v2437 = vextract.high.u32 %v2435
        %v2438 = vmul.u32 %v2431, %v2422
        %v2439 = vadd.s32 %v2434, %v2436
        %vm2440 = vc.u32 %v2434, %v2436
        %v2441 = vadd.s32 %v2437, 1
        %v2442 = vsel %vm2440, %v2441, %v2437
        %v2443 = vadd.s32 %v2438, %v2442
        %v2444 = vadd.s32 %v2443, 536870912
        %v2445 = vshrl.u32 %v2444, 30
        %v2446 = vshll.u32 %v2445, 30
        %v2447 = vsub.s32 %v2443, %v2446
        %vm2448 = vcmp.lt.s32.totalorder %v2447, 0
        %v2449 = vsub.s32 0, %v2447
        %v2450 = vsel %vm2448, %v2449, %v2447
        %v2451 = vclz %v2450
        %v2452 = vsub.s32 %v2451, 2
        %vm2453 = vcmp.gt.s32.totalorder 0, %v2452
        %v2454 = vsel %vm2453, 0, %v2452
        %v2455 = vsub.s32 32, %v2454
        %v2456 = vshll.u32 %v2447, %v2454
        %v2457 = vshrl.u32 %v2439, %v2455
        %v2458 = vor.u32 %v2456, %v2457
        %v2459 = vsub.s32 4294967266, %v2454
        %v2460 = vadd.s32 %v2459, 127
        %v2461 = vshll.u32 %v2460, 23
        %v2462 = vor.u32 4788187, %v2461
        %v2463 = vand.u32 2147483647, %v2462
        %v2465 = vcvt.s32.f32 %v2458
        %v2466 = vmul.f32 %v2465, %v2463
        %v2467 = vxor.u32 %v2466, 2147483648
        %v2468 = vsel %vm2385, %v2467, %v2466
        %v2469 = vsub.s32 4, %v2445
        %v2470 = vsel %vm2385, %v2469, %v2445
        %v2471 = vsel %vm2384, %v1012, %v2468
        %v2472 = vsel %vm2384, 0, %v2470
        %v2473 = vcosq.f32.pop %v2471
        %v2474 = vsinq.f32.pop %v2471
        %vm2475 = vweird.f32 %v1012
        %v2476 = vadd.s32 %v2472, 3
        %v2477 = vand.u32 %v2476, 3
        %vm2478 = vcmp.lt.s32.totalorder %v2477, 2
        %vm2479 = vcmp.eq.s32.totalorder %v2477, 0
        %v2480 = vxor.u32 %v2474, 2147483648
        %v2481 = vsel %vm2479, %v2473, %v2480
        %vm2482 = vcmp.eq.s32.totalorder %v2477, 2
        %v2483 = vxor.u32 %v2473, 2147483648
        %v2484 = vsel %vm2482, %v2483, %v2474
        %v2485 = vsel %vm2478, %v2481, %v2484
        %v2486 = vsel %vm2475, nan, %v2485
        %v2487 = vand.u32 2147483647, %v1013
        %vm2488 = vcmp.le.f32.partialorder %v2487, 0.7853982
        %vm2489 = vcmp.lt.s32.totalorder %v1013, 0
        %v2490 = vand.u32 %v1013, 2139095040
        %v2491 = vshrl.u32 %v2490, 23
        %v2492 = vsub.s32 %v2491, 127
        %v2493 = vand.u32 2147483647, %v1013
        %v2494 = vand.u32 %v2493, 8388607
        %v2495 = vor.u32 %v2494, 8388608
        %v2496 = vsub.s32 0, %v2495
        %v2497 = vadd.s32 %v2492, 1
        %vm2498 = vcmp.gt.s32.totalorder %v2497, 0
        %v2499 = vsel %vm2498, %v2497, 0
        %v2500 = vshrl.u32 %v2499, 5
        %v2501 = vand.u32 %v2499, 31
        %v2502 = vsub.s32 32, %v2501
        %v2503 = vshrl.u32 683565275, %v2502
        %v2504 = vshll.u32 683565275, %v2501
        %v2505 = vshrl.u32 2475754826, %v2502
        %v2506 = vor.u32 %v2504, %v2505
        %v2507 = vshll.u32 2475754826, %v2501
        %v2508 = vshrl.u32 2131351028, %v2502
        %v2509 = vor.u32 %v2507, %v2508
        %v2510 = vshll.u32 2131351028, %v2501
        %v2511 = vshrl.u32 2102212464, %v2502
        %v2512 = vor.u32 %v2510, %v2511
        %v2513 = vshll.u32 2102212464, %v2501
        %v2514 = vshrl.u32 920167782, %v2502
        %v2515 = vor.u32 %v2513, %v2514
        %v2516 = vshll.u32 920167782, %v2501
        %v2517 = vshrl.u32 1326507024, %v2502
        %v2518 = vor.u32 %v2516, %v2517
        %vm2519 = vcmp.lt.s32.totalorder %v2500, 1
        %vm2520 = vcmp.lt.s32.totalorder %v2500, 2
        %vm2521 = vcmp.lt.s32.totalorder %v2500, 3
        %vm2522 = vcmp.lt.s32.totalorder %v2500, 4
        %v2523 = vsel %vm2519, %v2503, %v2506
        %v2524 = vsel %vm2522, %v2512, 2102212464
        %v2525 = vsel %vm2521, %v2509, %v2524
        %v2526 = vsel %vm2520, %v2523, %v2525
        %v2527 = vsel %vm2519, %v2506, %v2509
        %v2528 = vsel %vm2522, %v2515, 920167782
        %v2529 = vsel %vm2521, %v2512, %v2528
        %v2530 = vsel %vm2520, %v2527, %v2529
        %v2531 = vsel %vm2519, %v2509, %v2512
        %v2532 = vsel %vm2522, %v2518, 1326507024
        %v2533 = vsel %vm2521, %v2515, %v2532
        %v2534 = vsel %vm2520, %v2531, %v2533
        %v2535 = vshll.u32 %v2495, 8
        %v2536 = vmul.u32.u64.compose %v2535, %v2534
        %v2537 = vextract.low.u32 %v2536
        %v2538 = vextract.high.u32 %v2536
        %v2539 = vmul.u32.u64.compose %v2535, %v2530
        %v2540 = vextract.low.u32 %v2539
        %v2541 = vextract.high.u32 %v2539
        %v2542 = vmul.u32 %v2535, %v2526
        %v2543 = vadd.s32 %v2538, %v2540
        %vm2544 = vc.u32 %v2538, %v2540
        %v2545 = vadd.s32 %v2541, 1
        %v2546 = vsel %vm2544, %v2545, %v2541
        %v2547 = vadd.s32 %v2542, %v2546
        %v2548 = vadd.s32 %v2547, 536870912
        %v2549 = vshrl.u32 %v2548, 30
        %v2550 = vshll.u32 %v2549, 30
        %v2551 = vsub.s32 %v2547, %v2550
        %vm2552 = vcmp.lt.s32.totalorder %v2551, 0
        %v2553 = vsub.s32 0, %v2551
        %v2554 = vsel %vm2552, %v2553, %v2551
        %v2555 = vclz %v2554
        %v2556 = vsub.s32 %v2555, 2
        %vm2557 = vcmp.gt.s32.totalorder 0, %v2556
        %v2558 = vsel %vm2557, 0, %v2556
        %v2559 = vsub.s32 32, %v2558
        %v2560 = vshll.u32 %v2551, %v2558
        %v2561 = vshrl.u32 %v2543, %v2559
        %v2562 = vor.u32 %v2560, %v2561
        %v2563 = vsub.s32 4294967266, %v2558
        %v2564 = vadd.s32 %v2563, 127
        %v2565 = vshll.u32 %v2564, 23
        %v2566 = vor.u32 4788187, %v2565
        %v2567 = vand.u32 2147483647, %v2566
        %v2569 = vcvt.s32.f32 %v2562
        %v2570 = vmul.f32 %v2569, %v2567
        %v2571 = vxor.u32 %v2570, 2147483648
        %v2572 = vsel %vm2489, %v2571, %v2570
        %v2573 = vsub.s32 4, %v2549
        %v2574 = vsel %vm2489, %v2573, %v2549
        %v2575 = vsel %vm2488, %v1013, %v2572
        %v2576 = vsel %vm2488, 0, %v2574
        %v2577 = vcosq.f32.pop %v2575
        %v2578 = vsinq.f32.pop %v2575
        %vm2579 = vweird.f32 %v1013
        %v2580 = vadd.s32 %v2576, 3
        %v2581 = vand.u32 %v2580, 3
        %vm2582 = vcmp.lt.s32.totalorder %v2581, 2
        %vm2583 = vcmp.eq.s32.totalorder %v2581, 0
        %v2584 = vxor.u32 %v2578, 2147483648
        %v2585 = vsel %vm2583, %v2577, %v2584
        %vm2586 = vcmp.eq.s32.totalorder %v2581, 2
        %v2587 = vxor.u32 %v2577, 2147483648
        %v2588 = vsel %vm2586, %v2587, %v2578
        %v2589 = vsel %vm2582, %v2585, %v2588
        %v2590 = vsel %vm2579, nan, %v2589
        %v2591 = vand.u32 2147483647, %v1014
        %vm2592 = vcmp.le.f32.partialorder %v2591, 0.7853982
        %vm2593 = vcmp.lt.s32.totalorder %v1014, 0
        %v2594 = vand.u32 %v1014, 2139095040
        %v2595 = vshrl.u32 %v2594, 23
        %v2596 = vsub.s32 %v2595, 127
        %v2597 = vand.u32 2147483647, %v1014
        %v2598 = vand.u32 %v2597, 8388607
        %v2599 = vor.u32 %v2598, 8388608
        %v2600 = vsub.s32 0, %v2599
        %v2601 = vadd.s32 %v2596, 1
        %vm2602 = vcmp.gt.s32.totalorder %v2601, 0
        %v2603 = vsel %vm2602, %v2601, 0
        %v2604 = vshrl.u32 %v2603, 5
        %v2605 = vand.u32 %v2603, 31
        %v2606 = vsub.s32 32, %v2605
        %v2607 = vshrl.u32 683565275, %v2606
        %v2608 = vshll.u32 683565275, %v2605
        %v2609 = vshrl.u32 2475754826, %v2606
        %v2610 = vor.u32 %v2608, %v2609
        %v2611 = vshll.u32 2475754826, %v2605
        %v2612 = vshrl.u32 2131351028, %v2606
        %v2613 = vor.u32 %v2611, %v2612
        %v2614 = vshll.u32 2131351028, %v2605
        %v2615 = vshrl.u32 2102212464, %v2606
        %v2616 = vor.u32 %v2614, %v2615
        %v2617 = vshll.u32 2102212464, %v2605
        %v2618 = vshrl.u32 920167782, %v2606
        %v2619 = vor.u32 %v2617, %v2618
        %v2620 = vshll.u32 920167782, %v2605
        %v2621 = vshrl.u32 1326507024, %v2606
        %v2622 = vor.u32 %v2620, %v2621
        %vm2623 = vcmp.lt.s32.totalorder %v2604, 1
        %vm2624 = vcmp.lt.s32.totalorder %v2604, 2
        %vm2625 = vcmp.lt.s32.totalorder %v2604, 3
        %vm2626 = vcmp.lt.s32.totalorder %v2604, 4
        %v2627 = vsel %vm2623, %v2607, %v2610
        %v2628 = vsel %vm2626, %v2616, 2102212464
        %v2629 = vsel %vm2625, %v2613, %v2628
        %v2630 = vsel %vm2624, %v2627, %v2629
        %v2631 = vsel %vm2623, %v2610, %v2613
        %v2632 = vsel %vm2626, %v2619, 920167782
        %v2633 = vsel %vm2625, %v2616, %v2632
        %v2634 = vsel %vm2624, %v2631, %v2633
        %v2635 = vsel %vm2623, %v2613, %v2616
        %v2636 = vsel %vm2626, %v2622, 1326507024
        %v2637 = vsel %vm2625, %v2619, %v2636
        %v2638 = vsel %vm2624, %v2635, %v2637
        %v2639 = vshll.u32 %v2599, 8
        %v2640 = vmul.u32.u64.compose %v2639, %v2638
        %v2641 = vextract.low.u32 %v2640
        %v2642 = vextract.high.u32 %v2640
        %v2643 = vmul.u32.u64.compose %v2639, %v2634
        %v2644 = vextract.low.u32 %v2643
        %v2645 = vextract.high.u32 %v2643
        %v2646 = vmul.u32 %v2639, %v2630
        %v2647 = vadd.s32 %v2642, %v2644
        %vm2648 = vc.u32 %v2642, %v2644
        %v2649 = vadd.s32 %v2645, 1
        %v2650 = vsel %vm2648, %v2649, %v2645
        %v2651 = vadd.s32 %v2646, %v2650
        %v2652 = vadd.s32 %v2651, 536870912
        %v2653 = vshrl.u32 %v2652, 30
        %v2654 = vshll.u32 %v2653, 30
        %v2655 = vsub.s32 %v2651, %v2654
        %vm2656 = vcmp.lt.s32.totalorder %v2655, 0
        %v2657 = vsub.s32 0, %v2655
        %v2658 = vsel %vm2656, %v2657, %v2655
        %v2659 = vclz %v2658
        %v2660 = vsub.s32 %v2659, 2
        %vm2661 = vcmp.gt.s32.totalorder 0, %v2660
        %v2662 = vsel %vm2661, 0, %v2660
        %v2663 = vsub.s32 32, %v2662
        %v2664 = vshll.u32 %v2655, %v2662
        %v2665 = vshrl.u32 %v2647, %v2663
        %v2666 = vor.u32 %v2664, %v2665
        %v2667 = vsub.s32 4294967266, %v2662
        %v2668 = vadd.s32 %v2667, 127
        %v2669 = vshll.u32 %v2668, 23
        %v2670 = vor.u32 4788187, %v2669
        %v2671 = vand.u32 2147483647, %v2670
        %v2673 = vcvt.s32.f32 %v2666
        %v2674 = vmul.f32 %v2673, %v2671
        %v2675 = vxor.u32 %v2674, 2147483648
        %v2676 = vsel %vm2593, %v2675, %v2674
        %v2677 = vsub.s32 4, %v2653
        %v2678 = vsel %vm2593, %v2677, %v2653
        %v2679 = vsel %vm2592, %v1014, %v2676
        %v2680 = vsel %vm2592, 0, %v2678
        %v2681 = vcosq.f32.pop %v2679
        %v2682 = vsinq.f32.pop %v2679
        %vm2683 = vweird.f32 %v1014
        %v2684 = vadd.s32 %v2680, 3
        %v2685 = vand.u32 %v2684, 3
        %vm2686 = vcmp.lt.s32.totalorder %v2685, 2
        %vm2687 = vcmp.eq.s32.totalorder %v2685, 0
        %v2688 = vxor.u32 %v2682, 2147483648
        %v2689 = vsel %vm2687, %v2681, %v2688
        %vm2690 = vcmp.eq.s32.totalorder %v2685, 2
        %v2691 = vxor.u32 %v2681, 2147483648
        %v2692 = vsel %vm2690, %v2691, %v2682
        %v2693 = vsel %vm2686, %v2689, %v2692
        %v2694 = vsel %vm2683, nan, %v2693
        %v2695 = vmul.f32 %v1016, %v1966
        %v2696 = vmul.f32 %v1018, %v2070
        %v2697 = vmul.f32 %v1020, %v2174
        %v2698 = vmul.f32 %v1022, %v2278
        %v2699 = vmul.f32 %v1024, %v2382
        %v2700 = vmul.f32 %v1026, %v2486
        %v2701 = vmul.f32 %v1028, %v2590
        %v2702 = vmul.f32 %v1030, %v2694
        %v2703 = vsub.f32 %v1855, 1.0
        %v2704 = vsub.f32 %v1856, 1.0
        %v2705 = vsub.f32 %v1857, 1.0
        %v2706 = vsub.f32 %v1858, 1.0
        %v2707 = vsub.f32 %v1859, 1.0
        %v2708 = vsub.f32 %v1860, 1.0
        %v2709 = vsub.f32 %v1861, 1.0
        %v2710 = vsub.f32 %v1862, 1.0
        %2712 = vrot.lane.b32.xlu0 %v898, 32
        %v2713 = vpop.permute.xlu0 %2712
        %v2715 = vmul.f32 %v2703, %v2713
        %v2716 = vmul.f32 %v2704, %v2713
        %v2717 = vmul.f32 %v2705, %v2713
        %v2718 = vmul.f32 %v2706, %v2713
        %v2719 = vmul.f32 %v2707, %v2713
        %v2720 = vmul.f32 %v2708, %v2713
        %v2721 = vmul.f32 %v2709, %v2713
        %v2722 = vmul.f32 %v2710, %v2713
        %2724 = vrot.lane.b32.xlu0 %v900, 32
        %v2725 = vpop.permute.xlu0 %2724
        %v2727 = vmul.f32 %v2695, %v2725
        %v2728 = vmul.f32 %v2696, %v2725
        %v2729 = vmul.f32 %v2697, %v2725
        %v2730 = vmul.f32 %v2698, %v2725
        %v2731 = vmul.f32 %v2699, %v2725
        %v2732 = vmul.f32 %v2700, %v2725
        %v2733 = vmul.f32 %v2701, %v2725
        %v2734 = vmul.f32 %v2702, %v2725
        %v2735 = vsub.f32 %v2715, %v2727
        %v2736 = vsub.f32 %v2716, %v2728
        %v2737 = vsub.f32 %v2717, %v2729
        %v2738 = vsub.f32 %v2718, %v2730
        %v2739 = vsub.f32 %v2719, %v2731
        %v2740 = vsub.f32 %v2720, %v2732
        %v2741 = vsub.f32 %v2721, %v2733
        %v2742 = vsub.f32 %v2722, %v2734
        %v2743 = vmul.f32 %v954, %v2735
        %v2744 = vmul.f32 %v958, %v2736
        %v2745 = vmul.f32 %v962, %v2737
        %v2746 = vmul.f32 %v966, %v2738
        %v2747 = vmul.f32 %v970, %v2739
        %v2748 = vmul.f32 %v974, %v2740
        %v2749 = vmul.f32 %v978, %v2741
        %v2750 = vmul.f32 %v982, %v2742
        %v2751 = vmul.f32 %v2703, %v2725
        %v2752 = vmul.f32 %v2704, %v2725
        %v2753 = vmul.f32 %v2705, %v2725
        %v2754 = vmul.f32 %v2706, %v2725
        %v2755 = vmul.f32 %v2707, %v2725
        %v2756 = vmul.f32 %v2708, %v2725
        %v2757 = vmul.f32 %v2709, %v2725
        %v2758 = vmul.f32 %v2710, %v2725
        %v2759 = vmul.f32 %v2695, %v2713
        %v2760 = vmul.f32 %v2696, %v2713
        %v2761 = vmul.f32 %v2697, %v2713
        %v2762 = vmul.f32 %v2698, %v2713
        %v2763 = vmul.f32 %v2699, %v2713
        %v2764 = vmul.f32 %v2700, %v2713
        %v2765 = vmul.f32 %v2701, %v2713
        %v2766 = vmul.f32 %v2702, %v2713
        %v2767 = vadd.f32 %v2751, %v2759
        %v2768 = vadd.f32 %v2752, %v2760
        %v2769 = vadd.f32 %v2753, %v2761
        %v2770 = vadd.f32 %v2754, %v2762
        %v2771 = vadd.f32 %v2755, %v2763
        %v2772 = vadd.f32 %v2756, %v2764
        %v2773 = vadd.f32 %v2757, %v2765
        %v2774 = vadd.f32 %v2758, %v2766
        %v2775 = vmul.f32 %v954, %v2767
        %v2776 = vmul.f32 %v958, %v2768
        %v2777 = vmul.f32 %v962, %v2769
        %v2778 = vmul.f32 %v966, %v2770
        %v2779 = vmul.f32 %v970, %v2771
        %v2780 = vmul.f32 %v974, %v2772
        %v2781 = vmul.f32 %v978, %v2773
        %v2782 = vmul.f32 %v982, %v2774
        %v2784 = vcombine.high %v853, %v853
        %v2786 = vunpack.c.l.s4 1966171168
        %v2787 = vunpack.c.0.s8 %v2786
        %v2788 = vlaneseq
        %v2789 = vshrl.u32 %v2788, 7
        %v2790 = vsub.s32 %v2787, %v2789
        %v2791 = vrot.slane %v853, %v2790
        %v2793 = vunpack.c.l.s4 1966171168
        %v2794 = vunpack.c.0.s8 %v2793
        %v2795 = vlaneseq
        %v2796 = vshrl.u32 %v2795, 7
        %v2797 = vsub.s32 %v2794, %v2796
        %v2798 = vrot.slane %v2784, %v2797
        %v2799 = vcombine.high %v2791, %v2791
        %v2800 = vcombine.high %v2798, %v2798
        %v2802 = vunpack.c.l.s4 1966171168
        %v2803 = vunpack.c.0.s8 %v2802
        %v2804 = vlaneseq
        %v2805 = vshrl.u32 %v2804, 7
        %v2806 = vsub.s32 %v2803, %v2805
        %v2807 = vrot.slane %v2791, %v2806
        %v2809 = vunpack.c.l.s4 1966171168
        %v2810 = vunpack.c.0.s8 %v2809
        %v2811 = vlaneseq
        %v2812 = vshrl.u32 %v2811, 7
        %v2813 = vsub.s32 %v2810, %v2812
        %v2814 = vrot.slane %v2798, %v2813
        %v2816 = vunpack.c.l.s4 1966171168
        %v2817 = vunpack.c.0.s8 %v2816
        %v2818 = vlaneseq
        %v2819 = vshrl.u32 %v2818, 7
        %v2820 = vsub.s32 %v2817, %v2819
        %v2821 = vrot.slane %v2799, %v2820
        %v2823 = vunpack.c.l.s4 1966171168
        %v2824 = vunpack.c.0.s8 %v2823
        %v2825 = vlaneseq
        %v2826 = vshrl.u32 %v2825, 7
        %v2827 = vsub.s32 %v2824, %v2826
        %v2828 = vrot.slane %v2800, %v2827
        %v2829 = vcombine.high %v2807, %v2807
        %v2830 = vcombine.high %v2814, %v2814
        %v2831 = vcombine.high %v2821, %v2821
        %v2832 = vcombine.high %v2828, %v2828
        %v2833 = vld [vmem:[%s3] sm:$0xff]
        %v2834 = vlaneseq
        %v2835 = vshrl.u32 %v2834, 7
        %v2836 = vsub.s32 0, %v2835
        %v2837 = vrot.slane %v2807, %v2836
        %v2838 = vlaneseq
        %v2839 = vshrl.u32 %v2838, 7
        %v2840 = vsub.s32 0, %v2839
        %v2841 = vrot.slane %v2821, %v2840
        %v2842 = vlaneseq
        %v2843 = vshrl.u32 %v2842, 7
        %v2844 = vsub.s32 0, %v2843
        %v2845 = vrot.slane %v2829, %v2844
        %v2846 = vlaneseq
        %v2847 = vshrl.u32 %v2846, 7
        %v2848 = vsub.s32 0, %v2847
        %v2849 = vrot.slane %v2831, %v2848
        %v2850 = vlaneseq
        %v2851 = vshrl.u32 %v2850, 7
        %v2852 = vsub.s32 0, %v2851
        %v2853 = vrot.slane %v2814, %v2852
        %v2854 = vlaneseq
        %v2855 = vshrl.u32 %v2854, 7
        %v2856 = vsub.s32 0, %v2855
        %v2857 = vrot.slane %v2828, %v2856
        %v2858 = vlaneseq
        %v2859 = vshrl.u32 %v2858, 7
        %v2860 = vsub.s32 0, %v2859
        %v2861 = vrot.slane %v2830, %v2860
        %v2862 = vlaneseq
        %v2863 = vshrl.u32 %v2862, 7
        %v2864 = vsub.s32 0, %v2863
        %v2865 = vrot.slane %v2832, %v2864
        %2875 = vrot.lane.b32.xlu0 %v2833, 32
        %v2876 = vpop.permute.xlu0 %2875
        %v2878 = vmul.f32 %v2837, %v2876
        %v2879 = vmul.f32 %v2841, %v2876
        %v2880 = vmul.f32 %v2845, %v2876
        %v2881 = vmul.f32 %v2849, %v2876
        %v2882 = vmul.f32 %v2853, %v2876
        %v2883 = vmul.f32 %v2857, %v2876
        %v2884 = vmul.f32 %v2861, %v2876
        %v2885 = vmul.f32 %v2865, %v2876
        %v2886 = vld [vmem:[%s4] sm:$0xff]
        %2888 = vrot.lane.b32.xlu0 %v2886, 32
        %v2889 = vpop.permute.xlu0 %2888
        %v2891 = vadd.f32 %v2878, %v2889
        %v2892 = vadd.f32 %v2879, %v2889
        %v2893 = vadd.f32 %v2880, %v2889
        %v2894 = vadd.f32 %v2881, %v2889
        %v2895 = vadd.f32 %v2882, %v2889
        %v2896 = vadd.f32 %v2883, %v2889
        %v2897 = vadd.f32 %v2884, %v2889
        %v2898 = vadd.f32 %v2885, %v2889
        %s2899 = scalar_lea.vmem %s3, 8
        %v2900 = vld [vmem:[%s2899] sm:$0xff]
        %2902 = vrot.lane.b32.xlu0 %v2900, 32
        %v2903 = vpop.permute.xlu0 %2902
        %v2905 = vmul.f32 %v2837, %v2903
        %v2906 = vmul.f32 %v2841, %v2903
        %v2907 = vmul.f32 %v2845, %v2903
        %v2908 = vmul.f32 %v2849, %v2903
        %v2909 = vmul.f32 %v2853, %v2903
        %v2910 = vmul.f32 %v2857, %v2903
        %v2911 = vmul.f32 %v2861, %v2903
        %v2912 = vmul.f32 %v2865, %v2903
        %s2913 = scalar_lea.vmem %s4, 8
        %v2914 = vld [vmem:[%s2913] sm:$0xff]
        %2916 = vrot.lane.b32.xlu0 %v2914, 32
        %v2917 = vpop.permute.xlu0 %2916
        %v2919 = vadd.f32 %v2905, %v2917
        %v2920 = vadd.f32 %v2906, %v2917
        %v2921 = vadd.f32 %v2907, %v2917
        %v2922 = vadd.f32 %v2908, %v2917
        %v2923 = vadd.f32 %v2909, %v2917
        %v2924 = vadd.f32 %v2910, %v2917
        %v2925 = vadd.f32 %v2911, %v2917
        %v2926 = vadd.f32 %v2912, %v2917
        %s2927 = scalar_lea.vmem %s3, 16
        %v2928 = vld [vmem:[%s2927] sm:$0xff]
        %2930 = vrot.lane.b32.xlu0 %v2928, 32
        %v2931 = vpop.permute.xlu0 %2930
        %v2933 = vmul.f32 %v2837, %v2931
        %v2934 = vmul.f32 %v2841, %v2931
        %v2935 = vmul.f32 %v2845, %v2931
        %v2936 = vmul.f32 %v2849, %v2931
        %v2937 = vmul.f32 %v2853, %v2931
        %v2938 = vmul.f32 %v2857, %v2931
        %v2939 = vmul.f32 %v2861, %v2931
        %v2940 = vmul.f32 %v2865, %v2931
        %s2941 = scalar_lea.vmem %s4, 16
        %v2942 = vld [vmem:[%s2941] sm:$0xff]
        %2944 = vrot.lane.b32.xlu0 %v2942, 32
        %v2945 = vpop.permute.xlu0 %2944
        %v2947 = vadd.f32 %v2933, %v2945
        %v2948 = vadd.f32 %v2934, %v2945
        %v2949 = vadd.f32 %v2935, %v2945
        %v2950 = vadd.f32 %v2936, %v2945
        %v2951 = vadd.f32 %v2937, %v2945
        %v2952 = vadd.f32 %v2938, %v2945
        %v2953 = vadd.f32 %v2939, %v2945
        %v2954 = vadd.f32 %v2940, %v2945
        %s2955 = scalar_lea.vmem %s3, 24
        %v2956 = vld [vmem:[%s2955] sm:$0xff]
        %2958 = vrot.lane.b32.xlu0 %v2956, 32
        %v2959 = vpop.permute.xlu0 %2958
        %v2961 = vmul.f32 %v2837, %v2959
        %v2962 = vmul.f32 %v2841, %v2959
        %v2963 = vmul.f32 %v2845, %v2959
        %v2964 = vmul.f32 %v2849, %v2959
        %v2965 = vmul.f32 %v2853, %v2959
        %v2966 = vmul.f32 %v2857, %v2959
        %v2967 = vmul.f32 %v2861, %v2959
        %v2968 = vmul.f32 %v2865, %v2959
        %s2969 = scalar_lea.vmem %s4, 24
        %v2970 = vld [vmem:[%s2969] sm:$0xff]
        %2972 = vrot.lane.b32.xlu0 %v2970, 32
        %v2973 = vpop.permute.xlu0 %2972
        %v2975 = vadd.f32 %v2961, %v2973
        %v2976 = vadd.f32 %v2962, %v2973
        %v2977 = vadd.f32 %v2963, %v2973
        %v2978 = vadd.f32 %v2964, %v2973
        %v2979 = vadd.f32 %v2965, %v2973
        %v2980 = vadd.f32 %v2966, %v2973
        %v2981 = vadd.f32 %v2967, %v2973
        %v2982 = vadd.f32 %v2968, %v2973
        %v2983 = vmul.f32 %v2743, %v2891
        %v2984 = vmul.f32 %v2744, %v2892
        %v2985 = vmul.f32 %v2745, %v2893
        %v2986 = vmul.f32 %v2746, %v2894
        %v2987 = vmul.f32 %v2747, %v2895
        %v2988 = vmul.f32 %v2748, %v2896
        %v2989 = vmul.f32 %v2749, %v2897
        %v2990 = vmul.f32 %v2750, %v2898
        %v2991 = vmul.f32 %v2775, %v2919
        %v2992 = vmul.f32 %v2776, %v2920
        %v2993 = vmul.f32 %v2777, %v2921
        %v2994 = vmul.f32 %v2778, %v2922
        %v2995 = vmul.f32 %v2779, %v2923
        %v2996 = vmul.f32 %v2780, %v2924
        %v2997 = vmul.f32 %v2781, %v2925
        %v2998 = vmul.f32 %v2782, %v2926
        %v2999 = vsub.f32 %v2983, %v2991
        %v3000 = vsub.f32 %v2984, %v2992
        %v3001 = vsub.f32 %v2985, %v2993
        %v3002 = vsub.f32 %v2986, %v2994
        %v3003 = vsub.f32 %v2987, %v2995
        %v3004 = vsub.f32 %v2988, %v2996
        %v3005 = vsub.f32 %v2989, %v2997
        %v3006 = vsub.f32 %v2990, %v2998
        %v3007 = vmul.f32 %v2999, %v2837
        %v3008 = vmul.f32 %v3000, %v2841
        %v3009 = vmul.f32 %v3001, %v2845
        %v3010 = vmul.f32 %v3002, %v2849
        %v3011 = vmul.f32 %v3003, %v2853
        %v3012 = vmul.f32 %v3004, %v2857
        %v3013 = vmul.f32 %v3005, %v2861
        %v3014 = vmul.f32 %v3006, %v2865
        %v3015 = vmul.f32 %v2743, %v2919
        %v3016 = vmul.f32 %v2744, %v2920
        %v3017 = vmul.f32 %v2745, %v2921
        %v3018 = vmul.f32 %v2746, %v2922
        %v3019 = vmul.f32 %v2747, %v2923
        %v3020 = vmul.f32 %v2748, %v2924
        %v3021 = vmul.f32 %v2749, %v2925
        %v3022 = vmul.f32 %v2750, %v2926
        %v3023 = vmul.f32 %v2775, %v2891
        %v3024 = vmul.f32 %v2776, %v2892
        %v3025 = vmul.f32 %v2777, %v2893
        %v3026 = vmul.f32 %v2778, %v2894
        %v3027 = vmul.f32 %v2779, %v2895
        %v3028 = vmul.f32 %v2780, %v2896
        %v3029 = vmul.f32 %v2781, %v2897
        %v3030 = vmul.f32 %v2782, %v2898
        %v3031 = vadd.f32 %v3015, %v3023
        %v3032 = vadd.f32 %v3016, %v3024
        %v3033 = vadd.f32 %v3017, %v3025
        %v3034 = vadd.f32 %v3018, %v3026
        %v3035 = vadd.f32 %v3019, %v3027
        %v3036 = vadd.f32 %v3020, %v3028
        %v3037 = vadd.f32 %v3021, %v3029
        %v3038 = vadd.f32 %v3022, %v3030
        %v3039 = vmul.f32 %v3031, %v2837
        %v3040 = vmul.f32 %v3032, %v2841
        %v3041 = vmul.f32 %v3033, %v2845
        %v3042 = vmul.f32 %v3034, %v2849
        %v3043 = vmul.f32 %v3035, %v2853
        %v3044 = vmul.f32 %v3036, %v2857
        %v3045 = vmul.f32 %v3037, %v2861
        %v3046 = vmul.f32 %v3038, %v2865
        %v3047 = vmul.f32 %v1855, 0.0
        %v3048 = vmul.f32 %v2695, 0.0
        %v3049 = vsub.f32 %v3047, %v3048
        %v3050 = vadd.f32 %v3049, %v3007
        %v3051 = vadd.f32 %v3047, %v3048
        %v3052 = vadd.f32 %v3051, %v3039
        %v3053 = vmul.f32 %v3050, %v2947
        %v3054 = vmul.f32 %v3052, %v2975
        %v3055 = vsub.f32 %v3053, %v3054
        %vm3056 = vcmask 523520
        %v3057 = vsel %vm3056, %v3055, 0.0
        %v3058 = vrot.slane %v3057, 4
        %v3059 = vadd.f32 %v3057, %v3058
        %v3060 = vrot.slane %v3059, 2
        %v3061 = vadd.f32 %v3059, %v3060
        %v3062 = vrot.slane %v3061, 1
        %v3063 = vadd.f32 %v3061, %v3062
        %v3064 = vmul.f32 %v1856, %v3050
        %v3065 = vmul.f32 %v2696, %v3052
        %v3066 = vsub.f32 %v3064, %v3065
        %v3067 = vadd.f32 %v3066, %v3008
        %v3068 = vmul.f32 %v1856, %v3052
        %v3069 = vmul.f32 %v2696, %v3050
        %v3070 = vadd.f32 %v3068, %v3069
        %v3071 = vadd.f32 %v3070, %v3040
        %v3072 = vmul.f32 %v3067, %v2948
        %v3073 = vmul.f32 %v3071, %v2976
        %v3074 = vsub.f32 %v3072, %v3073
        %v3075 = vsel %vm3056, %v3074, 0.0
        %v3076 = vrot.slane %v3075, 4
        %v3077 = vadd.f32 %v3075, %v3076
        %v3078 = vrot.slane %v3077, 2
        %v3079 = vadd.f32 %v3077, %v3078
        %v3080 = vrot.slane %v3079, 1
        %v3081 = vadd.f32 %v3079, %v3080
        %v3082 = vmul.f32 %v1857, %v3067
        %v3083 = vmul.f32 %v2697, %v3071
        %v3084 = vsub.f32 %v3082, %v3083
        %v3085 = vadd.f32 %v3084, %v3009
        %v3086 = vmul.f32 %v1857, %v3071
        %v3087 = vmul.f32 %v2697, %v3067
        %v3088 = vadd.f32 %v3086, %v3087
        %v3089 = vadd.f32 %v3088, %v3041
        %v3090 = vmul.f32 %v3085, %v2949
        %v3091 = vmul.f32 %v3089, %v2977
        %v3092 = vsub.f32 %v3090, %v3091
        %v3093 = vsel %vm3056, %v3092, 0.0
        %v3094 = vrot.slane %v3093, 4
        %v3095 = vadd.f32 %v3093, %v3094
        %v3096 = vrot.slane %v3095, 2
        %v3097 = vadd.f32 %v3095, %v3096
        %v3098 = vrot.slane %v3097, 1
        %v3099 = vadd.f32 %v3097, %v3098
        %v3100 = vmul.f32 %v1858, %v3085
        %v3101 = vmul.f32 %v2698, %v3089
        %v3102 = vsub.f32 %v3100, %v3101
        %v3103 = vadd.f32 %v3102, %v3010
        %v3104 = vmul.f32 %v1858, %v3089
        %v3105 = vmul.f32 %v2698, %v3085
        %v3106 = vadd.f32 %v3104, %v3105
        %v3107 = vadd.f32 %v3106, %v3042
        %v3108 = vmul.f32 %v3103, %v2950
        %v3109 = vmul.f32 %v3107, %v2978
        %v3110 = vsub.f32 %v3108, %v3109
        %v3111 = vsel %vm3056, %v3110, 0.0
        %v3112 = vrot.slane %v3111, 4
        %v3113 = vadd.f32 %v3111, %v3112
        %v3114 = vrot.slane %v3113, 2
        %v3115 = vadd.f32 %v3113, %v3114
        %v3116 = vrot.slane %v3115, 1
        %v3117 = vadd.f32 %v3115, %v3116
        %v3118 = vmul.f32 %v1859, %v3103
        %v3119 = vmul.f32 %v2699, %v3107
        %v3120 = vsub.f32 %v3118, %v3119
        %v3121 = vadd.f32 %v3120, %v3011
        %v3122 = vmul.f32 %v1859, %v3107
        %v3123 = vmul.f32 %v2699, %v3103
        %v3124 = vadd.f32 %v3122, %v3123
        %v3125 = vadd.f32 %v3124, %v3043
        %v3126 = vmul.f32 %v3121, %v2951
        %v3127 = vmul.f32 %v3125, %v2979
        %v3128 = vsub.f32 %v3126, %v3127
        %v3129 = vsel %vm3056, %v3128, 0.0
        %v3130 = vrot.slane %v3129, 4
        %v3131 = vadd.f32 %v3129, %v3130
        %v3132 = vrot.slane %v3131, 2
        %v3133 = vadd.f32 %v3131, %v3132
        %v3134 = vrot.slane %v3133, 1
        %v3135 = vadd.f32 %v3133, %v3134
        %v3136 = vmul.f32 %v1860, %v3121
        %v3137 = vmul.f32 %v2700, %v3125
        %v3138 = vsub.f32 %v3136, %v3137
        %v3139 = vadd.f32 %v3138, %v3012
        %v3140 = vmul.f32 %v1860, %v3125
        %v3141 = vmul.f32 %v2700, %v3121
        %v3142 = vadd.f32 %v3140, %v3141
        %v3143 = vadd.f32 %v3142, %v3044
        %v3144 = vmul.f32 %v3139, %v2952
        %v3145 = vmul.f32 %v3143, %v2980
        %v3146 = vsub.f32 %v3144, %v3145
        %v3147 = vsel %vm3056, %v3146, 0.0
        %v3148 = vrot.slane %v3147, 4
        %v3149 = vadd.f32 %v3147, %v3148
        %v3150 = vrot.slane %v3149, 2
        %v3151 = vadd.f32 %v3149, %v3150
        %v3152 = vrot.slane %v3151, 1
        %v3153 = vadd.f32 %v3151, %v3152
        %v3154 = vmul.f32 %v1861, %v3139
        %v3155 = vmul.f32 %v2701, %v3143
        %v3156 = vsub.f32 %v3154, %v3155
        %v3157 = vadd.f32 %v3156, %v3013
        %v3158 = vmul.f32 %v1861, %v3143
        %v3159 = vmul.f32 %v2701, %v3139
        %v3160 = vadd.f32 %v3158, %v3159
        %v3161 = vadd.f32 %v3160, %v3045
        %v3162 = vmul.f32 %v3157, %v2953
        %v3163 = vmul.f32 %v3161, %v2981
        %v3164 = vsub.f32 %v3162, %v3163
        %v3165 = vsel %vm3056, %v3164, 0.0
        %v3166 = vrot.slane %v3165, 4
        %v3167 = vadd.f32 %v3165, %v3166
        %v3168 = vrot.slane %v3167, 2
        %v3169 = vadd.f32 %v3167, %v3168
        %v3170 = vrot.slane %v3169, 1
        %v3171 = vadd.f32 %v3169, %v3170
        %v3172 = vmul.f32 %v1862, %v3157
        %v3173 = vmul.f32 %v2702, %v3161
        %v3174 = vsub.f32 %v3172, %v3173
        %v3175 = vadd.f32 %v3174, %v3014
        %v3176 = vmul.f32 %v1862, %v3161
        %v3177 = vmul.f32 %v2702, %v3157
        %v3178 = vadd.f32 %v3176, %v3177
        %v3179 = vadd.f32 %v3178, %v3046
        %v3180 = vmul.f32 %v3175, %v2954
        %v3181 = vmul.f32 %v3179, %v2982
        %v3182 = vsub.f32 %v3180, %v3181
        %v3183 = vsel %vm3056, %v3182, 0.0
        %v3184 = vrot.slane %v3183, 4
        %v3185 = vadd.f32 %v3183, %v3184
        %v3186 = vrot.slane %v3185, 2
        %v3187 = vadd.f32 %v3185, %v3186
        %v3188 = vrot.slane %v3187, 1
        %v3189 = vadd.f32 %v3187, %v3188
        %vm3190 = vcmask 1040384
        %v3191 = vsel %vm3190, %v3063, %v3081
        %vm3192 = vcmask 1041408
        %v3193 = vsel %vm3192, %v3191, %v3099
        %vm3194 = vcmask 1042432
        %v3195 = vsel %vm3194, %v3193, %v3117
        %vm3196 = vcmask 1043456
        %v3197 = vsel %vm3196, %v3195, %v3135
        %vm3198 = vcmask 1044480
        %v3199 = vsel %vm3198, %v3197, %v3153
        %vm3200 = vcmask 1045504
        %v3201 = vsel %vm3200, %v3199, %v3171
        %vm3202 = vcmask 1046528
        %v3203 = vsel %vm3202, %v3201, %v3189
        %v3204 = vld [vmem:[%s7] sm:$0x1]
        %v3206 = vlaneseq
        %v3207 = vshrl.u32 %v3206, 7
        %v3208 = vsub.s32 0, %v3207
        %v3209 = vrot.slane %v3204, %v3208
        %3210 = vrot.lane.b32.xlu0 %v3209, 32
        %v3211 = vpop.permute.xlu0 %3210
        %v3213 = vmul.f32 %v853, %v3211
        %v3214 = vadd.f32 %v3203, %v3213
        %3216 = vrot.lane.b32.xlu0 %v862, 32
        %v3217 = vpop.permute.xlu0 %3216
        %v3219 = vmul.f32 %v3214, %v3217
        %v3220 = vld [vmem:[%s8] sm:$0xff]
        %v3221 = vld [vmem:[%s8 + $0x8] sm:$0xff]
        %v3222 = vld [vmem:[%s8 + $0x10] sm:$0xff]
        %v3223 = vld [vmem:[%s8 + $0x18] sm:$0xff]
        %v3224 = vld [vmem:[%s9] sm:$0x1]
        %v3226 = vlaneseq
        %v3227 = vshrl.u32 %v3226, 7
        %v3228 = vsub.s32 0, %v3227
        %v3229 = vrot.slane %v3224, %v3228
        %3232 = vrot.lane.b32.xlu0 %v3219, 96
        %v3233 = vpop.permute.xlu0 %3232
        %v3234 = vsel %vm367, %v3233, 0
        %3236 = vmatprep.subr.mxu0 0.0
        %3237 = vmatpush1.msra.mxu0 0.0
        %3238 = vmatprep.subr.mxu0 0.0
        %3239 = vmatpush1.msra.mxu0 0.0
        %3240 = vmatprep.subr.mxu0 0.0
        %3241 = vmatpush1.msra.mxu0 0.0
        %3242 = vmatprep.subr.mxu0 0.0
        %3243 = vmatpush1.msra.mxu0 0.0
        %3244 = vmatprep.subr.mxu0 0.0
        %3245 = vmatpush1.msra.mxu0 0.0
        %3246 = vmatprep.subr.mxu0 0.0
        %3247 = vmatpush1.msra.mxu0 0.0
        %3248 = vmatprep.subr.mxu0 0.0
        %3249 = vmatpush1.msra.mxu0 0.0
        %3250 = vmatprep.subr.mxu0 0.0
        %3251 = vmatpush1.msra.mxu0 0.0
        %3252 = vmatprep.subr.mxu0 0.0
        %3253 = vmatpush1.msra.mxu0 0.0
        %3254 = vmatprep.subr.mxu0 0.0
        %3255 = vmatpush1.msra.mxu0 0.0
        %3256 = vmatprep.subr.mxu0 0.0
        %3257 = vmatpush1.msra.mxu0 0.0
        %3258 = vmatprep.subr.mxu0 0.0
        %3259 = vmatpush1.msra.mxu0 0.0
        %3260 = vmatprep.subr.mxu0 0.0
        %v3261 = vand.u32 %v3223, 4294901760
        %3262 = vmatpush1.msra.mxu0 %v3261
        %3263 = vmatprep.subr.mxu0 0.0
        %v3264 = vand.u32 %v3222, 4294901760
        %3265 = vmatpush1.msra.mxu0 %v3264
        %3266 = vmatprep.subr.mxu0 0.0
        %v3267 = vand.u32 %v3221, 4294901760
        %3268 = vmatpush1.msra.mxu0 %v3267
        %3269 = vmatprep.subr.mxu0 0.0
        %v3270 = vand.u32 %v3220, 4294901760
        %3271 = vmatpush1.msra.mxu0 %v3270
        %3272 = vmatprep.subr.mxu0 0.0
        %3273 = vmatpush2.msra.mxu0 0.0
        %3274 = vmatprep.subr.mxu0 0.0
        %3275 = vmatpush2.msra.mxu0 0.0
        %3276 = vmatprep.subr.mxu0 0.0
        %3277 = vmatpush2.msra.mxu0 0.0
        %3278 = vmatprep.subr.mxu0 0.0
        %3279 = vmatpush2.msra.mxu0 0.0
        %3280 = vmatprep.subr.mxu0 0.0
        %3281 = vmatpush2.msra.mxu0 0.0
        %3282 = vmatprep.subr.mxu0 0.0
        %3283 = vmatpush2.msra.mxu0 0.0
        %3284 = vmatprep.subr.mxu0 0.0
        %3285 = vmatpush2.msra.mxu0 0.0
        %3286 = vmatprep.subr.mxu0 0.0
        %3287 = vmatpush2.msra.mxu0 0.0
        %3288 = vmatprep.subr.mxu0 0.0
        %3289 = vmatpush2.msra.mxu0 0.0
        %3290 = vmatprep.subr.mxu0 0.0
        %3291 = vmatpush2.msra.mxu0 0.0
        %3292 = vmatprep.subr.mxu0 0.0
        %3293 = vmatpush2.msra.mxu0 0.0
        %3294 = vmatprep.subr.mxu0 0.0
        %3295 = vmatpush2.msra.mxu0 0.0
        %3296 = vmatprep.subr.mxu0 0.0
        %3297 = vmatpush2.msra.mxu0 0.0
        %3298 = vmatprep.subr.mxu0 0.0
        %3299 = vmatpush2.msra.mxu0 0.0
        %3300 = vmatprep.subr.mxu0 0.0
        %3301 = vmatpush2.msra.mxu0 0.0
        %3302 = vmatprep.subr.mxu0 0.0
        %3303 = vmatpush2.msra.mxu0 0.0
        %3304 = vmatprep.mubr.f32.mxu0 0.0
        %v3305 = vand.u32 %v3234, 4294901760
        %v3306 = vsub.f32 %v3234, %v3305
        %v3307 = vand.u32 %v3306, 4294901760
        %v3308 = vsub.f32 %v3306, %v3307
        %v3309 = vand.u32 %v3308, 4294901760
        %3310 = vmatmul.mubr.f32.gmra.mxu0 %v3309
        %v3311 = vpop.f32.mrf.mxu0
        %v3312 = vadd.f32 %v3229, %v3311
        %v3313 = vpop.f32.mrf.mxu0
        %3314 = vdwg.mxu0
        %3315 = vmatprep.subr.mxu0 0.0
        %3316 = vmatpush1.msra.mxu0 0.0
        %3317 = vmatprep.subr.mxu0 0.0
        %3318 = vmatpush1.msra.mxu0 0.0
        %3319 = vmatprep.subr.mxu0 0.0
        %3320 = vmatpush1.msra.mxu0 0.0
        %3321 = vmatprep.subr.mxu0 0.0
        %3322 = vmatpush1.msra.mxu0 0.0
        %3323 = vmatprep.subr.mxu0 0.0
        %3324 = vmatpush1.msra.mxu0 0.0
        %3325 = vmatprep.subr.mxu0 0.0
        %3326 = vmatpush1.msra.mxu0 0.0
        %3327 = vmatprep.subr.mxu0 0.0
        %3328 = vmatpush1.msra.mxu0 0.0
        %3329 = vmatprep.subr.mxu0 0.0
        %3330 = vmatpush1.msra.mxu0 0.0
        %3331 = vmatprep.subr.mxu0 0.0
        %3332 = vmatpush1.msra.mxu0 0.0
        %3333 = vmatprep.subr.mxu0 0.0
        %3334 = vmatpush1.msra.mxu0 0.0
        %3335 = vmatprep.subr.mxu0 0.0
        %3336 = vmatpush1.msra.mxu0 0.0
        %3337 = vmatprep.subr.mxu0 0.0
        %3338 = vmatpush1.msra.mxu0 0.0
        %3339 = vmatprep.subr.mxu0 0.0
        %v3340 = vand.u32 %v3223, 4294901760
        %v3341 = vsub.f32 %v3223, %v3340
        %v3342 = vand.u32 %v3341, 4294901760
        %v3343 = vsub.f32 %v3341, %v3342
        %v3344 = vand.u32 %v3343, 4294901760
        %3345 = vmatpush1.msra.mxu0 %v3344
        %3346 = vmatprep.subr.mxu0 0.0
        %v3347 = vand.u32 %v3222, 4294901760
        %v3348 = vsub.f32 %v3222, %v3347
        %v3349 = vand.u32 %v3348, 4294901760
        %v3350 = vsub.f32 %v3348, %v3349
        %v3351 = vand.u32 %v3350, 4294901760
        %3352 = vmatpush1.msra.mxu0 %v3351
        %3353 = vmatprep.subr.mxu0 0.0
        %v3354 = vand.u32 %v3221, 4294901760
        %v3355 = vsub.f32 %v3221, %v3354
        %v3356 = vand.u32 %v3355, 4294901760
        %v3357 = vsub.f32 %v3355, %v3356
        %v3358 = vand.u32 %v3357, 4294901760
        %3359 = vmatpush1.msra.mxu0 %v3358
        %3360 = vmatprep.subr.mxu0 0.0
        %v3361 = vand.u32 %v3220, 4294901760
        %v3362 = vsub.f32 %v3220, %v3361
        %v3363 = vand.u32 %v3362, 4294901760
        %v3364 = vsub.f32 %v3362, %v3363
        %v3365 = vand.u32 %v3364, 4294901760
        %3366 = vmatpush1.msra.mxu0 %v3365
        %3367 = vmatprep.subr.mxu0 0.0
        %3368 = vmatpush2.msra.mxu0 0.0
        %3369 = vmatprep.subr.mxu0 0.0
        %3370 = vmatpush2.msra.mxu0 0.0
        %3371 = vmatprep.subr.mxu0 0.0
        %3372 = vmatpush2.msra.mxu0 0.0
        %3373 = vmatprep.subr.mxu0 0.0
        %3374 = vmatpush2.msra.mxu0 0.0
        %3375 = vmatprep.subr.mxu0 0.0
        %3376 = vmatpush2.msra.mxu0 0.0
        %3377 = vmatprep.subr.mxu0 0.0
        %3378 = vmatpush2.msra.mxu0 0.0
        %3379 = vmatprep.subr.mxu0 0.0
        %3380 = vmatpush2.msra.mxu0 0.0
        %3381 = vmatprep.subr.mxu0 0.0
        %3382 = vmatpush2.msra.mxu0 0.0
        %3383 = vmatprep.subr.mxu0 0.0
        %3384 = vmatpush2.msra.mxu0 0.0
        %3385 = vmatprep.subr.mxu0 0.0
        %3386 = vmatpush2.msra.mxu0 0.0
        %3387 = vmatprep.subr.mxu0 0.0
        %3388 = vmatpush2.msra.mxu0 0.0
        %3389 = vmatprep.subr.mxu0 0.0
        %3390 = vmatpush2.msra.mxu0 0.0
        %3391 = vmatprep.subr.mxu0 0.0
        %3392 = vmatpush2.msra.mxu0 0.0
        %3393 = vmatprep.subr.mxu0 0.0
        %3394 = vmatpush2.msra.mxu0 0.0
        %3395 = vmatprep.subr.mxu0 0.0
        %3396 = vmatpush2.msra.mxu0 0.0
        %3397 = vmatprep.subr.mxu0 0.0
        %3398 = vmatpush2.msra.mxu0 0.0
        %3399 = vmatprep.mubr.f32.mxu0 0.0
        %v3400 = vand.u32 %v3234, 4294901760
        %3401 = vmatmul.mubr.f32.gmra.mxu0 %v3400
        %v3402 = vpop.f32.mrf.mxu0
        %v3403 = vadd.f32 %v3312, %v3402
        %v3404 = vpop.f32.mrf.mxu0
        %3405 = vdwg.mxu0
        %3406 = vmatprep.subr.mxu0 0.0
        %3407 = vmatpush1.msra.mxu0 0.0
        %3408 = vmatprep.subr.mxu0 0.0
        %3409 = vmatpush1.msra.mxu0 0.0
        %3410 = vmatprep.subr.mxu0 0.0
        %3411 = vmatpush1.msra.mxu0 0.0
        %3412 = vmatprep.subr.mxu0 0.0
        %3413 = vmatpush1.msra.mxu0 0.0
        %3414 = vmatprep.subr.mxu0 0.0
        %3415 = vmatpush1.msra.mxu0 0.0
        %3416 = vmatprep.subr.mxu0 0.0
        %3417 = vmatpush1.msra.mxu0 0.0
        %3418 = vmatprep.subr.mxu0 0.0
        %3419 = vmatpush1.msra.mxu0 0.0
        %3420 = vmatprep.subr.mxu0 0.0
        %3421 = vmatpush1.msra.mxu0 0.0
        %3422 = vmatprep.subr.mxu0 0.0
        %3423 = vmatpush1.msra.mxu0 0.0
        %3424 = vmatprep.subr.mxu0 0.0
        %3425 = vmatpush1.msra.mxu0 0.0
        %3426 = vmatprep.subr.mxu0 0.0
        %3427 = vmatpush1.msra.mxu0 0.0
        %3428 = vmatprep.subr.mxu0 0.0
        %3429 = vmatpush1.msra.mxu0 0.0
        %3430 = vmatprep.subr.mxu0 0.0
        %v3431 = vand.u32 %v3223, 4294901760
        %v3432 = vsub.f32 %v3223, %v3431
        %3433 = vmatpush1.msra.mxu0 %v3432
        %3434 = vmatprep.subr.mxu0 0.0
        %v3435 = vand.u32 %v3222, 4294901760
        %v3436 = vsub.f32 %v3222, %v3435
        %3437 = vmatpush1.msra.mxu0 %v3436
        %3438 = vmatprep.subr.mxu0 0.0
        %v3439 = vand.u32 %v3221, 4294901760
        %v3440 = vsub.f32 %v3221, %v3439
        %3441 = vmatpush1.msra.mxu0 %v3440
        %3442 = vmatprep.subr.mxu0 0.0
        %v3443 = vand.u32 %v3220, 4294901760
        %v3444 = vsub.f32 %v3220, %v3443
        %3445 = vmatpush1.msra.mxu0 %v3444
        %3446 = vmatprep.subr.mxu0 0.0
        %3447 = vmatpush2.msra.mxu0 0.0
        %3448 = vmatprep.subr.mxu0 0.0
        %3449 = vmatpush2.msra.mxu0 0.0
        %3450 = vmatprep.subr.mxu0 0.0
        %3451 = vmatpush2.msra.mxu0 0.0
        %3452 = vmatprep.subr.mxu0 0.0
        %3453 = vmatpush2.msra.mxu0 0.0
        %3454 = vmatprep.subr.mxu0 0.0
        %3455 = vmatpush2.msra.mxu0 0.0
        %3456 = vmatprep.subr.mxu0 0.0
        %3457 = vmatpush2.msra.mxu0 0.0
        %3458 = vmatprep.subr.mxu0 0.0
        %3459 = vmatpush2.msra.mxu0 0.0
        %3460 = vmatprep.subr.mxu0 0.0
        %3461 = vmatpush2.msra.mxu0 0.0
        %3462 = vmatprep.subr.mxu0 0.0
        %3463 = vmatpush2.msra.mxu0 0.0
        %3464 = vmatprep.subr.mxu0 0.0
        %3465 = vmatpush2.msra.mxu0 0.0
        %3466 = vmatprep.subr.mxu0 0.0
        %3467 = vmatpush2.msra.mxu0 0.0
        %3468 = vmatprep.subr.mxu0 0.0
        %3469 = vmatpush2.msra.mxu0 0.0
        %3470 = vmatprep.subr.mxu0 0.0
        %3471 = vmatpush2.msra.mxu0 0.0
        %3472 = vmatprep.subr.mxu0 0.0
        %3473 = vmatpush2.msra.mxu0 0.0
        %3474 = vmatprep.subr.mxu0 0.0
        %3475 = vmatpush2.msra.mxu0 0.0
        %3476 = vmatprep.subr.mxu0 0.0
        %3477 = vmatpush2.msra.mxu0 0.0
        %3478 = vmatprep.mubr.f32.mxu0 0.0
        %v3479 = vand.u32 %v3234, 4294901760
        %v3480 = vsub.f32 %v3234, %v3479
        %3481 = vmatmul.mubr.f32.gmra.mxu0 %v3480
        %v3482 = vpop.f32.mrf.mxu0
        %v3483 = vadd.f32 %v3403, %v3482
        %v3484 = vpop.f32.mrf.mxu0
        %3485 = vdwg.mxu0
        %3486 = vmatprep.subr.mxu0 0.0
        %3487 = vmatpush1.msra.mxu0 0.0
        %3488 = vmatprep.subr.mxu0 0.0
        %3489 = vmatpush1.msra.mxu0 0.0
        %3490 = vmatprep.subr.mxu0 0.0
        %3491 = vmatpush1.msra.mxu0 0.0
        %3492 = vmatprep.subr.mxu0 0.0
        %3493 = vmatpush1.msra.mxu0 0.0
        %3494 = vmatprep.subr.mxu0 0.0
        %3495 = vmatpush1.msra.mxu0 0.0
        %3496 = vmatprep.subr.mxu0 0.0
        %3497 = vmatpush1.msra.mxu0 0.0
        %3498 = vmatprep.subr.mxu0 0.0
        %3499 = vmatpush1.msra.mxu0 0.0
        %3500 = vmatprep.subr.mxu0 0.0
        %3501 = vmatpush1.msra.mxu0 0.0
        %3502 = vmatprep.subr.mxu0 0.0
        %3503 = vmatpush1.msra.mxu0 0.0
        %3504 = vmatprep.subr.mxu0 0.0
        %3505 = vmatpush1.msra.mxu0 0.0
        %3506 = vmatprep.subr.mxu0 0.0
        %3507 = vmatpush1.msra.mxu0 0.0
        %3508 = vmatprep.subr.mxu0 0.0
        %3509 = vmatpush1.msra.mxu0 0.0
        %3510 = vmatprep.subr.mxu0 0.0
        %v3511 = vand.u32 %v3223, 4294901760
        %3512 = vmatpush1.msra.mxu0 %v3511
        %3513 = vmatprep.subr.mxu0 0.0
        %v3514 = vand.u32 %v3222, 4294901760
        %3515 = vmatpush1.msra.mxu0 %v3514
        %3516 = vmatprep.subr.mxu0 0.0
        %v3517 = vand.u32 %v3221, 4294901760
        %3518 = vmatpush1.msra.mxu0 %v3517
        %3519 = vmatprep.subr.mxu0 0.0
        %v3520 = vand.u32 %v3220, 4294901760
        %3521 = vmatpush1.msra.mxu0 %v3520
        %3522 = vmatprep.subr.mxu0 0.0
        %3523 = vmatpush2.msra.mxu0 0.0
        %3524 = vmatprep.subr.mxu0 0.0
        %3525 = vmatpush2.msra.mxu0 0.0
        %3526 = vmatprep.subr.mxu0 0.0
        %3527 = vmatpush2.msra.mxu0 0.0
        %3528 = vmatprep.subr.mxu0 0.0
        %3529 = vmatpush2.msra.mxu0 0.0
        %3530 = vmatprep.subr.mxu0 0.0
        %3531 = vmatpush2.msra.mxu0 0.0
        %3532 = vmatprep.subr.mxu0 0.0
        %3533 = vmatpush2.msra.mxu0 0.0
        %3534 = vmatprep.subr.mxu0 0.0
        %3535 = vmatpush2.msra.mxu0 0.0
        %3536 = vmatprep.subr.mxu0 0.0
        %3537 = vmatpush2.msra.mxu0 0.0
        %3538 = vmatprep.subr.mxu0 0.0
        %3539 = vmatpush2.msra.mxu0 0.0
        %3540 = vmatprep.subr.mxu0 0.0
        %3541 = vmatpush2.msra.mxu0 0.0
        %3542 = vmatprep.subr.mxu0 0.0
        %3543 = vmatpush2.msra.mxu0 0.0
        %3544 = vmatprep.subr.mxu0 0.0
        %3545 = vmatpush2.msra.mxu0 0.0
        %3546 = vmatprep.subr.mxu0 0.0
        %3547 = vmatpush2.msra.mxu0 0.0
        %3548 = vmatprep.subr.mxu0 0.0
        %3549 = vmatpush2.msra.mxu0 0.0
        %3550 = vmatprep.subr.mxu0 0.0
        %3551 = vmatpush2.msra.mxu0 0.0
        %3552 = vmatprep.subr.mxu0 0.0
        %3553 = vmatpush2.msra.mxu0 0.0
        %3554 = vmatprep.mubr.f32.mxu0 0.0
        %v3555 = vand.u32 %v3234, 4294901760
        %v3556 = vsub.f32 %v3234, %v3555
        %v3557 = vand.u32 %v3556, 4294901760
        %3558 = vmatmul.mubr.f32.gmra.mxu0 %v3557
        %v3559 = vpop.f32.mrf.mxu0
        %v3560 = vadd.f32 %v3483, %v3559
        %v3561 = vpop.f32.mrf.mxu0
        %3562 = vdwg.mxu0
        %3563 = vmatprep.subr.mxu0 0.0
        %3564 = vmatpush1.msra.mxu0 0.0
        %3565 = vmatprep.subr.mxu0 0.0
        %3566 = vmatpush1.msra.mxu0 0.0
        %3567 = vmatprep.subr.mxu0 0.0
        %3568 = vmatpush1.msra.mxu0 0.0
        %3569 = vmatprep.subr.mxu0 0.0
        %3570 = vmatpush1.msra.mxu0 0.0
        %3571 = vmatprep.subr.mxu0 0.0
        %3572 = vmatpush1.msra.mxu0 0.0
        %3573 = vmatprep.subr.mxu0 0.0
        %3574 = vmatpush1.msra.mxu0 0.0
        %3575 = vmatprep.subr.mxu0 0.0
        %3576 = vmatpush1.msra.mxu0 0.0
        %3577 = vmatprep.subr.mxu0 0.0
        %3578 = vmatpush1.msra.mxu0 0.0
        %3579 = vmatprep.subr.mxu0 0.0
        %3580 = vmatpush1.msra.mxu0 0.0
        %3581 = vmatprep.subr.mxu0 0.0
        %3582 = vmatpush1.msra.mxu0 0.0
        %3583 = vmatprep.subr.mxu0 0.0
        %3584 = vmatpush1.msra.mxu0 0.0
        %3585 = vmatprep.subr.mxu0 0.0
        %3586 = vmatpush1.msra.mxu0 0.0
        %3587 = vmatprep.subr.mxu0 0.0
        %v3588 = vand.u32 %v3223, 4294901760
        %v3589 = vsub.f32 %v3223, %v3588
        %v3590 = vand.u32 %v3589, 4294901760
        %3591 = vmatpush1.msra.mxu0 %v3590
        %3592 = vmatprep.subr.mxu0 0.0
        %v3593 = vand.u32 %v3222, 4294901760
        %v3594 = vsub.f32 %v3222, %v3593
        %v3595 = vand.u32 %v3594, 4294901760
        %3596 = vmatpush1.msra.mxu0 %v3595
        %3597 = vmatprep.subr.mxu0 0.0
        %v3598 = vand.u32 %v3221, 4294901760
        %v3599 = vsub.f32 %v3221, %v3598
        %v3600 = vand.u32 %v3599, 4294901760
        %3601 = vmatpush1.msra.mxu0 %v3600
        %3602 = vmatprep.subr.mxu0 0.0
        %v3603 = vand.u32 %v3220, 4294901760
        %v3604 = vsub.f32 %v3220, %v3603
        %v3605 = vand.u32 %v3604, 4294901760
        %3606 = vmatpush1.msra.mxu0 %v3605
        %3607 = vmatprep.subr.mxu0 0.0
        %3608 = vmatpush2.msra.mxu0 0.0
        %3609 = vmatprep.subr.mxu0 0.0
        %3610 = vmatpush2.msra.mxu0 0.0
        %3611 = vmatprep.subr.mxu0 0.0
        %3612 = vmatpush2.msra.mxu0 0.0
        %3613 = vmatprep.subr.mxu0 0.0
        %3614 = vmatpush2.msra.mxu0 0.0
        %3615 = vmatprep.subr.mxu0 0.0
        %3616 = vmatpush2.msra.mxu0 0.0
        %3617 = vmatprep.subr.mxu0 0.0
        %3618 = vmatpush2.msra.mxu0 0.0
        %3619 = vmatprep.subr.mxu0 0.0
        %3620 = vmatpush2.msra.mxu0 0.0
        %3621 = vmatprep.subr.mxu0 0.0
        %3622 = vmatpush2.msra.mxu0 0.0
        %3623 = vmatprep.subr.mxu0 0.0
        %3624 = vmatpush2.msra.mxu0 0.0
        %3625 = vmatprep.subr.mxu0 0.0
        %3626 = vmatpush2.msra.mxu0 0.0
        %3627 = vmatprep.subr.mxu0 0.0
        %3628 = vmatpush2.msra.mxu0 0.0
        %3629 = vmatprep.subr.mxu0 0.0
        %3630 = vmatpush2.msra.mxu0 0.0
        %3631 = vmatprep.subr.mxu0 0.0
        %3632 = vmatpush2.msra.mxu0 0.0
        %3633 = vmatprep.subr.mxu0 0.0
        %3634 = vmatpush2.msra.mxu0 0.0
        %3635 = vmatprep.subr.mxu0 0.0
        %3636 = vmatpush2.msra.mxu0 0.0
        %3637 = vmatprep.subr.mxu0 0.0
        %3638 = vmatpush2.msra.mxu0 0.0
        %3639 = vmatprep.mubr.f32.mxu0 0.0
        %v3640 = vand.u32 %v3234, 4294901760
        %3641 = vmatmul.mubr.f32.gmra.mxu0 %v3640
        %v3642 = vpop.f32.mrf.mxu0
        %v3643 = vadd.f32 %v3560, %v3642
        %v3644 = vpop.f32.mrf.mxu0
        %3645 = vdwg.mxu0
        %3646 = vmatprep.subr.mxu0 0.0
        %3647 = vmatpush1.msra.mxu0 0.0
        %3648 = vmatprep.subr.mxu0 0.0
        %3649 = vmatpush1.msra.mxu0 0.0
        %3650 = vmatprep.subr.mxu0 0.0
        %3651 = vmatpush1.msra.mxu0 0.0
        %3652 = vmatprep.subr.mxu0 0.0
        %3653 = vmatpush1.msra.mxu0 0.0
        %3654 = vmatprep.subr.mxu0 0.0
        %3655 = vmatpush1.msra.mxu0 0.0
        %3656 = vmatprep.subr.mxu0 0.0
        %3657 = vmatpush1.msra.mxu0 0.0
        %3658 = vmatprep.subr.mxu0 0.0
        %3659 = vmatpush1.msra.mxu0 0.0
        %3660 = vmatprep.subr.mxu0 0.0
        %3661 = vmatpush1.msra.mxu0 0.0
        %3662 = vmatprep.subr.mxu0 0.0
        %3663 = vmatpush1.msra.mxu0 0.0
        %3664 = vmatprep.subr.mxu0 0.0
        %3665 = vmatpush1.msra.mxu0 0.0
        %3666 = vmatprep.subr.mxu0 0.0
        %3667 = vmatpush1.msra.mxu0 0.0
        %3668 = vmatprep.subr.mxu0 0.0
        %3669 = vmatpush1.msra.mxu0 0.0
        %3670 = vmatprep.subr.mxu0 0.0
        %v3671 = vand.u32 %v3223, 4294901760
        %3672 = vmatpush1.msra.mxu0 %v3671
        %3673 = vmatprep.subr.mxu0 0.0
        %v3674 = vand.u32 %v3222, 4294901760
        %3675 = vmatpush1.msra.mxu0 %v3674
        %3676 = vmatprep.subr.mxu0 0.0
        %v3677 = vand.u32 %v3221, 4294901760
        %3678 = vmatpush1.msra.mxu0 %v3677
        %3679 = vmatprep.subr.mxu0 0.0
        %v3680 = vand.u32 %v3220, 4294901760
        %3681 = vmatpush1.msra.mxu0 %v3680
        %3682 = vmatprep.subr.mxu0 0.0
        %3683 = vmatpush2.msra.mxu0 0.0
        %3684 = vmatprep.subr.mxu0 0.0
        %3685 = vmatpush2.msra.mxu0 0.0
        %3686 = vmatprep.subr.mxu0 0.0
        %3687 = vmatpush2.msra.mxu0 0.0
        %3688 = vmatprep.subr.mxu0 0.0
        %3689 = vmatpush2.msra.mxu0 0.0
        %3690 = vmatprep.subr.mxu0 0.0
        %3691 = vmatpush2.msra.mxu0 0.0
        %3692 = vmatprep.subr.mxu0 0.0
        %3693 = vmatpush2.msra.mxu0 0.0
        %3694 = vmatprep.subr.mxu0 0.0
        %3695 = vmatpush2.msra.mxu0 0.0
        %3696 = vmatprep.subr.mxu0 0.0
        %3697 = vmatpush2.msra.mxu0 0.0
        %3698 = vmatprep.subr.mxu0 0.0
        %3699 = vmatpush2.msra.mxu0 0.0
        %3700 = vmatprep.subr.mxu0 0.0
        %3701 = vmatpush2.msra.mxu0 0.0
        %3702 = vmatprep.subr.mxu0 0.0
        %3703 = vmatpush2.msra.mxu0 0.0
        %3704 = vmatprep.subr.mxu0 0.0
        %3705 = vmatpush2.msra.mxu0 0.0
        %3706 = vmatprep.subr.mxu0 0.0
        %3707 = vmatpush2.msra.mxu0 0.0
        %3708 = vmatprep.subr.mxu0 0.0
        %3709 = vmatpush2.msra.mxu0 0.0
        %3710 = vmatprep.subr.mxu0 0.0
        %3711 = vmatpush2.msra.mxu0 0.0
        %3712 = vmatprep.subr.mxu0 0.0
        %3713 = vmatpush2.msra.mxu0 0.0
        %3714 = vmatprep.mubr.f32.mxu0 0.0
        %v3715 = vand.u32 %v3234, 4294901760
        %3716 = vmatmul.mubr.f32.gmra.mxu0 %v3715
        %v3717 = vpop.f32.mrf.mxu0
        %v3718 = vadd.f32 %v3643, %v3717
        %v3719 = vpop.f32.mrf.mxu0
        %3720 = vdwg.mxu0
        %3721 = vst.msk [vmem:[%s350] sm:$0xff] %vm367, %v3718
        %s3722 = sand.u32 %s247, 1
        %s3723 = scalar_lea.sflag [#allocation3], %s3722
        %s3724 = sand.u32 %s247, 1
        %s3725 = smul.addr %s3724, 8
        %s3726 = scalar_lea.vmem [#allocation2], %s3725
        // Predicated region
        $region61: #{lrnn_forward.1} parent=59 // pred_check
          %p3727 = pneg %p257
        $region62: #{lrnn_forward.1} parent=59 // pred_check_branch
          %3729 = sbr.rel (%p3727) target = $region64
        $region63: #{lrnn_forward.1} parent=59 // pred_region
          %s3731 = ssub.s32 128, 128
          %3732 = vsyncadd %s3723, %s3731
          %s3733 = smul.addr %s24, 128
          %s3734 = scalar_lea.hbm %s10, %s3733
          %s3736 = sshll.u32 %s3726, 4
          %s3737 = int_to_ptr.vmem [resolvable:$true] %s3736
          %3739 = dma.vmem_to_hbm [thread:$0]  %s3737, 128, %s3734, %s3723
        $region64: #{lrnn_forward.1} parent=59 // pred_fallthru
          _
      $region60: #{lrnn_forward.1} parent=5 // pred_fallthru
        _
      %p3740 = scmp.le.s32.totalorder 2, %s19
      // Predicated region
      $region65: #{lrnn_forward.1} parent=5 // pred_check
        %p3741 = pneg %p3740
      $region66: #{lrnn_forward.1} parent=5 // pred_check_branch
        %3743 = sbr.rel (%p3741) target = $region68
      $region67: #{lrnn_forward.1} parent=5 // pred_region
        %s3744 = ssub.s32 %s19, 2
        // Predicated region
        $region69: #{lrnn_forward.1} parent=67 // pred_check
          %p3745 = pneg %p263
        $region70: #{lrnn_forward.1} parent=67 // pred_check_branch
          %3747 = sbr.rel (%p3745) target = $region72
        $region71: #{lrnn_forward.1} parent=67 // pred_region
          %s3748 = sand.u32 %s248, 1
          %s3749 = scalar_lea.sflag [#allocation3], %s3748
          %s3750 = sand.u32 %s248, 1
          %s3751 = smul.addr %s3750, 8
          %s3752 = scalar_lea.vmem [#allocation2], %s3751
          %3753 = dma.done %s3749, 128
        $region72: #{lrnn_forward.1} parent=67 // pred_fallthru
          _
      $region68: #{lrnn_forward.1} parent=5 // pred_fallthru
        _
    $region6: #{lrnn_forward.1} parent=1 // loop_footer
      %s23 = sadd.s32 1, %s19
    $region7: #{lrnn_forward.1} parent=1 // loop_footer_branch
      %18 = sbr.rel target = $region3
    $region8: #{lrnn_forward.1} parent=1 // loop_exit
      _
    %3754 = vsyncpa [#allocation3], 1
    %s3755 = scalar_lea.sflag [#allocation3], 1
    %3756 = vsyncpa %s3755, 1

</llo_original>
